<compile_context>
chip_gen: v7x
topology: tpu7x:2x2x1
jax: 0.10.0
libtpu: 0.0.40
codegen_flags: <defaults>
</compile_context>

<pallas_src>
import jax
import jax.numpy as jnp
from jax.experimental import pallas as pl
from jax.experimental.pallas import tpu as pltpu

# ---- deterministic hyper-parameters (mirroring __init__) -------------------
HAKE_GAMMA = 12.0
HAKE_MODULUS_WEIGHT = 0.5
HAKE_PHASE_WEIGHT = 0.5
HAKE_ADV_TEMPERATURE = 1.0
EPSILON = 2.0
PI = 3.1415926235897933          # note: the module hard-codes this (slightly off pi)


def _pick_neg_chunk(N):
    """Chunk of the negative-sample axis. Must be a multiple of 8 (sublane
    tile) or the full extent N (BlockSpec (8,128) divisibility rule)."""
    if N % 8 != 0:
        return N
    nc = 8
    while nc * 2 <= 32 and N % (nc * 2) == 0:
        nc *= 2
    return nc


def _vmem_limit_bytes():
    """Scoped-VMEM request: generous but safe on every chip
    (v7x: 64 MiB per TensorCore; v5e/v6e: 128 MiB)."""
    try:
        cap = int(pltpu.get_tpu_info().vmem_capacity_bytes)
    except Exception:
        cap = 64 * 1024 * 1024          # assume the smallest (v7x per-TC)
    return min(int(cap * 3 // 4), 96 * 1024 * 1024)


def _pick_block_b(B, neg_chunk, H, itemsize, vmem_limit):
    """Batch tile. Budget counts the two double-buffered negative input chunks
    plus ~4 f32 (TB, NC, H) intermediates; keeps >= 2 grid steps on the batch
    axis (megacore + DMA pipeline) and stays well inside the scoped VMEM."""
    per_tb = neg_chunk * H * (2 * 2 * itemsize + 4 * 4)
    budget = vmem_limit // 4
    if B % 8 != 0:
        return B                        # small / odd batch: one full-extent block
    block_b = 8
    while (B % (block_b * 2) == 0
           and (B // (block_b * 2)) >= 2
           and (block_b * 2) * per_tb <= budget):
        block_b *= 2
    return block_b


def hake_loss_pallas(parent_emb, child_emb, negh_emb, negt_emb, rel_emb,
                     sample_weight, *, gamma, embedding_range, phase_weight,
                     modulus_weight, adv_temperature, block_b=None,
                     neg_chunk=None):
    """Compute the hake_loss scalar.

    parent_emb/child_emb: (B, 1, H)   negh_emb/negt_emb: (B, N, H)
    rel_emb: (B, 1, 3H)               sample_weight: (B,)
    Negatives may be bf16 (recommended for HBM traffic); math is f32 in-kernel.
    """
    B, N, H = negh_emb.shape

    # ---- glue: squeeze singleton dims --------------------------------------
    parent2d = parent_emb.reshape(B, H)
    child2d = child_emb.reshape(B, H)
    rel2d = rel_emb.reshape(B, 3 * H)          # single operand; sliced in-kernel
    w2d = sample_weight.reshape(B, 1).astype(jnp.float32)

    if neg_chunk is None:
        neg_chunk = _pick_neg_chunk(N)
    assert N % neg_chunk == 0, (N, neg_chunk)
    n_nc = N // neg_chunk

    vmem_limit = _vmem_limit_bytes()
    if block_b is None:
        itemsize = jnp.dtype(negh_emb.dtype).itemsize
        block_b = _pick_block_b(B, neg_chunk, H, itemsize, vmem_limit)
    assert B % block_b == 0, (B, block_b)
    nb = B // block_b

    # ---- static hyper-parameters baked into the kernel closure --------------
    gamma_c = float(gamma)
    # 0.5 (from sin(phase/2)) folded into the phase scale -> one fewer big mul
    inv_scale_half_c = float(0.5 * PI / embedding_range)
    phase_w_c = float(phase_weight)
    mod_w_c = float(modulus_weight)
    adv_t_c = float(adv_temperature)

    def kernel(parent_ref, child_ref, rel_ref, weight_ref, negh_ref, negt_ref,
               out_ref, m_ct, l_ct, s_ct, m_ch, l_ch, s_ch):
        f32 = jnp.float32
        nc = pl.program_id(1)

        # ---- online-softmax accumulators: reset at the first negative chunk --
        @pl.when(nc == 0)
        def _init():
            m_ct[...] = jnp.full_like(m_ct, -jnp.inf)
            l_ct[...] = jnp.zeros_like(l_ct)
            s_ct[...] = jnp.zeros_like(s_ct)
            m_ch[...] = jnp.full_like(m_ch, -jnp.inf)
            l_ch[...] = jnp.zeros_like(l_ch)
            s_ch[...] = jnp.zeros_like(s_ch)

        parent = parent_ref[...].astype(f32)               # (TB, H)
        child = child_ref[...].astype(f32)                 # (TB, H)
        rel = rel_ref[...].astype(f32)                     # (TB, 3H)
        relp_v = rel[:, :H]                                # static, lane-aligned when H%128==0
        relm_v = rel[:, H:2 * H]
        relb_v = rel[:, 2 * H:]

        # relation-derived terms: (TB,H)-sized, cheap to recompute per chunk
        phase_rel = relp_v * inv_scale_half_c
        mod_rel = jnp.abs(relm_v)
        bias_rel = jnp.minimum(relb_v, 1.0)                # clamp(max=1)
        bias_rel = jnp.where(bias_rel < -mod_rel, -mod_rel, bias_rel)
        mod_plus_bias = mod_rel + bias_rel
        one_minus_bias = 1.0 - bias_rel

        phase_parent = parent * inv_scale_half_c
        phase_child = child * inv_scale_half_c
        head_phase = phase_parent + phase_rel              # SINGLE & CORRUPTED_TAIL
        tail_phase_ch = phase_rel - phase_child            # CORRUPTED_HEAD
        head_mod = parent * mod_plus_bias
        tail_mod = child * one_minus_bias

        def log_sigmoid(x):
            return jnp.minimum(x, 0.0) - jnp.log(1.0 + jnp.exp(-jnp.abs(x)))

        def online_update(sc, m_ref, l_ref, s_ref):
            # sc: (TB, NC) raw scores for this chunk; streaming softmax-weighted
            # sum of log_sigmoid(-sc) (exact, flash-attention style).
            a = sc * adv_t_c
            m_new = jnp.maximum(m_ref[...], jnp.max(a, axis=1, keepdims=True))
            corr = jnp.exp(m_ref[...] - m_new)
            e = jnp.exp(a - m_new)
            l_ref[...] = corr * l_ref[...] + jnp.sum(e, axis=1, keepdims=True)
            s_ref[...] = corr * s_ref[...] + jnp.sum(e * log_sigmoid(-sc),
                                                     axis=1, keepdims=True)
            m_ref[...] = m_new

        # --- CORRUPTED_TAIL chunk: head = parent, tail = negt chunk -----------
        negt = negt_ref[...].astype(f32)                   # (TB, NC, H)
        ps = jnp.sum(jnp.abs(jnp.sin(head_phase[:, None, :]
                                     - negt * inv_scale_half_c)),
                     axis=2) * phase_w_c                   # (TB, NC)
        rd = head_mod[:, None, :] - negt * one_minus_bias[:, None, :]
        rs = jnp.sqrt(jnp.sum(rd * rd, axis=2)) * mod_w_c
        online_update(gamma_c - (ps + rs), m_ct, l_ct, s_ct)

        # --- CORRUPTED_HEAD chunk: head = negh chunk, tail = child ------------
        negh = negh_ref[...].astype(f32)
        ps = jnp.sum(jnp.abs(jnp.sin(negh * inv_scale_half_c
                                     + tail_phase_ch[:, None, :])),
                     axis=2) * phase_w_c
        rd = negh * mod_plus_bias[:, None, :] - tail_mod[:, None, :]
        rs = jnp.sqrt(jnp.sum(rd * rd, axis=2)) * mod_w_c
        online_update(gamma_c - (ps + rs), m_ch, l_ch, s_ch)

        # ---- finalize: positive score + per-block partial sums ---------------
        @pl.when(nc == pl.num_programs(1) - 1)
        def _finalize():
            w = weight_ref[...].astype(f32)                # (TB, 1)
            ps_pos = jnp.sum(jnp.abs(jnp.sin(head_phase - phase_child)),
                             axis=-1, keepdims=True) * phase_w_c
            rp = head_mod - tail_mod
            rs_pos = jnp.sqrt(jnp.sum(rp * rp, axis=-1, keepdims=True)) * mod_w_c
            score_pos = log_sigmoid(gamma_c - (ps_pos + rs_pos))   # (TB, 1)
            # softmax normalisation: divide moved to the (idle) EUP slot
            neg_ct = s_ct[...] * pl.reciprocal(l_ct[...], approx=True)
            neg_ch = s_ch[...] * pl.reciprocal(l_ch[...], approx=True)
            pos_partial = jnp.sum(w * score_pos)
            neg_partial = jnp.sum(w * (neg_ct + neg_ch)) * 0.5
            w_partial = jnp.sum(w)
            lane = jax.lax.broadcasted_iota(jnp.int32, out_ref.shape, 2)
            out_ref[...] = (jnp.where(lane == 0, pos_partial, 0.0)
                            + jnp.where(lane == 1, neg_partial, 0.0)
                            + jnp.where(lane == 2, w_partial, 0.0))

    in_specs = [
        pl.BlockSpec((block_b, H), lambda b, c: (b, 0)),                 # parent
        pl.BlockSpec((block_b, H), lambda b, c: (b, 0)),                 # child
        pl.BlockSpec((block_b, 3 * H), lambda b, c: (b, 0)),             # relation
        pl.BlockSpec((block_b, 1), lambda b, c: (b, 0)),                 # sample weight
        pl.BlockSpec((block_b, neg_chunk, H), lambda b, c: (b, c, 0)),   # neg heads
        pl.BlockSpec((block_b, neg_chunk, H), lambda b, c: (b, c, 0)),   # neg tails
    ]
    out_specs = pl.BlockSpec((1, 8, 128), lambda b, c: (b, 0, 0))        # lane-dense partials

    scratch_shapes = [pltpu.VMEM((block_b, 1), jnp.float32) for _ in range(6)]

    partials = pl.pallas_call(
        kernel,
        out_shape=jax.ShapeDtypeStruct((nb, 8, 128), jnp.float32),
        grid_spec=pltpu.PrefetchScalarGridSpec(
            num_scalar_prefetch=0,
            grid=(nb, n_nc),
            in_specs=in_specs,
            out_specs=out_specs,
            scratch_shapes=scratch_shapes),
        compiler_params=pltpu.CompilerParams(
            dimension_semantics=("parallel", "arbitrary"),
            vmem_limit_bytes=vmem_limit),
    )(parent2d, child2d, rel2d, w2d, negh_emb, negt_emb)

    pos_sum = jnp.sum(partials[:, 0, 0])
    neg_sum = jnp.sum(partials[:, 0, 1])
    w_sum = jnp.sum(partials[:, 0, 2])
    # positive_hake_loss + negative_hake_loss
    return -(pos_sum + neg_sum) / w_sum


# ---- pure-JAX reference (mirrors the PyTorch forward) -----------------------
def hake_loss_reference(parent, child, negh, negt, rel, weight, *, gamma,
                        embedding_range, phase_weight, modulus_weight,
                        adv_temperature):
    H = parent.shape[-1]

    def score(head, tail, corrupted_head):
        phase_rel, mod_rel, bias_rel = rel[..., :H], rel[..., H:2 * H], rel[..., 2 * H:]
        scale = embedding_range / PI
        phase_head, phase_rel_s, phase_tail = head / scale, phase_rel / scale, tail / scale
        if corrupted_head:
            phase_score = phase_head + (phase_rel_s - phase_tail)
        else:
            phase_score = phase_head + phase_rel_s - phase_tail
        mod_rel = jnp.abs(mod_rel)
        bias_rel = jnp.minimum(bias_rel, 1.0)
        bias_rel = jnp.where(bias_rel < -mod_rel, -mod_rel, bias_rel)
        r = head * (mod_rel + bias_rel) - tail * (1.0 - bias_rel)
        ps = jnp.sum(jnp.abs(jnp.sin(phase_score / 2.0)), axis=2) * phase_weight
        rs = jnp.sqrt(jnp.sum(r * r, axis=2)) * modulus_weight
        return gamma - (ps + rs)

    score_pos = jax.nn.log_sigmoid(score(parent, child, False)).squeeze(1)
    sct = score(parent, negt, False)
    sct = (jax.nn.softmax(sct * adv_temperature, axis=1)
           * jax.nn.log_sigmoid(-sct)).sum(axis=1)
    sch = score(negh, child, True)
    sch = (jax.nn.softmax(sch * adv_temperature, axis=1)
           * jax.nn.log_sigmoid(-sch)).sum(axis=1)
    wsum = weight.sum()
    pos_loss = -(weight * score_pos).sum() / wsum
    neg_loss = -(weight * (sch + sct) / 2.0).sum() / wsum
    return pos_loss + neg_loss


if __name__ == "__main__":
    key = jax.random.PRNGKey(0)
    B, N, H = 16, 8, 128      # batch, negative_sample_size, bert_hidden_dim (small)
    NUM_RELATION = 4

    gamma = HAKE_GAMMA
    embedding_range = (gamma + EPSILON) / H
    phase_weight = HAKE_PHASE_WEIGHT * embedding_range   # as in __init__
    modulus_weight = HAKE_MODULUS_WEIGHT
    adv_temperature = HAKE_ADV_TEMPERATURE

    k1, k2, k3, k4, k5, k6, k7 = jax.random.split(key, 7)
    # CLS embeddings that the (untranslated) BERT encoder would produce
    pos_parent_emb = 0.1 * jax.random.normal(k1, (B, 1, H), jnp.float32)
    pos_child_emb = 0.1 * jax.random.normal(k2, (B, 1, H), jnp.float32)
    neg_rel_corr_h_emb = 0.1 * jax.random.normal(k3, (B, N, H), jnp.float32)
    neg_rel_corr_t_emb = 0.1 * jax.random.normal(k4, (B, N, H), jnp.float32)

    # relation_embedding init exactly as in __init__ (uniform / ones / zeros)
    rel_table = jnp.concatenate(
        [jax.random.uniform(k5, (NUM_RELATION, H), jnp.float32,
                            -embedding_range, embedding_range),
         jnp.ones((NUM_RELATION, H), jnp.float32),
         jnp.zeros((NUM_RELATION, H), jnp.float32)], axis=1)
    rel_ids = jax.random.randint(k7, (B,), 0, NUM_RELATION)
    rel_embs = rel_table[rel_ids][:, None, :]           # (B, 1, 3H) -- glue gather

    sample_weight = jax.random.uniform(k6, (B,), jnp.float32, 0.5, 1.5)

    # Dominant (B, N, H) streams fed as bf16 (halves HBM read traffic).
    negh_bf = neg_rel_corr_h_emb.astype(jnp.bfloat16)
    negt_bf = neg_rel_corr_t_emb.astype(jnp.bfloat16)

    hake_loss = hake_loss_pallas(
        pos_parent_emb, pos_child_emb, negh_bf, negt_bf,
        rel_embs, sample_weight, gamma=gamma, embedding_range=embedding_range,
        phase_weight=phase_weight, modulus_weight=modulus_weight,
        adv_temperature=adv_temperature)                 # auto tile: 2 batch steps
    hake_loss = jax.block_until_ready(hake_loss)

    # reference sees identical (bf16-rounded, f32-upcast) negative values
    ref = hake_loss_reference(
        pos_parent_emb, pos_child_emb,
        negh_bf.astype(jnp.float32), negt_bf.astype(jnp.float32),
        rel_embs, sample_weight, gamma=gamma, embedding_range=embedding_range,
        phase_weight=phase_weight, modulus_weight=modulus_weight,
        adv_temperature=adv_temperature)

    # rtol 2e-3: allows the EUP approx-reciprocal in the softmax normalisation
    assert jnp.allclose(hake_loss, ref, rtol=2e-3, atol=1e-4), (hake_loss, ref)
    print("KERNEL_OK")
</pallas_src>

<mosaic_0001>
module attributes {stable_mosaic.version = 11 : i64} {
  func.func @kernel(%arg0: i32, %arg1: i32, %arg2: memref<8x128xf32, #tpu.memory_space<vmem>>, %arg3: memref<8x128xf32, #tpu.memory_space<vmem>>, %arg4: memref<8x384xf32, #tpu.memory_space<vmem>>, %arg5: memref<8x1xf32, #tpu.memory_space<vmem>>, %arg6: memref<8x8x128xbf16, #tpu.memory_space<vmem>>, %arg7: memref<8x8x128xbf16, #tpu.memory_space<vmem>>, %arg8: memref<1x8x128xf32, #tpu.memory_space<vmem>>, %arg9: memref<8x1xf32, #tpu.memory_space<vmem>>, %arg10: memref<8x1xf32, #tpu.memory_space<vmem>>, %arg11: memref<8x1xf32, #tpu.memory_space<vmem>>, %arg12: memref<8x1xf32, #tpu.memory_space<vmem>>, %arg13: memref<8x1xf32, #tpu.memory_space<vmem>>, %arg14: memref<8x1xf32, #tpu.memory_space<vmem>>) attributes {dimension_semantics = [#tpu.dimension_semantics<parallel>, #tpu.dimension_semantics<arbitrary>], iteration_bounds = array<i64: 2, 1>, scalar_prefetch = 0 : i64, scratch_operands = 6 : i64, tpu.core_type = #tpu.core_type<tc>, window_params = [{transform_indices = @transform_0, window_bounds = array<i64: 8, 128>}, {transform_indices = @transform_1, window_bounds = array<i64: 8, 128>}, {transform_indices = @transform_2, window_bounds = array<i64: 8, 384>}, {transform_indices = @transform_3, window_bounds = array<i64: 8, 1>}, {transform_indices = @transform_4, window_bounds = array<i64: 8, 8, 128>}, {transform_indices = @transform_5, window_bounds = array<i64: 8, 8, 128>}, {transform_indices = @transform_6, window_bounds = array<i64: 1, 8, 128>}]} {
    %c0_i32 = arith.constant 0 : i32
    %0 = arith.cmpi eq, %arg1, %c0_i32 : i32
    %1 = arith.extui %0 : i1 to i32
    %c0_i32_0 = arith.constant 0 : i32
    %2 = arith.cmpi ne, %1, %c0_i32_0 : i32
    scf.if %2 {
      %cst_76 = arith.constant 0xFF800000 : f32
      %162 = vector.broadcast %cst_76 : f32 to vector<8x1xf32>
      %c0_77 = arith.constant 0 : index
      %c0_78 = arith.constant 0 : index
      %163 = vector.load %arg9[%c0_77, %c0_78] : memref<8x1xf32, #tpu.memory_space<vmem>>, vector<8x1xf32>
      tpu.vector_store %arg9[%c0_77, %c0_78], %162 {strides = array<i32>} : memref<8x1xf32, #tpu.memory_space<vmem>>, vector<8x1xf32>,
      %cst_79 = arith.constant 0.000000e+00 : f32
      %164 = vector.broadcast %cst_79 : f32 to vector<8x1xf32>
      %c0_80 = arith.constant 0 : index
      %c0_81 = arith.constant 0 : index
      %165 = vector.load %arg10[%c0_80, %c0_81] : memref<8x1xf32, #tpu.memory_space<vmem>>, vector<8x1xf32>
      tpu.vector_store %arg10[%c0_80, %c0_81], %164 {strides = array<i32>} : memref<8x1xf32, #tpu.memory_space<vmem>>, vector<8x1xf32>,
      %cst_82 = arith.constant 0.000000e+00 : f32
      %166 = vector.broadcast %cst_82 : f32 to vector<8x1xf32>
      %c0_83 = arith.constant 0 : index
      %c0_84 = arith.constant 0 : index
      %167 = vector.load %arg11[%c0_83, %c0_84] : memref<8x1xf32, #tpu.memory_space<vmem>>, vector<8x1xf32>
      tpu.vector_store %arg11[%c0_83, %c0_84], %166 {strides = array<i32>} : memref<8x1xf32, #tpu.memory_space<vmem>>, vector<8x1xf32>,
      %cst_85 = arith.constant 0xFF800000 : f32
      %168 = vector.broadcast %cst_85 : f32 to vector<8x1xf32>
      %c0_86 = arith.constant 0 : index
      %c0_87 = arith.constant 0 : index
      %169 = vector.load %arg12[%c0_86, %c0_87] : memref<8x1xf32, #tpu.memory_space<vmem>>, vector<8x1xf32>
      tpu.vector_store %arg12[%c0_86, %c0_87], %168 {strides = array<i32>} : memref<8x1xf32, #tpu.memory_space<vmem>>, vector<8x1xf32>,
      %cst_88 = arith.constant 0.000000e+00 : f32
      %170 = vector.broadcast %cst_88 : f32 to vector<8x1xf32>
      %c0_89 = arith.constant 0 : index
      %c0_90 = arith.constant 0 : index
      %171 = vector.load %arg13[%c0_89, %c0_90] : memref<8x1xf32, #tpu.memory_space<vmem>>, vector<8x1xf32>
      tpu.vector_store %arg13[%c0_89, %c0_90], %170 {strides = array<i32>} : memref<8x1xf32, #tpu.memory_space<vmem>>, vector<8x1xf32>,
      %cst_91 = arith.constant 0.000000e+00 : f32
      %172 = vector.broadcast %cst_91 : f32 to vector<8x1xf32>
      %c0_92 = arith.constant 0 : index
      %c0_93 = arith.constant 0 : index
      %173 = vector.load %arg14[%c0_92, %c0_93] : memref<8x1xf32, #tpu.memory_space<vmem>>, vector<8x1xf32>
      tpu.vector_store %arg14[%c0_92, %c0_93], %172 {strides = array<i32>} : memref<8x1xf32, #tpu.memory_space<vmem>>, vector<8x1xf32>,
    } else {
    }
    %c0 = arith.constant 0 : index
    %c0_1 = arith.constant 0 : index
    %3 = vector.load %arg2[%c0, %c0_1] : memref<8x128xf32, #tpu.memory_space<vmem>>, vector<8x128xf32>
    %c0_2 = arith.constant 0 : index
    %c0_3 = arith.constant 0 : index
    %4 = vector.load %arg3[%c0_2, %c0_3] : memref<8x128xf32, #tpu.memory_space<vmem>>, vector<8x128xf32>
    %c0_4 = arith.constant 0 : index
    %c0_5 = arith.constant 0 : index
    %5 = vector.load %arg4[%c0_4, %c0_5] : memref<8x384xf32, #tpu.memory_space<vmem>>, vector<8x384xf32>
    %6 = vector.extract_strided_slice %5 {offsets = [0, 0], sizes = [8, 128], strides = [1, 1]} : vector<8x384xf32> to vector<8x128xf32>
    %7 = vector.extract_strided_slice %5 {offsets = [0, 128], sizes = [8, 128], strides = [1, 1]} : vector<8x384xf32> to vector<8x128xf32>
    %8 = vector.extract_strided_slice %5 {offsets = [0, 256], sizes = [8, 128], strides = [1, 1]} : vector<8x384xf32> to vector<8x128xf32>
    %cst = arith.constant 14.3615665 : f32
    %9 = vector.broadcast %cst : f32 to vector<8x128xf32>
    %10 = arith.mulf %6, %9 : vector<8x128xf32>
    %11 = math.absf %7 : vector<8x128xf32>
    %cst_6 = arith.constant 1.000000e+00 : f32
    %12 = vector.broadcast %cst_6 : f32 to vector<8x128xf32>
    %13 = arith.minimumf %8, %12 : vector<8x128xf32>
    %cst_7 = arith.constant 0.000000e+00 : f32
    %14 = vector.broadcast %cst_7 : f32 to vector<8x128xf32>
    %15 = arith.subf %14, %11 : vector<8x128xf32>
    %16 = arith.cmpf olt, %13, %15 : vector<8x128xf32>
    %cst_8 = arith.constant 0.000000e+00 : f32
    %17 = vector.broadcast %cst_8 : f32 to vector<8x128xf32>
    %18 = arith.subf %17, %11 : vector<8x128xf32>
    %19 = arith.select %16, %18, %13 : vector<8x128xi1>, vector<8x128xf32>
    %20 = arith.addf %11, %19 : vector<8x128xf32>
    %cst_9 = arith.constant 1.000000e+00 : f32
    %21 = vector.broadcast %cst_9 : f32 to vector<8x128xf32>
    %22 = arith.subf %21, %19 : vector<8x128xf32>
    %cst_10 = arith.constant 14.3615665 : f32
    %23 = vector.broadcast %cst_10 : f32 to vector<8x128xf32>
    %24 = arith.mulf %3, %23 : vector<8x128xf32>
    %cst_11 = arith.constant 14.3615665 : f32
    %25 = vector.broadcast %cst_11 : f32 to vector<8x128xf32>
    %26 = arith.mulf %4, %25 : vector<8x128xf32>
    %27 = arith.addf %24, %10 : vector<8x128xf32>
    %28 = arith.subf %10, %26 : vector<8x128xf32>
    %29 = arith.mulf %3, %20 : vector<8x128xf32>
    %30 = arith.mulf %4, %22 : vector<8x128xf32>
    %c0_12 = arith.constant 0 : index
    %c0_13 = arith.constant 0 : index
    %c0_14 = arith.constant 0 : index
    %31 = vector.load %arg7[%c0_12, %c0_13, %c0_14] : memref<8x8x128xbf16, #tpu.memory_space<vmem>>, vector<8x8x128xbf16>
    %32 = arith.extf %31 : vector<8x8x128xbf16> to vector<8x8x128xf32>
    %33 = vector.shape_cast %27 : vector<8x128xf32> to vector<8x1x128xf32>
    %cst_15 = arith.constant 14.3615665 : f32
    %34 = vector.broadcast %cst_15 : f32 to vector<8x8x128xf32>
    %35 = arith.mulf %32, %34 : vector<8x8x128xf32>
    %36 = vector.broadcast %33 : vector<8x1x128xf32> to vector<8x8x128xf32>
    %37 = arith.subf %36, %35 : vector<8x8x128xf32>
    %38 = math.sin %37 : vector<8x8x128xf32>
    %39 = math.absf %38 : vector<8x8x128xf32>
    %cst_16 = arith.constant dense<0.000000e+00> : vector<8x8xf32>
    %40 = vector.multi_reduction <add>, %39, %cst_16 [2] : vector<8x8x128xf32> to vector<8x8xf32>
    %cst_17 = arith.constant 5.468750e-02 : f32
    %41 = vector.broadcast %cst_17 : f32 to vector<8x8xf32>
    %42 = arith.mulf %40, %41 : vector<8x8xf32>
    %43 = vector.shape_cast %29 : vector<8x128xf32> to vector<8x1x128xf32>
    %44 = vector.shape_cast %22 : vector<8x128xf32> to vector<8x1x128xf32>
    %45 = vector.broadcast %44 : vector<8x1x128xf32> to vector<8x8x128xf32>
    %46 = arith.mulf %32, %45 : vector<8x8x128xf32>
    %47 = vector.broadcast %43 : vector<8x1x128xf32> to vector<8x8x128xf32>
    %48 = arith.subf %47, %46 : vector<8x8x128xf32>
    %49 = arith.mulf %48, %48 : vector<8x8x128xf32>
    %cst_18 = arith.constant dense<0.000000e+00> : vector<8x8xf32>
    %50 = vector.multi_reduction <add>, %49, %cst_18 [2] : vector<8x8x128xf32> to vector<8x8xf32>
    %51 = math.sqrt %50 : vector<8x8xf32>
    %cst_19 = arith.constant 5.000000e-01 : f32
    %52 = vector.broadcast %cst_19 : f32 to vector<8x8xf32>
    %53 = arith.mulf %51, %52 : vector<8x8xf32>
    %54 = arith.addf %42, %53 : vector<8x8xf32>
    %cst_20 = arith.constant 1.200000e+01 : f32
    %55 = vector.broadcast %cst_20 : f32 to vector<8x8xf32>
    %56 = arith.subf %55, %54 : vector<8x8xf32>
    %cst_21 = arith.constant 1.000000e+00 : f32
    %57 = vector.broadcast %cst_21 : f32 to vector<8x8xf32>
    %58 = arith.mulf %56, %57 : vector<8x8xf32>
    %c0_22 = arith.constant 0 : index
    %c0_23 = arith.constant 0 : index
    %59 = vector.load %arg9[%c0_22, %c0_23] : memref<8x1xf32, #tpu.memory_space<vmem>>, vector<8x1xf32>
    %cst_24 = arith.constant dense<0xFF800000> : vector<8xf32>
    %60 = vector.multi_reduction <maximumf>, %58, %cst_24 [1] : vector<8x8xf32> to vector<8xf32>
    %61 = vector.shape_cast %60 : vector<8xf32> to vector<8x1xf32>
    %62 = arith.maximumf %59, %61 : vector<8x1xf32>
    %c0_25 = arith.constant 0 : index
    %c0_26 = arith.constant 0 : index
    %63 = vector.load %arg9[%c0_25, %c0_26] : memref<8x1xf32, #tpu.memory_space<vmem>>, vector<8x1xf32>
    %64 = arith.subf %63, %62 : vector<8x1xf32>
    %65 = math.exp %64 : vector<8x1xf32>
    %66 = vector.broadcast %62 : vector<8x1xf32> to vector<8x8xf32>
    %67 = arith.subf %58, %66 : vector<8x8xf32>
    %68 = math.exp %67 : vector<8x8xf32>
    %c0_27 = arith.constant 0 : index
    %c0_28 = arith.constant 0 : index
    %69 = vector.load %arg10[%c0_27, %c0_28] : memref<8x1xf32, #tpu.memory_space<vmem>>, vector<8x1xf32>
    %70 = arith.mulf %65, %69 : vector<8x1xf32>
    %cst_29 = arith.constant dense<0.000000e+00> : vector<8xf32>
    %71 = vector.multi_reduction <add>, %68, %cst_29 [1] : vector<8x8xf32> to vector<8xf32>
    %72 = vector.shape_cast %71 : vector<8xf32> to vector<8x1xf32>
    %73 = arith.addf %70, %72 : vector<8x1xf32>
    %c0_30 = arith.constant 0 : index
    %c0_31 = arith.constant 0 : index
    %74 = vector.load %arg10[%c0_30, %c0_31] : memref<8x1xf32, #tpu.memory_space<vmem>>, vector<8x1xf32>
    tpu.vector_store %arg10[%c0_30, %c0_31], %73 {strides = array<i32>} : memref<8x1xf32, #tpu.memory_space<vmem>>, vector<8x1xf32>,
    %c0_32 = arith.constant 0 : index
    %c0_33 = arith.constant 0 : index
    %75 = vector.load %arg11[%c0_32, %c0_33] : memref<8x1xf32, #tpu.memory_space<vmem>>, vector<8x1xf32>
    %76 = arith.mulf %65, %75 : vector<8x1xf32>
    %cst_34 = arith.constant 0.000000e+00 : f32
    %77 = vector.broadcast %cst_34 : f32 to vector<8x8xf32>
    %78 = arith.subf %77, %56 : vector<8x8xf32>
    %cst_35 = arith.constant 0.000000e+00 : f32
    %79 = vector.broadcast %cst_35 : f32 to vector<8x8xf32>
    %80 = arith.minimumf %78, %79 : vector<8x8xf32>
    %81 = math.absf %78 : vector<8x8xf32>
    %cst_36 = arith.constant 0.000000e+00 : f32
    %82 = vector.broadcast %cst_36 : f32 to vector<8x8xf32>
    %83 = arith.subf %82, %81 : vector<8x8xf32>
    %84 = math.exp %83 : vector<8x8xf32>
    %cst_37 = arith.constant 1.000000e+00 : f32
    %85 = vector.broadcast %cst_37 : f32 to vector<8x8xf32>
    %86 = arith.addf %85, %84 : vector<8x8xf32>
    %87 = math.log %86 : vector<8x8xf32>
    %88 = arith.subf %80, %87 : vector<8x8xf32>
    %89 = arith.mulf %68, %88 : vector<8x8xf32>
    %cst_38 = arith.constant dense<0.000000e+00> : vector<8xf32>
    %90 = vector.multi_reduction <add>, %89, %cst_38 [1] : vector<8x8xf32> to vector<8xf32>
    %91 = vector.shape_cast %90 : vector<8xf32> to vector<8x1xf32>
    %92 = arith.addf %76, %91 : vector<8x1xf32>
    %c0_39 = arith.constant 0 : index
    %c0_40 = arith.constant 0 : index
    %93 = vector.load %arg11[%c0_39, %c0_40] : memref<8x1xf32, #tpu.memory_space<vmem>>, vector<8x1xf32>
    tpu.vector_store %arg11[%c0_39, %c0_40], %92 {strides = array<i32>} : memref<8x1xf32, #tpu.memory_space<vmem>>, vector<8x1xf32>,
    %c0_41 = arith.constant 0 : index
    %c0_42 = arith.constant 0 : index
    %94 = vector.load %arg9[%c0_41, %c0_42] : memref<8x1xf32, #tpu.memory_space<vmem>>, vector<8x1xf32>
    tpu.vector_store %arg9[%c0_41, %c0_42], %62 {strides = array<i32>} : memref<8x1xf32, #tpu.memory_space<vmem>>, vector<8x1xf32>,
    %c0_43 = arith.constant 0 : index
    %c0_44 = arith.constant 0 : index
    %c0_45 = arith.constant 0 : index
    %95 = vector.load %arg6[%c0_43, %c0_44, %c0_45] : memref<8x8x128xbf16, #tpu.memory_space<vmem>>, vector<8x8x128xbf16>
    %96 = arith.extf %95 : vector<8x8x128xbf16> to vector<8x8x128xf32>
    %cst_46 = arith.constant 14.3615665 : f32
    %97 = vector.broadcast %cst_46 : f32 to vector<8x8x128xf32>
    %98 = arith.mulf %96, %97 : vector<8x8x128xf32>
    %99 = vector.shape_cast %28 : vector<8x128xf32> to vector<8x1x128xf32>
    %100 = vector.broadcast %99 : vector<8x1x128xf32> to vector<8x8x128xf32>
    %101 = arith.addf %98, %100 : vector<8x8x128xf32>
    %102 = math.sin %101 : vector<8x8x128xf32>
    %103 = math.absf %102 : vector<8x8x128xf32>
    %cst_47 = arith.constant dense<0.000000e+00> : vector<8x8xf32>
    %104 = vector.multi_reduction <add>, %103, %cst_47 [2] : vector<8x8x128xf32> to vector<8x8xf32>
    %cst_48 = arith.constant 5.468750e-02 : f32
    %105 = vector.broadcast %cst_48 : f32 to vector<8x8xf32>
    %106 = arith.mulf %104, %105 : vector<8x8xf32>
    %107 = vector.shape_cast %20 : vector<8x128xf32> to vector<8x1x128xf32>
    %108 = vector.broadcast %107 : vector<8x1x128xf32> to vector<8x8x128xf32>
    %109 = arith.mulf %96, %108 : vector<8x8x128xf32>
    %110 = vector.shape_cast %30 : vector<8x128xf32> to vector<8x1x128xf32>
    %111 = vector.broadcast %110 : vector<8x1x128xf32> to vector<8x8x128xf32>
    %112 = arith.subf %109, %111 : vector<8x8x128xf32>
    %113 = arith.mulf %112, %112 : vector<8x8x128xf32>
    %cst_49 = arith.constant dense<0.000000e+00> : vector<8x8xf32>
    %114 = vector.multi_reduction <add>, %113, %cst_49 [2] : vector<8x8x128xf32> to vector<8x8xf32>
    %115 = math.sqrt %114 : vector<8x8xf32>
    %cst_50 = arith.constant 5.000000e-01 : f32
    %116 = vector.broadcast %cst_50 : f32 to vector<8x8xf32>
    %117 = arith.mulf %115, %116 : vector<8x8xf32>
    %118 = arith.addf %106, %117 : vector<8x8xf32>
    %cst_51 = arith.constant 1.200000e+01 : f32
    %119 = vector.broadcast %cst_51 : f32 to vector<8x8xf32>
    %120 = arith.subf %119, %118 : vector<8x8xf32>
    %cst_52 = arith.constant 1.000000e+00 : f32
    %121 = vector.broadcast %cst_52 : f32 to vector<8x8xf32>
    %122 = arith.mulf %120, %121 : vector<8x8xf32>
    %c0_53 = arith.constant 0 : index
    %c0_54 = arith.constant 0 : index
    %123 = vector.load %arg12[%c0_53, %c0_54] : memref<8x1xf32, #tpu.memory_space<vmem>>, vector<8x1xf32>
    %cst_55 = arith.constant dense<0xFF800000> : vector<8xf32>
    %124 = vector.multi_reduction <maximumf>, %122, %cst_55 [1] : vector<8x8xf32> to vector<8xf32>
    %125 = vector.shape_cast %124 : vector<8xf32> to vector<8x1xf32>
    %126 = arith.maximumf %123, %125 : vector<8x1xf32>
    %c0_56 = arith.constant 0 : index
    %c0_57 = arith.constant 0 : index
    %127 = vector.load %arg12[%c0_56, %c0_57] : memref<8x1xf32, #tpu.memory_space<vmem>>, vector<8x1xf32>
    %128 = arith.subf %127, %126 : vector<8x1xf32>
    %129 = math.exp %128 : vector<8x1xf32>
    %130 = vector.broadcast %126 : vector<8x1xf32> to vector<8x8xf32>
    %131 = arith.subf %122, %130 : vector<8x8xf32>
    %132 = math.exp %131 : vector<8x8xf32>
    %c0_58 = arith.constant 0 : index
    %c0_59 = arith.constant 0 : index
    %133 = vector.load %arg13[%c0_58, %c0_59] : memref<8x1xf32, #tpu.memory_space<vmem>>, vector<8x1xf32>
    %134 = arith.mulf %129, %133 : vector<8x1xf32>
    %cst_60 = arith.constant dense<0.000000e+00> : vector<8xf32>
    %135 = vector.multi_reduction <add>, %132, %cst_60 [1] : vector<8x8xf32> to vector<8xf32>
    %136 = vector.shape_cast %135 : vector<8xf32> to vector<8x1xf32>
    %137 = arith.addf %134, %136 : vector<8x1xf32>
    %c0_61 = arith.constant 0 : index
    %c0_62 = arith.constant 0 : index
    %138 = vector.load %arg13[%c0_61, %c0_62] : memref<8x1xf32, #tpu.memory_space<vmem>>, vector<8x1xf32>
    tpu.vector_store %arg13[%c0_61, %c0_62], %137 {strides = array<i32>} : memref<8x1xf32, #tpu.memory_space<vmem>>, vector<8x1xf32>,
    %c0_63 = arith.constant 0 : index
    %c0_64 = arith.constant 0 : index
    %139 = vector.load %arg14[%c0_63, %c0_64] : memref<8x1xf32, #tpu.memory_space<vmem>>, vector<8x1xf32>
    %140 = arith.mulf %129, %139 : vector<8x1xf32>
    %cst_65 = arith.constant 0.000000e+00 : f32
    %141 = vector.broadcast %cst_65 : f32 to vector<8x8xf32>
    %142 = arith.subf %141, %120 : vector<8x8xf32>
    %cst_66 = arith.constant 0.000000e+00 : f32
    %143 = vector.broadcast %cst_66 : f32 to vector<8x8xf32>
    %144 = arith.minimumf %142, %143 : vector<8x8xf32>
    %145 = math.absf %142 : vector<8x8xf32>
    %cst_67 = arith.constant 0.000000e+00 : f32
    %146 = vector.broadcast %cst_67 : f32 to vector<8x8xf32>
    %147 = arith.subf %146, %145 : vector<8x8xf32>
    %148 = math.exp %147 : vector<8x8xf32>
    %cst_68 = arith.constant 1.000000e+00 : f32
    %149 = vector.broadcast %cst_68 : f32 to vector<8x8xf32>
    %150 = arith.addf %149, %148 : vector<8x8xf32>
    %151 = math.log %150 : vector<8x8xf32>
    %152 = arith.subf %144, %151 : vector<8x8xf32>
    %153 = arith.mulf %132, %152 : vector<8x8xf32>
    %cst_69 = arith.constant dense<0.000000e+00> : vector<8xf32>
    %154 = vector.multi_reduction <add>, %153, %cst_69 [1] : vector<8x8xf32> to vector<8xf32>
    %155 = vector.shape_cast %154 : vector<8xf32> to vector<8x1xf32>
    %156 = arith.addf %140, %155 : vector<8x1xf32>
    %c0_70 = arith.constant 0 : index
    %c0_71 = arith.constant 0 : index
    %157 = vector.load %arg14[%c0_70, %c0_71] : memref<8x1xf32, #tpu.memory_space<vmem>>, vector<8x1xf32>
    tpu.vector_store %arg14[%c0_70, %c0_71], %156 {strides = array<i32>} : memref<8x1xf32, #tpu.memory_space<vmem>>, vector<8x1xf32>,
    %c0_72 = arith.constant 0 : index
    %c0_73 = arith.constant 0 : index
    %158 = vector.load %arg12[%c0_72, %c0_73] : memref<8x1xf32, #tpu.memory_space<vmem>>, vector<8x1xf32>
    tpu.vector_store %arg12[%c0_72, %c0_73], %126 {strides = array<i32>} : memref<8x1xf32, #tpu.memory_space<vmem>>, vector<8x1xf32>,
    %c0_i32_74 = arith.constant 0 : i32
    %159 = arith.cmpi eq, %arg1, %c0_i32_74 : i32
    %160 = arith.extui %159 : i1 to i32
    %c0_i32_75 = arith.constant 0 : i32
    %161 = arith.cmpi ne, %160, %c0_i32_75 : i32
    scf.if %161 {
      %c0_76 = arith.constant 0 : index
      %c0_77 = arith.constant 0 : index
      %162 = vector.load %arg5[%c0_76, %c0_77] : memref<8x1xf32, #tpu.memory_space<vmem>>, vector<8x1xf32>
      %163 = arith.subf %27, %26 : vector<8x128xf32>
      %164 = math.sin %163 : vector<8x128xf32>
      %165 = math.absf %164 : vector<8x128xf32>
      %cst_78 = arith.constant dense<0.000000e+00> : vector<8xf32>
      %166 = vector.multi_reduction <add>, %165, %cst_78 [1] : vector<8x128xf32> to vector<8xf32>
      %167 = vector.shape_cast %166 : vector<8xf32> to vector<8x1xf32>
      %cst_79 = arith.constant 5.468750e-02 : f32
      %168 = vector.broadcast %cst_79 : f32 to vector<8x1xf32>
      %169 = arith.mulf %167, %168 : vector<8x1xf32>
      %170 = arith.subf %29, %30 : vector<8x128xf32>
      %171 = arith.mulf %170, %170 : vector<8x128xf32>
      %cst_80 = arith.constant dense<0.000000e+00> : vector<8xf32>
      %172 = vector.multi_reduction <add>, %171, %cst_80 [1] : vector<8x128xf32> to vector<8xf32>
      %173 = vector.shape_cast %172 : vector<8xf32> to vector<8x1xf32>
      %174 = math.sqrt %173 : vector<8x1xf32>
      %cst_81 = arith.constant 5.000000e-01 : f32
      %175 = vector.broadcast %cst_81 : f32 to vector<8x1xf32>
      %176 = arith.mulf %174, %175 : vector<8x1xf32>
      %177 = arith.addf %169, %176 : vector<8x1xf32>
      %cst_82 = arith.constant 1.200000e+01 : f32
      %178 = vector.broadcast %cst_82 : f32 to vector<8x1xf32>
      %179 = arith.subf %178, %177 : vector<8x1xf32>
      %cst_83 = arith.constant 0.000000e+00 : f32
      %180 = vector.broadcast %cst_83 : f32 to vector<8x1xf32>
      %181 = arith.minimumf %179, %180 : vector<8x1xf32>
      %182 = math.absf %179 : vector<8x1xf32>
      %cst_84 = arith.constant 0.000000e+00 : f32
      %183 = vector.broadcast %cst_84 : f32 to vector<8x1xf32>
      %184 = arith.subf %183, %182 : vector<8x1xf32>
      %185 = math.exp %184 : vector<8x1xf32>
      %cst_85 = arith.constant 1.000000e+00 : f32
      %186 = vector.broadcast %cst_85 : f32 to vector<8x1xf32>
      %187 = arith.addf %186, %185 : vector<8x1xf32>
      %188 = math.log %187 : vector<8x1xf32>
      %189 = arith.subf %181, %188 : vector<8x1xf32>
      %c0_86 = arith.constant 0 : index
      %c0_87 = arith.constant 0 : index
      %190 = vector.load %arg11[%c0_86, %c0_87] : memref<8x1xf32, #tpu.memory_space<vmem>>, vector<8x1xf32>
      %c0_88 = arith.constant 0 : index
      %c0_89 = arith.constant 0 : index
      %191 = vector.load %arg10[%c0_88, %c0_89] : memref<8x1xf32, #tpu.memory_space<vmem>>, vector<8x1xf32>
      %192 = tpu.reciprocal %191 {approx = true} : vector<8x1xf32> -> vector<8x1xf32>
      %193 = arith.mulf %190, %192 : vector<8x1xf32>
      %c0_90 = arith.constant 0 : index
      %c0_91 = arith.constant 0 : index
      %194 = vector.load %arg14[%c0_90, %c0_91] : memref<8x1xf32, #tpu.memory_space<vmem>>, vector<8x1xf32>
      %c0_92 = arith.constant 0 : index
      %c0_93 = arith.constant 0 : index
      %195 = vector.load %arg13[%c0_92, %c0_93] : memref<8x1xf32, #tpu.memory_space<vmem>>, vector<8x1xf32>
      %196 = tpu.reciprocal %195 {approx = true} : vector<8x1xf32> -> vector<8x1xf32>
      %197 = arith.mulf %194, %196 : vector<8x1xf32>
      %198 = arith.mulf %162, %189 : vector<8x1xf32>
      %199 = vector.shape_cast %198 : vector<8x1xf32> to vector<1x8x1xf32>
      %cst_94 = arith.constant dense<0.000000e+00> : vector<1xf32>
      %200 = vector.multi_reduction <add>, %199, %cst_94 [1, 2] : vector<1x8x1xf32> to vector<1xf32>
      %201 = vector.shape_cast %200 : vector<1xf32> to vector<1x1x1xf32>
      %202 = vector.extract %201[0, 0, 0] : f32 from vector<1x1x1xf32>
      %203 = arith.addf %193, %197 : vector<8x1xf32>
      %204 = arith.mulf %162, %203 : vector<8x1xf32>
      %205 = vector.shape_cast %204 : vector<8x1xf32> to vector<1x8x1xf32>
      %cst_95 = arith.constant dense<0.000000e+00> : vector<1xf32>
      %206 = vector.multi_reduction <add>, %205, %cst_95 [1, 2] : vector<1x8x1xf32> to vector<1xf32>
      %207 = vector.shape_cast %206 : vector<1xf32> to vector<1x1x1xf32>
      %208 = vector.extract %207[0, 0, 0] : f32 from vector<1x1x1xf32>
      %cst_96 = arith.constant 5.000000e-01 : f32
      %209 = arith.mulf %208, %cst_96 : f32
      %210 = vector.shape_cast %162 : vector<8x1xf32> to vector<1x8x1xf32>
      %cst_97 = arith.constant dense<0.000000e+00> : vector<1xf32>
      %211 = vector.multi_reduction <add>, %210, %cst_97 [1, 2] : vector<1x8x1xf32> to vector<1xf32>
      %212 = vector.shape_cast %211 : vector<1xf32> to vector<1x1x1xf32>
      %213 = vector.extract %212[0, 0, 0] : f32 from vector<1x1x1xf32>
      %214 = tpu.iota {dimensions = array<i32: 2>} : vector<1x8x128xi32>
      %c0_i32_98 = arith.constant 0 : i32
      %215 = vector.broadcast %c0_i32_98 : i32 to vector<1x8x128xi32>
      %216 = arith.cmpi eq, %214, %215 : vector<1x8x128xi32>
      %cst_99 = arith.constant 0.000000e+00 : f32
      %217 = vector.broadcast %202 : f32 to vector<1x8x128xf32>
      %218 = vector.broadcast %cst_99 : f32 to vector<1x8x128xf32>
      %219 = arith.select %216, %217, %218 : vector<1x8x128xi1>, vector<1x8x128xf32>
      %c1_i32 = arith.constant 1 : i32
      %220 = vector.broadcast %c1_i32 : i32 to vector<1x8x128xi32>
      %221 = arith.cmpi eq, %214, %220 : vector<1x8x128xi32>
      %cst_100 = arith.constant 0.000000e+00 : f32
      %222 = vector.broadcast %209 : f32 to vector<1x8x128xf32>
      %223 = vector.broadcast %cst_100 : f32 to vector<1x8x128xf32>
      %224 = arith.select %221, %222, %223 : vector<1x8x128xi1>, vector<1x8x128xf32>
      %225 = arith.addf %219, %224 : vector<1x8x128xf32>
      %c2_i32 = arith.constant 2 : i32
      %226 = vector.broadcast %c2_i32 : i32 to vector<1x8x128xi32>
      %227 = arith.cmpi eq, %214, %226 : vector<1x8x128xi32>
      %cst_101 = arith.constant 0.000000e+00 : f32
      %228 = vector.broadcast %213 : f32 to vector<1x8x128xf32>
      %229 = vector.broadcast %cst_101 : f32 to vector<1x8x128xf32>
      %230 = arith.select %227, %228, %229 : vector<1x8x128xi1>, vector<1x8x128xf32>
      %231 = arith.addf %225, %230 : vector<1x8x128xf32>
      %c0_102 = arith.constant 0 : index
      %c0_103 = arith.constant 0 : index
      %c0_104 = arith.constant 0 : index
      %232 = vector.load %arg8[%c0_102, %c0_103, %c0_104] : memref<1x8x128xf32, #tpu.memory_space<vmem>>, vector<1x8x128xf32>
      tpu.vector_store %arg8[%c0_102, %c0_103, %c0_104], %231 {strides = array<i32>} : memref<1x8x128xf32, #tpu.memory_space<vmem>>, vector<1x8x128xf32>,
    } else {
    }
    return
  }
  func.func @transform_0(%arg0: i32, %arg1: i32) -> (i32, i32) {
    %c0_i32 = arith.constant 0 : i32
    %c0_i32_0 = arith.constant 0 : i32
    return %arg0, %c0_i32 : i32, i32
  }
  func.func @transform_1(%arg0: i32, %arg1: i32) -> (i32, i32) {
    %c0_i32 = arith.constant 0 : i32
    %c0_i32_0 = arith.constant 0 : i32
    return %arg0, %c0_i32 : i32, i32
  }
  func.func @transform_2(%arg0: i32, %arg1: i32) -> (i32, i32) {
    %c0_i32 = arith.constant 0 : i32
    %c0_i32_0 = arith.constant 0 : i32
    return %arg0, %c0_i32 : i32, i32
  }
  func.func @transform_3(%arg0: i32, %arg1: i32) -> (i32, i32) {
    %c0_i32 = arith.constant 0 : i32
    %c0_i32_0 = arith.constant 0 : i32
    return %arg0, %c0_i32 : i32, i32
  }
  func.func @transform_4(%arg0: i32, %arg1: i32) -> (i32, i32, i32) {
    %c0_i32 = arith.constant 0 : i32
    %c0_i32_0 = arith.constant 0 : i32
    return %arg0, %arg1, %c0_i32 : i32, i32, i32
  }
  func.func @transform_5(%arg0: i32, %arg1: i32) -> (i32, i32, i32) {
    %c0_i32 = arith.constant 0 : i32
    %c0_i32_0 = arith.constant 0 : i32
    return %arg0, %arg1, %c0_i32 : i32, i32, i32
  }
  func.func @transform_6(%arg0: i32, %arg1: i32) -> (i32, i32, i32) {
    %c0_i32 = arith.constant 0 : i32
    %c0_i32_0 = arith.constant 0 : i32
    %c0_i32_1 = arith.constant 0 : i32
    return %arg0, %c0_i32, %c0_i32_0 : i32, i32, i32
  }
}

</mosaic_0001>

<llo_original>
// kernel: tpu_custom_call.1
$region0: #{tpu_custom_call.1}
  #allocation0 [shape = 'u32[]', space=smem, size = 0x4, offset = 0x4, fixed_abs, tag = 'smem constant byte address 0x4 - core index']
  #allocation1 [shape = 'u32[144,128]{1,0:T(1,128)}', space=vmem, size = 0x12000, scoped, tag = 'internal scratch']
  #allocation2 [shape = 'f32[8,1]{1,0:T(8,128)}', space=vmem, size = 0x1000, scoped, tag = 'scratch operand']
  #allocation3 [shape = 'f32[8,1]{1,0:T(8,128)}', space=vmem, size = 0x1000, scoped, tag = 'scratch operand']
  #allocation4 [shape = 'f32[8,1]{1,0:T(8,128)}', space=vmem, size = 0x1000, scoped, tag = 'scratch operand']
  #allocation5 [shape = 'f32[8,1]{1,0:T(8,128)}', space=vmem, size = 0x1000, scoped, tag = 'scratch operand']
  #allocation6 [shape = 'f32[8,1]{1,0:T(8,128)}', space=vmem, size = 0x1000, scoped, tag = 'scratch operand']
  #allocation7 [shape = 'f32[8,1]{1,0:T(8,128)}', space=vmem, size = 0x1000, scoped, tag = 'scratch operand']
  %s0 = inlined_call_operand.vmem [shape: f32[16,128], index: 0, kind: input, shape index: {}]
  %s1 = inlined_call_operand.hbm [shape: f32[16,128], index: 1, kind: input, shape index: {}]
  %s2 = inlined_call_operand.hbm [shape: f32[16,384], index: 2, kind: input, shape index: {}]
  %s3 = inlined_call_operand.vmem [shape: f32[16,1], index: 3, kind: input, shape index: {}]
  %s4 = inlined_call_operand.hbm [shape: bf16[16,8,128], index: 4, kind: input, shape index: {}]
  %s5 = inlined_call_operand.hbm [shape: bf16[16,8,128], index: 5, kind: input, shape index: {}]
  %s6 = inlined_call_operand.hbm [shape: f32[2,8,128], index: 6, kind: output, shape index: {}]
  %s7 = sld [smem:[#allocation0]]
  $region81: #{tpu_custom_call.1} parent=0
    _
  %s9 = ssub.s32 1, %s7
  %s10 = scalar_select 0, %s9, %s7
  $region1: #{tpu_custom_call.1} parent=0
    #allocation8 [shape = 'u8[8192]{0}', space=vmem, size = 0x2000, scoped, tag = 'input window, operand 1']
    #allocation9 [shape = 's32[2]{0}', space=sflag, size = 0x8, scoped, tag = 'scoped memory for tpu_custom_call.1']
    #allocation10 [shape = 's32[2]{0}', space=sflag, size = 0x8, scoped, tag = 'scoped memory for tpu_custom_call.1']
    #allocation11 [shape = 'u8[24576]{0}', space=vmem, size = 0x6000, scoped, tag = 'input window, operand 2']
    #allocation12 [shape = 's32[2]{0}', space=sflag, size = 0x8, scoped, tag = 'scoped memory for tpu_custom_call.1']
    #allocation13 [shape = 'u8[32768]{0}', space=vmem, size = 0x8000, scoped, tag = 'input window, operand 4']
    #allocation14 [shape = 'u8[32768]{0}', space=vmem, size = 0x8000, scoped, tag = 'input window, operand 5']
    #allocation15 [shape = 's32[2]{0}', space=sflag, size = 0x8, scoped, tag = 'scoped memory for tpu_custom_call.1']
    #allocation16 [shape = 'u8[8192]{0}', space=vmem, size = 0x2000, scoped, tag = 'output window, operand 0']
    %11 = vsyncpa [#allocation9], 0
    %s12 = scalar_lea.sflag [#allocation9], 1
    %13 = vsyncpa %s12, 0
    %14 = vsyncpa [#allocation12], 0
    %s15 = scalar_lea.sflag [#allocation12], 1
    %16 = vsyncpa %s15, 0
    %17 = vsyncpa [#allocation15], 0
    %s18 = scalar_lea.sflag [#allocation15], 1
    %19 = vsyncpa %s18, 0
    %20 = vsyncpa [#allocation10], 0
    %s21 = scalar_lea.sflag [#allocation10], 1
    %22 = vsyncpa %s21, 0
    loop: start=0, step=1, limit=4
    $region2: #{tpu_custom_call.1} parent=1 // loop_pre_header
      _
    $region3: #{tpu_custom_call.1} parent=1 // loop_header
      %s24 = sphi 0, %s28
      %p25 = scmp.ge.s32.totalorder %s24, 4
      %s31 = sphi 0, %s43
      %s32 = sphi 0, %s39
      %s33 = sphi 0, %s31
      %s34 = sphi 0, %s32
      %s35 = sphi 0, %s33
      %s36 = sphi 0, %s34
      %s46 = sphi 0, %s48
      %s49 = sphi 0, %s46
      %s50 = sphi 0, %s49
      %s66 = sphi 0, %s50
      %s72 = sphi 0, %s74
      %s75 = sphi 0, %s72
      %s76 = sphi 0, %s75
      %s92 = sphi 0, %s76
      %s98 = sphi 0, %s100
      %s101 = sphi 0, %s98
      %s102 = sphi 0, %s101
      %s118 = sphi 0, %s102
      %s124 = sphi 0, %s126
      %s127 = sphi 0, %s124
      %s128 = sphi 0, %s127
      %s144 = sphi 0, %s128
      %s152 = sphi 0, %s154
      %s155 = sphi 0, %s152
      %s156 = sphi 0, %s155
      %s172 = sphi 0, %s156
      %s180 = sphi 0, %s182
      %s183 = sphi 0, %s180
      %s184 = sphi 0, %s183
      %s200 = sphi 0, %s184
      %s206 = sphi 0, %s208
      %s209 = sphi 0, %s206
      %s210 = sphi 0, %s209
      %s226 = sphi 0, %s210
    $region4: #{tpu_custom_call.1} parent=1 // loop_header_branch
      %27 = sbr.rel (%p25) target = $region8
    $region5: #{tpu_custom_call.1} parent=1 // loop_body
      %s29 = ssub.s32 %s24, 1
      %s30 = ssub.s32 %s24, 2
      %s37 = sadd.s32 1, %s32
      %p38 = scmp.ge.s32.totalorder %s37, 1
      %s39 = scalar_select %p38, 0, %s37
      %s40 = sadd.s32 1, %s31
      %s41 = scalar_select %p38, %s40, %s31
      %p42 = scmp.ge.s32.totalorder %s41, 2
      %s43 = scalar_select %p42, 0, %s41
      %s44 = ssub.s32 %s31, %s43
      %p45 = scmp.eq.s32.totalorder %s44, 0
      %s47 = sadd.s32 %s46, 1
      %s48 = scalar_select %p45, %s46, %s47
      %p51 = pneg %p45
      %p52 = scmp.eq.s32.totalorder %s24, 1
      %p53 = por %p51, %p52
      %p54 = scmp.ne.s32.totalorder %s46, %s49
      %p55 = scmp.eq.s32.totalorder %s24, 0
      %p56 = por %p54, %p55
      %p57 = scmp.ne.s32.totalorder %s46, %s49
      %p58 = scmp.eq.s32.totalorder %s29, 1
      %p59 = por %p57, %p58
      %p60 = scmp.ne.s32.totalorder %s49, %s50
      %p61 = scmp.eq.s32.totalorder %s29, 0
      %p62 = por %p60, %p61
      %p63 = scmp.ne.s32.totalorder %s49, %s50
      %p64 = scmp.eq.s32.totalorder %s30, 1
      %p65 = por %p63, %p64
      %p67 = scmp.ne.s32.totalorder %s50, %s66
      %p68 = scmp.eq.s32.totalorder %s30, 0
      %p69 = por %p67, %p68
      %s70 = ssub.s32 %s31, %s43
      %p71 = scmp.eq.s32.totalorder %s70, 0
      %s73 = sadd.s32 %s72, 1
      %s74 = scalar_select %p71, %s72, %s73
      %p77 = pneg %p71
      %p78 = scmp.eq.s32.totalorder %s24, 1
      %p79 = por %p77, %p78
      %p80 = scmp.ne.s32.totalorder %s72, %s75
      %p81 = scmp.eq.s32.totalorder %s24, 0
      %p82 = por %p80, %p81
      %p83 = scmp.ne.s32.totalorder %s72, %s75
      %p84 = scmp.eq.s32.totalorder %s29, 1
      %p85 = por %p83, %p84
      %p86 = scmp.ne.s32.totalorder %s75, %s76
      %p87 = scmp.eq.s32.totalorder %s29, 0
      %p88 = por %p86, %p87
      %p89 = scmp.ne.s32.totalorder %s75, %s76
      %p90 = scmp.eq.s32.totalorder %s30, 1
      %p91 = por %p89, %p90
      %p93 = scmp.ne.s32.totalorder %s76, %s92
      %p94 = scmp.eq.s32.totalorder %s30, 0
      %p95 = por %p93, %p94
      %s96 = ssub.s32 %s31, %s43
      %p97 = scmp.eq.s32.totalorder %s96, 0
      %s99 = sadd.s32 %s98, 1
      %s100 = scalar_select %p97, %s98, %s99
      %p103 = pneg %p97
      %p104 = scmp.eq.s32.totalorder %s24, 1
      %p105 = por %p103, %p104
      %p106 = scmp.ne.s32.totalorder %s98, %s101
      %p107 = scmp.eq.s32.totalorder %s24, 0
      %p108 = por %p106, %p107
      %p109 = scmp.ne.s32.totalorder %s98, %s101
      %p110 = scmp.eq.s32.totalorder %s29, 1
      %p111 = por %p109, %p110
      %p112 = scmp.ne.s32.totalorder %s101, %s102
      %p113 = scmp.eq.s32.totalorder %s29, 0
      %p114 = por %p112, %p113
      %p115 = scmp.ne.s32.totalorder %s101, %s102
      %p116 = scmp.eq.s32.totalorder %s30, 1
      %p117 = por %p115, %p116
      %p119 = scmp.ne.s32.totalorder %s102, %s118
      %p120 = scmp.eq.s32.totalorder %s30, 0
      %p121 = por %p119, %p120
      %s122 = ssub.s32 %s31, %s43
      %p123 = scmp.eq.s32.totalorder %s122, 0
      %s125 = sadd.s32 %s124, 1
      %s126 = scalar_select %p123, %s124, %s125
      %p129 = pneg %p123
      %p130 = scmp.eq.s32.totalorder %s24, 1
      %p131 = por %p129, %p130
      %p132 = scmp.ne.s32.totalorder %s124, %s127
      %p133 = scmp.eq.s32.totalorder %s24, 0
      %p134 = por %p132, %p133
      %p135 = scmp.ne.s32.totalorder %s124, %s127
      %p136 = scmp.eq.s32.totalorder %s29, 1
      %p137 = por %p135, %p136
      %p138 = scmp.ne.s32.totalorder %s127, %s128
      %p139 = scmp.eq.s32.totalorder %s29, 0
      %p140 = por %p138, %p139
      %p141 = scmp.ne.s32.totalorder %s127, %s128
      %p142 = scmp.eq.s32.totalorder %s30, 1
      %p143 = por %p141, %p142
      %p145 = scmp.ne.s32.totalorder %s128, %s144
      %p146 = scmp.eq.s32.totalorder %s30, 0
      %p147 = por %p145, %p146
      %s148 = ssub.s32 %s31, %s43
      %s149 = ssub.s32 %s32, %s39
      %s150 = sor.u32 %s148, %s149
      %p151 = scmp.eq.s32.totalorder %s150, 0
      %s153 = sadd.s32 %s152, 1
      %s154 = scalar_select %p151, %s152, %s153
      %p157 = pneg %p151
      %p158 = scmp.eq.s32.totalorder %s24, 1
      %p159 = por %p157, %p158
      %p160 = scmp.ne.s32.totalorder %s152, %s155
      %p161 = scmp.eq.s32.totalorder %s24, 0
      %p162 = por %p160, %p161
      %p163 = scmp.ne.s32.totalorder %s152, %s155
      %p164 = scmp.eq.s32.totalorder %s29, 1
      %p165 = por %p163, %p164
      %p166 = scmp.ne.s32.totalorder %s155, %s156
      %p167 = scmp.eq.s32.totalorder %s29, 0
      %p168 = por %p166, %p167
      %p169 = scmp.ne.s32.totalorder %s155, %s156
      %p170 = scmp.eq.s32.totalorder %s30, 1
      %p171 = por %p169, %p170
      %p173 = scmp.ne.s32.totalorder %s156, %s172
      %p174 = scmp.eq.s32.totalorder %s30, 0
      %p175 = por %p173, %p174
      %s176 = ssub.s32 %s31, %s43
      %s177 = ssub.s32 %s32, %s39
      %s178 = sor.u32 %s176, %s177
      %p179 = scmp.eq.s32.totalorder %s178, 0
      %s181 = sadd.s32 %s180, 1
      %s182 = scalar_select %p179, %s180, %s181
      %p185 = pneg %p179
      %p186 = scmp.eq.s32.totalorder %s24, 1
      %p187 = por %p185, %p186
      %p188 = scmp.ne.s32.totalorder %s180, %s183
      %p189 = scmp.eq.s32.totalorder %s24, 0
      %p190 = por %p188, %p189
      %p191 = scmp.ne.s32.totalorder %s180, %s183
      %p192 = scmp.eq.s32.totalorder %s29, 1
      %p193 = por %p191, %p192
      %p194 = scmp.ne.s32.totalorder %s183, %s184
      %p195 = scmp.eq.s32.totalorder %s29, 0
      %p196 = por %p194, %p195
      %p197 = scmp.ne.s32.totalorder %s183, %s184
      %p198 = scmp.eq.s32.totalorder %s30, 1
      %p199 = por %p197, %p198
      %p201 = scmp.ne.s32.totalorder %s184, %s200
      %p202 = scmp.eq.s32.totalorder %s30, 0
      %p203 = por %p201, %p202
      %s204 = ssub.s32 %s31, %s43
      %p205 = scmp.eq.s32.totalorder %s204, 0
      %s207 = sadd.s32 %s206, 1
      %s208 = scalar_select %p205, %s206, %s207
      %p211 = pneg %p205
      %p212 = scmp.eq.s32.totalorder %s24, 1
      %p213 = por %p211, %p212
      %p214 = scmp.ne.s32.totalorder %s206, %s209
      %p215 = scmp.eq.s32.totalorder %s24, 0
      %p216 = por %p214, %p215
      %p217 = scmp.ne.s32.totalorder %s206, %s209
      %p218 = scmp.eq.s32.totalorder %s29, 1
      %p219 = por %p217, %p218
      %p220 = scmp.ne.s32.totalorder %s209, %s210
      %p221 = scmp.eq.s32.totalorder %s29, 0
      %p222 = por %p220, %p221
      %p223 = scmp.ne.s32.totalorder %s209, %s210
      %p224 = scmp.eq.s32.totalorder %s30, 1
      %p225 = por %p223, %p224
      %p227 = scmp.ne.s32.totalorder %s210, %s226
      %p228 = scmp.eq.s32.totalorder %s30, 0
      %p229 = por %p227, %p228
      %p230 = scmp.le.s32.totalorder 1, %s24
      %p231 = scmp.lt.s32.totalorder %s24, 3
      %p232 = pnand %p230, %p231
      %p233 = pneg %p232
      // Predicated region
      $region9: #{tpu_custom_call.1} parent=5 // pred_check
        _
      $region10: #{tpu_custom_call.1} parent=5 // pred_check_branch
        %235 = sbr.rel (%p232) target = $region12
      $region11: #{tpu_custom_call.1} parent=5 // pred_region
        %s236 = ssub.s32 %s24, 1
      $region12: #{tpu_custom_call.1} parent=5 // pred_fallthru
        _
      %p237 = scmp.lt.s32.totalorder %s24, 2
      // Predicated region
      $region13: #{tpu_custom_call.1} parent=5 // pred_check
        %p238 = pneg %p237
      $region14: #{tpu_custom_call.1} parent=5 // pred_check_branch
        %240 = sbr.rel (%p238) target = $region16
      $region15: #{tpu_custom_call.1} parent=5 // pred_region
        // Predicated region
        $region17: #{tpu_custom_call.1} parent=15 // pred_check
          %p241 = pneg %p56
        $region18: #{tpu_custom_call.1} parent=15 // pred_check_branch
          %243 = sbr.rel (%p241) target = $region20
        $region19: #{tpu_custom_call.1} parent=15 // pred_region
          %p244 = scmp.lt.s32.totalorder %s31, 1
          %s245 = scalar_select %p244, %s31, 1
          %s246 = smul.addr %s245, 8
          %s247 = scalar_lea.vmem %s0, %s246
        $region20: #{tpu_custom_call.1} parent=15 // pred_fallthru
          _
        // Predicated region
        $region21: #{tpu_custom_call.1} parent=15 // pred_check
          %p248 = pneg %p82
        $region22: #{tpu_custom_call.1} parent=15 // pred_check_branch
          %250 = sbr.rel (%p248) target = $region24
        $region23: #{tpu_custom_call.1} parent=15 // pred_region
          %s251 = sand.u32 %s72, 1
          %s252 = scalar_lea.sflag [#allocation9], %s251
          %s253 = sand.u32 %s72, 1
          %s254 = smul.addr %s253, 8
          %s255 = scalar_lea.vmem [#allocation8], %s254
          %s257 = ssub.s32 128, 128
          %258 = vsyncadd %s252, %s257
          %s259 = smul.addr %s31, 128
          %s260 = scalar_lea.hbm %s1, %s259
          %s262 = sshll.u32 %s255, 4
          %s263 = int_to_ptr.vmem [resolvable:$true] %s262
          %265 = dma.hbm_to_vmem [thread:$0]  %s260, 128, %s263, %s252
        $region24: #{tpu_custom_call.1} parent=15 // pred_fallthru
          _
        // Predicated region
        $region25: #{tpu_custom_call.1} parent=15 // pred_check
          %p266 = pneg %p108
        $region26: #{tpu_custom_call.1} parent=15 // pred_check_branch
          %268 = sbr.rel (%p266) target = $region28
        $region27: #{tpu_custom_call.1} parent=15 // pred_region
          %s269 = sand.u32 %s24, 1
          %s270 = scalar_lea.sflag [#allocation12], %s269
          %s271 = sand.u32 %s98, 1
          %s272 = smul.addr %s271, 24
          %s273 = scalar_lea.vmem [#allocation11], %s272
          %s275 = ssub.s32 384, 384
          %276 = vsyncadd %s270, %s275
          %s277 = smul.addr %s31, 3
          %s278 = smul.addr %s277, 128
          %s279 = scalar_lea.hbm %s2, %s278
          %s281 = sshll.u32 %s273, 4
          %s282 = int_to_ptr.vmem [resolvable:$true] %s281
          %284 = dma.hbm_to_vmem [thread:$0]  %s279, 384, %s282, %s270
        $region28: #{tpu_custom_call.1} parent=15 // pred_fallthru
          _
        // Predicated region
        $region29: #{tpu_custom_call.1} parent=15 // pred_check
          %p285 = pneg %p134
        $region30: #{tpu_custom_call.1} parent=15 // pred_check_branch
          %287 = sbr.rel (%p285) target = $region32
        $region31: #{tpu_custom_call.1} parent=15 // pred_region
          %p288 = scmp.lt.s32.totalorder %s31, 1
          %s289 = scalar_select %p288, %s31, 1
          %s290 = smul.addr %s289, 8
          %s291 = scalar_lea.vmem %s3, %s290
        $region32: #{tpu_custom_call.1} parent=15 // pred_fallthru
          _
        // Predicated region
        $region33: #{tpu_custom_call.1} parent=15 // pred_check
          %p292 = pneg %p162
        $region34: #{tpu_custom_call.1} parent=15 // pred_check_branch
          %294 = sbr.rel (%p292) target = $region36
        $region35: #{tpu_custom_call.1} parent=15 // pred_region
          %s295 = sand.u32 %s24, 1
          %s296 = scalar_lea.sflag [#allocation12], %s295
          %s297 = sand.u32 %s152, 1
          %s298 = smul.addr %s297, 32
          %s299 = scalar_lea.vmem [#allocation13], %s298
          %s300 = smul.u32 8, %s31
          %s302 = ssub.s32 512, 512
          %303 = vsyncadd %s296, %s302
          %s304 = sadd.s32 %s32, %s300
          %s305 = smul.addr %s304, 64
          %s306 = scalar_lea.hbm %s4, %s305
          %s307 = sshll.u32 %s299, 4
          %s308 = int_to_ptr.vmem [resolvable:$true] %s307
          %313 = dma.hbm_to_vmem [thread:$0]  %s306, 512, %s308, %s296, 64, 64, 4
        $region36: #{tpu_custom_call.1} parent=15 // pred_fallthru
          _
        // Predicated region
        $region37: #{tpu_custom_call.1} parent=15 // pred_check
          %p314 = pneg %p190
        $region38: #{tpu_custom_call.1} parent=15 // pred_check_branch
          %316 = sbr.rel (%p314) target = $region40
        $region39: #{tpu_custom_call.1} parent=15 // pred_region
          %s317 = sand.u32 %s180, 1
          %s318 = scalar_lea.sflag [#allocation15], %s317
          %s319 = sand.u32 %s180, 1
          %s320 = smul.addr %s319, 32
          %s321 = scalar_lea.vmem [#allocation14], %s320
          %s322 = smul.u32 8, %s31
          %s324 = ssub.s32 512, 512
          %325 = vsyncadd %s318, %s324
          %s326 = sadd.s32 %s32, %s322
          %s327 = smul.addr %s326, 64
          %s328 = scalar_lea.hbm %s5, %s327
          %s329 = sshll.u32 %s321, 4
          %s330 = int_to_ptr.vmem [resolvable:$true] %s329
          %335 = dma.hbm_to_vmem [thread:$0]  %s328, 512, %s330, %s318, 64, 64, 4
        $region40: #{tpu_custom_call.1} parent=15 // pred_fallthru
          _
      $region16: #{tpu_custom_call.1} parent=5 // pred_fallthru
        _
      %p336 = scmp.le.s32.totalorder 1, %s24
      %p337 = scmp.lt.s32.totalorder %s24, 3
      %p338 = pnand %p336, %p337
      %p339 = pneg %p338
      // Predicated region
      $region41: #{tpu_custom_call.1} parent=5 // pred_check
        _
      $region42: #{tpu_custom_call.1} parent=5 // pred_check_branch
        %341 = sbr.rel (%p338) target = $region44
      $region43: #{tpu_custom_call.1} parent=5 // pred_region
        %s342 = ssub.s32 %s24, 1
        %s343 = sand.u32 %s75, 1
        %s344 = scalar_lea.sflag [#allocation9], %s343
        %s345 = sand.u32 %s75, 1
        %s346 = smul.addr %s345, 8
        %s347 = scalar_lea.vmem [#allocation8], %s346
        // Predicated region
        $region45: #{tpu_custom_call.1} parent=43 // pred_check
          %p348 = pneg %p88
        $region46: #{tpu_custom_call.1} parent=43 // pred_check_branch
          %350 = sbr.rel (%p348) target = $region48
        $region47: #{tpu_custom_call.1} parent=43 // pred_region
          %351 = dma.done %s344, 128
        $region48: #{tpu_custom_call.1} parent=43 // pred_fallthru
          _
        %s352 = sand.u32 %s29, 1
        %s353 = scalar_lea.sflag [#allocation12], %s352
        %s354 = sand.u32 %s101, 1
        %s355 = smul.addr %s354, 24
        %s356 = scalar_lea.vmem [#allocation11], %s355
        // Predicated region
        $region49: #{tpu_custom_call.1} parent=43 // pred_check
          %p357 = pneg %p114
        $region50: #{tpu_custom_call.1} parent=43 // pred_check_branch
          %359 = sbr.rel (%p357) target = $region52
        $region51: #{tpu_custom_call.1} parent=43 // pred_region
          %360 = dma.done %s353, 384
        $region52: #{tpu_custom_call.1} parent=43 // pred_fallthru
          _
        %s361 = sand.u32 %s29, 1
        %s362 = scalar_lea.sflag [#allocation12], %s361
        %s363 = sand.u32 %s155, 1
        %s364 = smul.addr %s363, 32
        %s365 = scalar_lea.vmem [#allocation13], %s364
        // Predicated region
        $region53: #{tpu_custom_call.1} parent=43 // pred_check
          %p366 = pneg %p168
        $region54: #{tpu_custom_call.1} parent=43 // pred_check_branch
          %368 = sbr.rel (%p366) target = $region56
        $region55: #{tpu_custom_call.1} parent=43 // pred_region
          %369 = dma.done %s362, 512
        $region56: #{tpu_custom_call.1} parent=43 // pred_fallthru
          _
        %s370 = sand.u32 %s183, 1
        %s371 = scalar_lea.sflag [#allocation15], %s370
        %s372 = sand.u32 %s183, 1
        %s373 = smul.addr %s372, 32
        %s374 = scalar_lea.vmem [#allocation14], %s373
        // Predicated region
        $region57: #{tpu_custom_call.1} parent=43 // pred_check
          %p375 = pneg %p196
        $region58: #{tpu_custom_call.1} parent=43 // pred_check_branch
          %377 = sbr.rel (%p375) target = $region60
        $region59: #{tpu_custom_call.1} parent=43 // pred_region
          %378 = dma.done %s371, 512
        $region60: #{tpu_custom_call.1} parent=43 // pred_fallthru
          _
        %p379 = scmp.lt.s32.totalorder %s33, 1
        %s380 = scalar_select %p379, %s33, 1
        %s381 = smul.addr %s380, 8
        %s382 = scalar_lea.vmem %s0, %s381
        %p383 = pneg %p62
        %p384 = pneg %p59
        %s385 = sand.u32 %s75, 1
        %s386 = scalar_lea.sflag [#allocation9], %s385
        %s387 = sand.u32 %s75, 1
        %s388 = smul.addr %s387, 8
        %s389 = scalar_lea.vmem [#allocation8], %s388
        %p390 = pneg %p88
        %p391 = pneg %p85
        %s392 = sand.u32 %s29, 1
        %s393 = scalar_lea.sflag [#allocation12], %s392
        %s394 = sand.u32 %s101, 1
        %s395 = smul.addr %s394, 24
        %s396 = scalar_lea.vmem [#allocation11], %s395
        %p397 = pneg %p114
        %p398 = pneg %p111
        %p399 = scmp.lt.s32.totalorder %s33, 1
        %s400 = scalar_select %p399, %s33, 1
        %s401 = smul.addr %s400, 8
        %s402 = scalar_lea.vmem %s3, %s401
        %p403 = pneg %p140
        %p404 = pneg %p137
        %s405 = sand.u32 %s29, 1
        %s406 = scalar_lea.sflag [#allocation12], %s405
        %s407 = sand.u32 %s155, 1
        %s408 = smul.addr %s407, 32
        %s409 = scalar_lea.vmem [#allocation13], %s408
        %p410 = pneg %p168
        %p411 = pneg %p165
        %s412 = sand.u32 %s183, 1
        %s413 = scalar_lea.sflag [#allocation15], %s412
        %s414 = sand.u32 %s183, 1
        %s415 = smul.addr %s414, 32
        %s416 = scalar_lea.vmem [#allocation14], %s415
        %p417 = pneg %p196
        %p418 = pneg %p193
        %p419 = pneg %p222
        %p420 = pneg %p219
        %s421 = sand.u32 %s209, 1
        %s422 = scalar_lea.sflag [#allocation10], %s421
        %s423 = sand.u32 %s209, 1
        %s424 = smul.addr %s423, 8
        %s425 = scalar_lea.vmem [#allocation16], %s424
        %p426 = scmp.lt.s32.totalorder %s33, 1
        %s427 = scalar_select %p426, %s33, 1
        %s428 = smul.addr %s427, 8
        %s429 = scalar_lea.vmem %s0, %s428
        %p430 = scmp.lt.s32.totalorder %s33, 1
        %s431 = scalar_select %p430, %s33, 1
        %s432 = smul.addr %s431, 8
        %s433 = scalar_lea.vmem %s3, %s432
        %s434 = smul.u32 8, %s33
        %s435 = smul.u32 8, %s33
        %p436 = scmp.eq.s32.totalorder %s34, 0
        // Predicated region
        $region61: #{tpu_custom_call.1} parent=43 // pred_check
          %p437 = pneg %p436
        $region62: #{tpu_custom_call.1} parent=43 // pred_check_branch
          %439 = sbr.rel (%p437) target = $region64
        $region63: #{tpu_custom_call.1} parent=43 // pred_region
          %vm440 = vcmask 7168
          %441 = vst.msk [vmem:[#allocation2] sm:$0xff] %vm440, -inf
          %442 = vst.msk [vmem:[#allocation3] sm:$0xff] %vm440, 0.0
          %443 = vst.msk [vmem:[#allocation4] sm:$0xff] %vm440, 0.0
          %444 = vst.msk [vmem:[#allocation5] sm:$0xff] %vm440, -inf
          %445 = vst.msk [vmem:[#allocation6] sm:$0xff] %vm440, 0.0
          %446 = vst.msk [vmem:[#allocation7] sm:$0xff] %vm440, 0.0
        $region64: #{tpu_custom_call.1} parent=43 // pred_fallthru
          _
        %v447 = vld [vmem:[%s429] sm:$0xff]
        %v448 = vld [vmem:[%s347] sm:$0xff]
        %v449 = vld [vmem:[%s356] sm:$0xff]
        %v450 = vld [vmem:[%s356 + $0x8] sm:$0xff]
        %v451 = vld [vmem:[%s356 + $0x10] sm:$0xff]
        %v452 = vmul.f32 %v449, 14.361567
        %v453 = vand.u32 2147483647, %v450
        %v454 = vmin.f32 %v451, 1.0
        %v455 = vsub.f32 0.0, %v453
        %vm456 = vcmp.lt.f32.partialorder %v454, %v455
        %v457 = vsel %vm456, %v455, %v454
        %v458 = vadd.f32 %v453, %v457
        %v459 = vsub.f32 1.0, %v457
        %v460 = vmul.f32 %v447, 14.361567
        %v461 = vmul.f32 %v448, 14.361567
        %v462 = vadd.f32 %v460, %v452
        %v463 = vsub.f32 %v452, %v461
        %v464 = vmul.f32 %v447, %v458
        %v465 = vmul.f32 %v448, %v459
        %v466 = vld [vmem:[%s374] sm:$0xf]
        %v467 = vld [vmem:[%s374 + $0x4] sm:$0xf]
        %v468 = vld [vmem:[%s374 + $0x8] sm:$0xf]
        %v469 = vld [vmem:[%s374 + $0xc] sm:$0xf]
        %v470 = vld [vmem:[%s374 + $0x10] sm:$0xf]
        %v471 = vld [vmem:[%s374 + $0x14] sm:$0xf]
        %v472 = vld [vmem:[%s374 + $0x18] sm:$0xf]
        %v473 = vld [vmem:[%s374 + $0x1c] sm:$0xf]
        %v474 = vunpack.c.l.bf16 %v466
        %v475 = vunpack.c.l.bf16 %v467
        %v476 = vunpack.c.l.bf16 %v468
        %v477 = vunpack.c.l.bf16 %v469
        %v478 = vunpack.c.l.bf16 %v470
        %v479 = vunpack.c.l.bf16 %v471
        %v480 = vunpack.c.l.bf16 %v472
        %v481 = vunpack.c.l.bf16 %v473
        %v483 = vcombine.high %v462, %v462
        %v485 = vunpack.c.l.s4 1966171168
        %v486 = vunpack.c.0.s8 %v485
        %v487 = vlaneseq
        %v488 = vshrl.u32 %v487, 7
        %v489 = vsub.s32 %v486, %v488
        %v490 = vrot.slane %v462, %v489
        %v492 = vunpack.c.l.s4 1966171168
        %v493 = vunpack.c.0.s8 %v492
        %v494 = vlaneseq
        %v495 = vshrl.u32 %v494, 7
        %v496 = vsub.s32 %v493, %v495
        %v497 = vrot.slane %v483, %v496
        %v498 = vcombine.high %v490, %v490
        %v499 = vcombine.high %v497, %v497
        %v501 = vunpack.c.l.s4 1966171168
        %v502 = vunpack.c.0.s8 %v501
        %v503 = vlaneseq
        %v504 = vshrl.u32 %v503, 7
        %v505 = vsub.s32 %v502, %v504
        %v506 = vrot.slane %v490, %v505
        %v508 = vunpack.c.l.s4 1966171168
        %v509 = vunpack.c.0.s8 %v508
        %v510 = vlaneseq
        %v511 = vshrl.u32 %v510, 7
        %v512 = vsub.s32 %v509, %v511
        %v513 = vrot.slane %v497, %v512
        %v515 = vunpack.c.l.s4 1966171168
        %v516 = vunpack.c.0.s8 %v515
        %v517 = vlaneseq
        %v518 = vshrl.u32 %v517, 7
        %v519 = vsub.s32 %v516, %v518
        %v520 = vrot.slane %v498, %v519
        %v522 = vunpack.c.l.s4 1966171168
        %v523 = vunpack.c.0.s8 %v522
        %v524 = vlaneseq
        %v525 = vshrl.u32 %v524, 7
        %v526 = vsub.s32 %v523, %v525
        %v527 = vrot.slane %v499, %v526
        %v528 = vcombine.high %v506, %v506
        %v529 = vcombine.high %v513, %v513
        %v530 = vcombine.high %v520, %v520
        %v531 = vcombine.high %v527, %v527
        %v532 = vmul.f32 %v474, 14.361567
        %v533 = vmul.f32 %v475, 14.361567
        %v534 = vmul.f32 %v476, 14.361567
        %v535 = vmul.f32 %v477, 14.361567
        %v536 = vmul.f32 %v478, 14.361567
        %v537 = vmul.f32 %v479, 14.361567
        %v538 = vmul.f32 %v480, 14.361567
        %v539 = vmul.f32 %v481, 14.361567
        %v540 = vlaneseq
        %v541 = vshrl.u32 %v540, 7
        %v542 = vsub.s32 0, %v541
        %v543 = vrot.slane %v506, %v542
        %v544 = vlaneseq
        %v545 = vshrl.u32 %v544, 7
        %v546 = vsub.s32 0, %v545
        %v547 = vrot.slane %v520, %v546
        %v548 = vlaneseq
        %v549 = vshrl.u32 %v548, 7
        %v550 = vsub.s32 0, %v549
        %v551 = vrot.slane %v528, %v550
        %v552 = vlaneseq
        %v553 = vshrl.u32 %v552, 7
        %v554 = vsub.s32 0, %v553
        %v555 = vrot.slane %v530, %v554
        %v556 = vlaneseq
        %v557 = vshrl.u32 %v556, 7
        %v558 = vsub.s32 0, %v557
        %v559 = vrot.slane %v513, %v558
        %v560 = vlaneseq
        %v561 = vshrl.u32 %v560, 7
        %v562 = vsub.s32 0, %v561
        %v563 = vrot.slane %v527, %v562
        %v564 = vlaneseq
        %v565 = vshrl.u32 %v564, 7
        %v566 = vsub.s32 0, %v565
        %v567 = vrot.slane %v529, %v566
        %v568 = vlaneseq
        %v569 = vshrl.u32 %v568, 7
        %v570 = vsub.s32 0, %v569
        %v571 = vrot.slane %v531, %v570
        %v580 = vsub.f32 %v543, %v532
        %v581 = vsub.f32 %v547, %v533
        %v582 = vsub.f32 %v551, %v534
        %v583 = vsub.f32 %v555, %v535
        %v584 = vsub.f32 %v559, %v536
        %v585 = vsub.f32 %v563, %v537
        %v586 = vsub.f32 %v567, %v538
        %v587 = vsub.f32 %v571, %v539
        %v588 = vand.u32 2147483647, %v580
        %vm589 = vcmp.le.f32.partialorder %v588, 0.7853982
        %vm590 = vcmp.lt.s32.totalorder %v580, 0
        %v591 = vand.u32 %v580, 2139095040
        %v592 = vshrl.u32 %v591, 23
        %v593 = vsub.s32 %v592, 127
        %v594 = vand.u32 2147483647, %v580
        %v595 = vand.u32 %v594, 8388607
        %v596 = vor.u32 %v595, 8388608
        %v597 = vsub.s32 0, %v596
        %v598 = vadd.s32 %v593, 1
        %vm599 = vcmp.gt.s32.totalorder %v598, 0
        %v600 = vsel %vm599, %v598, 0
        %v601 = vshrl.u32 %v600, 5
        %v602 = vand.u32 %v600, 31
        %v603 = vsub.s32 32, %v602
        %v604 = vshrl.u32 683565275, %v603
        %v605 = vshll.u32 683565275, %v602
        %v606 = vshrl.u32 2475754826, %v603
        %v607 = vor.u32 %v605, %v606
        %v608 = vshll.u32 2475754826, %v602
        %v609 = vshrl.u32 2131351028, %v603
        %v610 = vor.u32 %v608, %v609
        %v611 = vshll.u32 2131351028, %v602
        %v612 = vshrl.u32 2102212464, %v603
        %v613 = vor.u32 %v611, %v612
        %v614 = vshll.u32 2102212464, %v602
        %v615 = vshrl.u32 920167782, %v603
        %v616 = vor.u32 %v614, %v615
        %v617 = vshll.u32 920167782, %v602
        %v618 = vshrl.u32 1326507024, %v603
        %v619 = vor.u32 %v617, %v618
        %vm620 = vcmp.lt.s32.totalorder %v601, 1
        %vm621 = vcmp.lt.s32.totalorder %v601, 2
        %vm622 = vcmp.lt.s32.totalorder %v601, 3
        %vm623 = vcmp.lt.s32.totalorder %v601, 4
        %v624 = vsel %vm620, %v604, %v607
        %v625 = vsel %vm623, %v613, 2102212464
        %v626 = vsel %vm622, %v610, %v625
        %v627 = vsel %vm621, %v624, %v626
        %v628 = vsel %vm620, %v607, %v610
        %v629 = vsel %vm623, %v616, 920167782
        %v630 = vsel %vm622, %v613, %v629
        %v631 = vsel %vm621, %v628, %v630
        %v632 = vsel %vm620, %v610, %v613
        %v633 = vsel %vm623, %v619, 1326507024
        %v634 = vsel %vm622, %v616, %v633
        %v635 = vsel %vm621, %v632, %v634
        %v636 = vshll.u32 %v596, 8
        %v637 = vmul.u32.u64.compose %v636, %v635
        %v638 = vextract.low.u32 %v637
        %v639 = vextract.high.u32 %v637
        %v640 = vmul.u32.u64.compose %v636, %v631
        %v641 = vextract.low.u32 %v640
        %v642 = vextract.high.u32 %v640
        %v643 = vmul.u32 %v636, %v627
        %v644 = vadd.s32 %v639, %v641
        %vm645 = vc.u32 %v639, %v641
        %v646 = vadd.s32 %v642, 1
        %v647 = vsel %vm645, %v646, %v642
        %v648 = vadd.s32 %v643, %v647
        %v649 = vadd.s32 %v648, 536870912
        %v650 = vshrl.u32 %v649, 30
        %v651 = vshll.u32 %v650, 30
        %v652 = vsub.s32 %v648, %v651
        %vm653 = vcmp.lt.s32.totalorder %v652, 0
        %v654 = vsub.s32 0, %v652
        %v655 = vsel %vm653, %v654, %v652
        %v656 = vclz %v655
        %v657 = vsub.s32 %v656, 2
        %vm658 = vcmp.gt.s32.totalorder 0, %v657
        %v659 = vsel %vm658, 0, %v657
        %v660 = vsub.s32 32, %v659
        %v661 = vshll.u32 %v652, %v659
        %v662 = vshrl.u32 %v644, %v660
        %v663 = vor.u32 %v661, %v662
        %v664 = vsub.s32 4294967266, %v659
        %v665 = vadd.s32 %v664, 127
        %v666 = vshll.u32 %v665, 23
        %v667 = vor.u32 4788187, %v666
        %v668 = vand.u32 2147483647, %v667
        %v670 = vcvt.s32.f32 %v663
        %v671 = vmul.f32 %v670, %v668
        %v672 = vxor.u32 %v671, 2147483648
        %v673 = vsel %vm590, %v672, %v671
        %v674 = vsub.s32 4, %v650
        %v675 = vsel %vm590, %v674, %v650
        %v676 = vsel %vm589, %v580, %v673
        %v677 = vsel %vm589, 0, %v675
        %v678 = vcosq.f32.pop %v676
        %v679 = vsinq.f32.pop %v676
        %vm680 = vweird.f32 %v580
        %v681 = vadd.s32 %v677, 3
        %v682 = vand.u32 %v681, 3
        %vm683 = vcmp.lt.s32.totalorder %v682, 2
        %vm684 = vcmp.eq.s32.totalorder %v682, 0
        %v685 = vxor.u32 %v679, 2147483648
        %v686 = vsel %vm684, %v678, %v685
        %vm687 = vcmp.eq.s32.totalorder %v682, 2
        %v688 = vxor.u32 %v678, 2147483648
        %v689 = vsel %vm687, %v688, %v679
        %v690 = vsel %vm683, %v686, %v689
        %v691 = vsel %vm680, nan, %v690
        %v692 = vand.u32 2147483647, %v581
        %vm693 = vcmp.le.f32.partialorder %v692, 0.7853982
        %vm694 = vcmp.lt.s32.totalorder %v581, 0
        %v695 = vand.u32 %v581, 2139095040
        %v696 = vshrl.u32 %v695, 23
        %v697 = vsub.s32 %v696, 127
        %v698 = vand.u32 2147483647, %v581
        %v699 = vand.u32 %v698, 8388607
        %v700 = vor.u32 %v699, 8388608
        %v701 = vsub.s32 0, %v700
        %v702 = vadd.s32 %v697, 1
        %vm703 = vcmp.gt.s32.totalorder %v702, 0
        %v704 = vsel %vm703, %v702, 0
        %v705 = vshrl.u32 %v704, 5
        %v706 = vand.u32 %v704, 31
        %v707 = vsub.s32 32, %v706
        %v708 = vshrl.u32 683565275, %v707
        %v709 = vshll.u32 683565275, %v706
        %v710 = vshrl.u32 2475754826, %v707
        %v711 = vor.u32 %v709, %v710
        %v712 = vshll.u32 2475754826, %v706
        %v713 = vshrl.u32 2131351028, %v707
        %v714 = vor.u32 %v712, %v713
        %v715 = vshll.u32 2131351028, %v706
        %v716 = vshrl.u32 2102212464, %v707
        %v717 = vor.u32 %v715, %v716
        %v718 = vshll.u32 2102212464, %v706
        %v719 = vshrl.u32 920167782, %v707
        %v720 = vor.u32 %v718, %v719
        %v721 = vshll.u32 920167782, %v706
        %v722 = vshrl.u32 1326507024, %v707
        %v723 = vor.u32 %v721, %v722
        %vm724 = vcmp.lt.s32.totalorder %v705, 1
        %vm725 = vcmp.lt.s32.totalorder %v705, 2
        %vm726 = vcmp.lt.s32.totalorder %v705, 3
        %vm727 = vcmp.lt.s32.totalorder %v705, 4
        %v728 = vsel %vm724, %v708, %v711
        %v729 = vsel %vm727, %v717, 2102212464
        %v730 = vsel %vm726, %v714, %v729
        %v731 = vsel %vm725, %v728, %v730
        %v732 = vsel %vm724, %v711, %v714
        %v733 = vsel %vm727, %v720, 920167782
        %v734 = vsel %vm726, %v717, %v733
        %v735 = vsel %vm725, %v732, %v734
        %v736 = vsel %vm724, %v714, %v717
        %v737 = vsel %vm727, %v723, 1326507024
        %v738 = vsel %vm726, %v720, %v737
        %v739 = vsel %vm725, %v736, %v738
        %v740 = vshll.u32 %v700, 8
        %v741 = vmul.u32.u64.compose %v740, %v739
        %v742 = vextract.low.u32 %v741
        %v743 = vextract.high.u32 %v741
        %v744 = vmul.u32.u64.compose %v740, %v735
        %v745 = vextract.low.u32 %v744
        %v746 = vextract.high.u32 %v744
        %v747 = vmul.u32 %v740, %v731
        %v748 = vadd.s32 %v743, %v745
        %vm749 = vc.u32 %v743, %v745
        %v750 = vadd.s32 %v746, 1
        %v751 = vsel %vm749, %v750, %v746
        %v752 = vadd.s32 %v747, %v751
        %v753 = vadd.s32 %v752, 536870912
        %v754 = vshrl.u32 %v753, 30
        %v755 = vshll.u32 %v754, 30
        %v756 = vsub.s32 %v752, %v755
        %vm757 = vcmp.lt.s32.totalorder %v756, 0
        %v758 = vsub.s32 0, %v756
        %v759 = vsel %vm757, %v758, %v756
        %v760 = vclz %v759
        %v761 = vsub.s32 %v760, 2
        %vm762 = vcmp.gt.s32.totalorder 0, %v761
        %v763 = vsel %vm762, 0, %v761
        %v764 = vsub.s32 32, %v763
        %v765 = vshll.u32 %v756, %v763
        %v766 = vshrl.u32 %v748, %v764
        %v767 = vor.u32 %v765, %v766
        %v768 = vsub.s32 4294967266, %v763
        %v769 = vadd.s32 %v768, 127
        %v770 = vshll.u32 %v769, 23
        %v771 = vor.u32 4788187, %v770
        %v772 = vand.u32 2147483647, %v771
        %v774 = vcvt.s32.f32 %v767
        %v775 = vmul.f32 %v774, %v772
        %v776 = vxor.u32 %v775, 2147483648
        %v777 = vsel %vm694, %v776, %v775
        %v778 = vsub.s32 4, %v754
        %v779 = vsel %vm694, %v778, %v754
        %v780 = vsel %vm693, %v581, %v777
        %v781 = vsel %vm693, 0, %v779
        %v782 = vcosq.f32.pop %v780
        %v783 = vsinq.f32.pop %v780
        %vm784 = vweird.f32 %v581
        %v785 = vadd.s32 %v781, 3
        %v786 = vand.u32 %v785, 3
        %vm787 = vcmp.lt.s32.totalorder %v786, 2
        %vm788 = vcmp.eq.s32.totalorder %v786, 0
        %v789 = vxor.u32 %v783, 2147483648
        %v790 = vsel %vm788, %v782, %v789
        %vm791 = vcmp.eq.s32.totalorder %v786, 2
        %v792 = vxor.u32 %v782, 2147483648
        %v793 = vsel %vm791, %v792, %v783
        %v794 = vsel %vm787, %v790, %v793
        %v795 = vsel %vm784, nan, %v794
        %v796 = vand.u32 2147483647, %v582
        %vm797 = vcmp.le.f32.partialorder %v796, 0.7853982
        %vm798 = vcmp.lt.s32.totalorder %v582, 0
        %v799 = vand.u32 %v582, 2139095040
        %v800 = vshrl.u32 %v799, 23
        %v801 = vsub.s32 %v800, 127
        %v802 = vand.u32 2147483647, %v582
        %v803 = vand.u32 %v802, 8388607
        %v804 = vor.u32 %v803, 8388608
        %v805 = vsub.s32 0, %v804
        %v806 = vadd.s32 %v801, 1
        %vm807 = vcmp.gt.s32.totalorder %v806, 0
        %v808 = vsel %vm807, %v806, 0
        %v809 = vshrl.u32 %v808, 5
        %v810 = vand.u32 %v808, 31
        %v811 = vsub.s32 32, %v810
        %v812 = vshrl.u32 683565275, %v811
        %v813 = vshll.u32 683565275, %v810
        %v814 = vshrl.u32 2475754826, %v811
        %v815 = vor.u32 %v813, %v814
        %v816 = vshll.u32 2475754826, %v810
        %v817 = vshrl.u32 2131351028, %v811
        %v818 = vor.u32 %v816, %v817
        %v819 = vshll.u32 2131351028, %v810
        %v820 = vshrl.u32 2102212464, %v811
        %v821 = vor.u32 %v819, %v820
        %v822 = vshll.u32 2102212464, %v810
        %v823 = vshrl.u32 920167782, %v811
        %v824 = vor.u32 %v822, %v823
        %v825 = vshll.u32 920167782, %v810
        %v826 = vshrl.u32 1326507024, %v811
        %v827 = vor.u32 %v825, %v826
        %vm828 = vcmp.lt.s32.totalorder %v809, 1
        %vm829 = vcmp.lt.s32.totalorder %v809, 2
        %vm830 = vcmp.lt.s32.totalorder %v809, 3
        %vm831 = vcmp.lt.s32.totalorder %v809, 4
        %v832 = vsel %vm828, %v812, %v815
        %v833 = vsel %vm831, %v821, 2102212464
        %v834 = vsel %vm830, %v818, %v833
        %v835 = vsel %vm829, %v832, %v834
        %v836 = vsel %vm828, %v815, %v818
        %v837 = vsel %vm831, %v824, 920167782
        %v838 = vsel %vm830, %v821, %v837
        %v839 = vsel %vm829, %v836, %v838
        %v840 = vsel %vm828, %v818, %v821
        %v841 = vsel %vm831, %v827, 1326507024
        %v842 = vsel %vm830, %v824, %v841
        %v843 = vsel %vm829, %v840, %v842
        %v844 = vshll.u32 %v804, 8
        %v845 = vmul.u32.u64.compose %v844, %v843
        %v846 = vextract.low.u32 %v845
        %v847 = vextract.high.u32 %v845
        %v848 = vmul.u32.u64.compose %v844, %v839
        %v849 = vextract.low.u32 %v848
        %v850 = vextract.high.u32 %v848
        %v851 = vmul.u32 %v844, %v835
        %v852 = vadd.s32 %v847, %v849
        %vm853 = vc.u32 %v847, %v849
        %v854 = vadd.s32 %v850, 1
        %v855 = vsel %vm853, %v854, %v850
        %v856 = vadd.s32 %v851, %v855
        %v857 = vadd.s32 %v856, 536870912
        %v858 = vshrl.u32 %v857, 30
        %v859 = vshll.u32 %v858, 30
        %v860 = vsub.s32 %v856, %v859
        %vm861 = vcmp.lt.s32.totalorder %v860, 0
        %v862 = vsub.s32 0, %v860
        %v863 = vsel %vm861, %v862, %v860
        %v864 = vclz %v863
        %v865 = vsub.s32 %v864, 2
        %vm866 = vcmp.gt.s32.totalorder 0, %v865
        %v867 = vsel %vm866, 0, %v865
        %v868 = vsub.s32 32, %v867
        %v869 = vshll.u32 %v860, %v867
        %v870 = vshrl.u32 %v852, %v868
        %v871 = vor.u32 %v869, %v870
        %v872 = vsub.s32 4294967266, %v867
        %v873 = vadd.s32 %v872, 127
        %v874 = vshll.u32 %v873, 23
        %v875 = vor.u32 4788187, %v874
        %v876 = vand.u32 2147483647, %v875
        %v878 = vcvt.s32.f32 %v871
        %v879 = vmul.f32 %v878, %v876
        %v880 = vxor.u32 %v879, 2147483648
        %v881 = vsel %vm798, %v880, %v879
        %v882 = vsub.s32 4, %v858
        %v883 = vsel %vm798, %v882, %v858
        %v884 = vsel %vm797, %v582, %v881
        %v885 = vsel %vm797, 0, %v883
        %v886 = vcosq.f32.pop %v884
        %v887 = vsinq.f32.pop %v884
        %vm888 = vweird.f32 %v582
        %v889 = vadd.s32 %v885, 3
        %v890 = vand.u32 %v889, 3
        %vm891 = vcmp.lt.s32.totalorder %v890, 2
        %vm892 = vcmp.eq.s32.totalorder %v890, 0
        %v893 = vxor.u32 %v887, 2147483648
        %v894 = vsel %vm892, %v886, %v893
        %vm895 = vcmp.eq.s32.totalorder %v890, 2
        %v896 = vxor.u32 %v886, 2147483648
        %v897 = vsel %vm895, %v896, %v887
        %v898 = vsel %vm891, %v894, %v897
        %v899 = vsel %vm888, nan, %v898
        %v900 = vand.u32 2147483647, %v583
        %vm901 = vcmp.le.f32.partialorder %v900, 0.7853982
        %vm902 = vcmp.lt.s32.totalorder %v583, 0
        %v903 = vand.u32 %v583, 2139095040
        %v904 = vshrl.u32 %v903, 23
        %v905 = vsub.s32 %v904, 127
        %v906 = vand.u32 2147483647, %v583
        %v907 = vand.u32 %v906, 8388607
        %v908 = vor.u32 %v907, 8388608
        %v909 = vsub.s32 0, %v908
        %v910 = vadd.s32 %v905, 1
        %vm911 = vcmp.gt.s32.totalorder %v910, 0
        %v912 = vsel %vm911, %v910, 0
        %v913 = vshrl.u32 %v912, 5
        %v914 = vand.u32 %v912, 31
        %v915 = vsub.s32 32, %v914
        %v916 = vshrl.u32 683565275, %v915
        %v917 = vshll.u32 683565275, %v914
        %v918 = vshrl.u32 2475754826, %v915
        %v919 = vor.u32 %v917, %v918
        %v920 = vshll.u32 2475754826, %v914
        %v921 = vshrl.u32 2131351028, %v915
        %v922 = vor.u32 %v920, %v921
        %v923 = vshll.u32 2131351028, %v914
        %v924 = vshrl.u32 2102212464, %v915
        %v925 = vor.u32 %v923, %v924
        %v926 = vshll.u32 2102212464, %v914
        %v927 = vshrl.u32 920167782, %v915
        %v928 = vor.u32 %v926, %v927
        %v929 = vshll.u32 920167782, %v914
        %v930 = vshrl.u32 1326507024, %v915
        %v931 = vor.u32 %v929, %v930
        %vm932 = vcmp.lt.s32.totalorder %v913, 1
        %vm933 = vcmp.lt.s32.totalorder %v913, 2
        %vm934 = vcmp.lt.s32.totalorder %v913, 3
        %vm935 = vcmp.lt.s32.totalorder %v913, 4
        %v936 = vsel %vm932, %v916, %v919
        %v937 = vsel %vm935, %v925, 2102212464
        %v938 = vsel %vm934, %v922, %v937
        %v939 = vsel %vm933, %v936, %v938
        %v940 = vsel %vm932, %v919, %v922
        %v941 = vsel %vm935, %v928, 920167782
        %v942 = vsel %vm934, %v925, %v941
        %v943 = vsel %vm933, %v940, %v942
        %v944 = vsel %vm932, %v922, %v925
        %v945 = vsel %vm935, %v931, 1326507024
        %v946 = vsel %vm934, %v928, %v945
        %v947 = vsel %vm933, %v944, %v946
        %v948 = vshll.u32 %v908, 8
        %v949 = vmul.u32.u64.compose %v948, %v947
        %v950 = vextract.low.u32 %v949
        %v951 = vextract.high.u32 %v949
        %v952 = vmul.u32.u64.compose %v948, %v943
        %v953 = vextract.low.u32 %v952
        %v954 = vextract.high.u32 %v952
        %v955 = vmul.u32 %v948, %v939
        %v956 = vadd.s32 %v951, %v953
        %vm957 = vc.u32 %v951, %v953
        %v958 = vadd.s32 %v954, 1
        %v959 = vsel %vm957, %v958, %v954
        %v960 = vadd.s32 %v955, %v959
        %v961 = vadd.s32 %v960, 536870912
        %v962 = vshrl.u32 %v961, 30
        %v963 = vshll.u32 %v962, 30
        %v964 = vsub.s32 %v960, %v963
        %vm965 = vcmp.lt.s32.totalorder %v964, 0
        %v966 = vsub.s32 0, %v964
        %v967 = vsel %vm965, %v966, %v964
        %v968 = vclz %v967
        %v969 = vsub.s32 %v968, 2
        %vm970 = vcmp.gt.s32.totalorder 0, %v969
        %v971 = vsel %vm970, 0, %v969
        %v972 = vsub.s32 32, %v971
        %v973 = vshll.u32 %v964, %v971
        %v974 = vshrl.u32 %v956, %v972
        %v975 = vor.u32 %v973, %v974
        %v976 = vsub.s32 4294967266, %v971
        %v977 = vadd.s32 %v976, 127
        %v978 = vshll.u32 %v977, 23
        %v979 = vor.u32 4788187, %v978
        %v980 = vand.u32 2147483647, %v979
        %v982 = vcvt.s32.f32 %v975
        %v983 = vmul.f32 %v982, %v980
        %v984 = vxor.u32 %v983, 2147483648
        %v985 = vsel %vm902, %v984, %v983
        %v986 = vsub.s32 4, %v962
        %v987 = vsel %vm902, %v986, %v962
        %v988 = vsel %vm901, %v583, %v985
        %v989 = vsel %vm901, 0, %v987
        %v990 = vcosq.f32.pop %v988
        %v991 = vsinq.f32.pop %v988
        %vm992 = vweird.f32 %v583
        %v993 = vadd.s32 %v989, 3
        %v994 = vand.u32 %v993, 3
        %vm995 = vcmp.lt.s32.totalorder %v994, 2
        %vm996 = vcmp.eq.s32.totalorder %v994, 0
        %v997 = vxor.u32 %v991, 2147483648
        %v998 = vsel %vm996, %v990, %v997
        %vm999 = vcmp.eq.s32.totalorder %v994, 2
        %v1000 = vxor.u32 %v990, 2147483648
        %v1001 = vsel %vm999, %v1000, %v991
        %v1002 = vsel %vm995, %v998, %v1001
        %v1003 = vsel %vm992, nan, %v1002
        %v1004 = vand.u32 2147483647, %v584
        %vm1005 = vcmp.le.f32.partialorder %v1004, 0.7853982
        %vm1006 = vcmp.lt.s32.totalorder %v584, 0
        %v1007 = vand.u32 %v584, 2139095040
        %v1008 = vshrl.u32 %v1007, 23
        %v1009 = vsub.s32 %v1008, 127
        %v1010 = vand.u32 2147483647, %v584
        %v1011 = vand.u32 %v1010, 8388607
        %v1012 = vor.u32 %v1011, 8388608
        %v1013 = vsub.s32 0, %v1012
        %v1014 = vadd.s32 %v1009, 1
        %vm1015 = vcmp.gt.s32.totalorder %v1014, 0
        %v1016 = vsel %vm1015, %v1014, 0
        %v1017 = vshrl.u32 %v1016, 5
        %v1018 = vand.u32 %v1016, 31
        %v1019 = vsub.s32 32, %v1018
        %v1020 = vshrl.u32 683565275, %v1019
        %v1021 = vshll.u32 683565275, %v1018
        %v1022 = vshrl.u32 2475754826, %v1019
        %v1023 = vor.u32 %v1021, %v1022
        %v1024 = vshll.u32 2475754826, %v1018
        %v1025 = vshrl.u32 2131351028, %v1019
        %v1026 = vor.u32 %v1024, %v1025
        %v1027 = vshll.u32 2131351028, %v1018
        %v1028 = vshrl.u32 2102212464, %v1019
        %v1029 = vor.u32 %v1027, %v1028
        %v1030 = vshll.u32 2102212464, %v1018
        %v1031 = vshrl.u32 920167782, %v1019
        %v1032 = vor.u32 %v1030, %v1031
        %v1033 = vshll.u32 920167782, %v1018
        %v1034 = vshrl.u32 1326507024, %v1019
        %v1035 = vor.u32 %v1033, %v1034
        %vm1036 = vcmp.lt.s32.totalorder %v1017, 1
        %vm1037 = vcmp.lt.s32.totalorder %v1017, 2
        %vm1038 = vcmp.lt.s32.totalorder %v1017, 3
        %vm1039 = vcmp.lt.s32.totalorder %v1017, 4
        %v1040 = vsel %vm1036, %v1020, %v1023
        %v1041 = vsel %vm1039, %v1029, 2102212464
        %v1042 = vsel %vm1038, %v1026, %v1041
        %v1043 = vsel %vm1037, %v1040, %v1042
        %v1044 = vsel %vm1036, %v1023, %v1026
        %v1045 = vsel %vm1039, %v1032, 920167782
        %v1046 = vsel %vm1038, %v1029, %v1045
        %v1047 = vsel %vm1037, %v1044, %v1046
        %v1048 = vsel %vm1036, %v1026, %v1029
        %v1049 = vsel %vm1039, %v1035, 1326507024
        %v1050 = vsel %vm1038, %v1032, %v1049
        %v1051 = vsel %vm1037, %v1048, %v1050
        %v1052 = vshll.u32 %v1012, 8
        %v1053 = vmul.u32.u64.compose %v1052, %v1051
        %v1054 = vextract.low.u32 %v1053
        %v1055 = vextract.high.u32 %v1053
        %v1056 = vmul.u32.u64.compose %v1052, %v1047
        %v1057 = vextract.low.u32 %v1056
        %v1058 = vextract.high.u32 %v1056
        %v1059 = vmul.u32 %v1052, %v1043
        %v1060 = vadd.s32 %v1055, %v1057
        %vm1061 = vc.u32 %v1055, %v1057
        %v1062 = vadd.s32 %v1058, 1
        %v1063 = vsel %vm1061, %v1062, %v1058
        %v1064 = vadd.s32 %v1059, %v1063
        %v1065 = vadd.s32 %v1064, 536870912
        %v1066 = vshrl.u32 %v1065, 30
        %v1067 = vshll.u32 %v1066, 30
        %v1068 = vsub.s32 %v1064, %v1067
        %vm1069 = vcmp.lt.s32.totalorder %v1068, 0
        %v1070 = vsub.s32 0, %v1068
        %v1071 = vsel %vm1069, %v1070, %v1068
        %v1072 = vclz %v1071
        %v1073 = vsub.s32 %v1072, 2
        %vm1074 = vcmp.gt.s32.totalorder 0, %v1073
        %v1075 = vsel %vm1074, 0, %v1073
        %v1076 = vsub.s32 32, %v1075
        %v1077 = vshll.u32 %v1068, %v1075
        %v1078 = vshrl.u32 %v1060, %v1076
        %v1079 = vor.u32 %v1077, %v1078
        %v1080 = vsub.s32 4294967266, %v1075
        %v1081 = vadd.s32 %v1080, 127
        %v1082 = vshll.u32 %v1081, 23
        %v1083 = vor.u32 4788187, %v1082
        %v1084 = vand.u32 2147483647, %v1083
        %v1086 = vcvt.s32.f32 %v1079
        %v1087 = vmul.f32 %v1086, %v1084
        %v1088 = vxor.u32 %v1087, 2147483648
        %v1089 = vsel %vm1006, %v1088, %v1087
        %v1090 = vsub.s32 4, %v1066
        %v1091 = vsel %vm1006, %v1090, %v1066
        %v1092 = vsel %vm1005, %v584, %v1089
        %v1093 = vsel %vm1005, 0, %v1091
        %v1094 = vcosq.f32.pop %v1092
        %v1095 = vsinq.f32.pop %v1092
        %vm1096 = vweird.f32 %v584
        %v1097 = vadd.s32 %v1093, 3
        %v1098 = vand.u32 %v1097, 3
        %vm1099 = vcmp.lt.s32.totalorder %v1098, 2
        %vm1100 = vcmp.eq.s32.totalorder %v1098, 0
        %v1101 = vxor.u32 %v1095, 2147483648
        %v1102 = vsel %vm1100, %v1094, %v1101
        %vm1103 = vcmp.eq.s32.totalorder %v1098, 2
        %v1104 = vxor.u32 %v1094, 2147483648
        %v1105 = vsel %vm1103, %v1104, %v1095
        %v1106 = vsel %vm1099, %v1102, %v1105
        %v1107 = vsel %vm1096, nan, %v1106
        %v1108 = vand.u32 2147483647, %v585
        %vm1109 = vcmp.le.f32.partialorder %v1108, 0.7853982
        %vm1110 = vcmp.lt.s32.totalorder %v585, 0
        %v1111 = vand.u32 %v585, 2139095040
        %v1112 = vshrl.u32 %v1111, 23
        %v1113 = vsub.s32 %v1112, 127
        %v1114 = vand.u32 2147483647, %v585
        %v1115 = vand.u32 %v1114, 8388607
        %v1116 = vor.u32 %v1115, 8388608
        %v1117 = vsub.s32 0, %v1116
        %v1118 = vadd.s32 %v1113, 1
        %vm1119 = vcmp.gt.s32.totalorder %v1118, 0
        %v1120 = vsel %vm1119, %v1118, 0
        %v1121 = vshrl.u32 %v1120, 5
        %v1122 = vand.u32 %v1120, 31
        %v1123 = vsub.s32 32, %v1122
        %v1124 = vshrl.u32 683565275, %v1123
        %v1125 = vshll.u32 683565275, %v1122
        %v1126 = vshrl.u32 2475754826, %v1123
        %v1127 = vor.u32 %v1125, %v1126
        %v1128 = vshll.u32 2475754826, %v1122
        %v1129 = vshrl.u32 2131351028, %v1123
        %v1130 = vor.u32 %v1128, %v1129
        %v1131 = vshll.u32 2131351028, %v1122
        %v1132 = vshrl.u32 2102212464, %v1123
        %v1133 = vor.u32 %v1131, %v1132
        %v1134 = vshll.u32 2102212464, %v1122
        %v1135 = vshrl.u32 920167782, %v1123
        %v1136 = vor.u32 %v1134, %v1135
        %v1137 = vshll.u32 920167782, %v1122
        %v1138 = vshrl.u32 1326507024, %v1123
        %v1139 = vor.u32 %v1137, %v1138
        %vm1140 = vcmp.lt.s32.totalorder %v1121, 1
        %vm1141 = vcmp.lt.s32.totalorder %v1121, 2
        %vm1142 = vcmp.lt.s32.totalorder %v1121, 3
        %vm1143 = vcmp.lt.s32.totalorder %v1121, 4
        %v1144 = vsel %vm1140, %v1124, %v1127
        %v1145 = vsel %vm1143, %v1133, 2102212464
        %v1146 = vsel %vm1142, %v1130, %v1145
        %v1147 = vsel %vm1141, %v1144, %v1146
        %v1148 = vsel %vm1140, %v1127, %v1130
        %v1149 = vsel %vm1143, %v1136, 920167782
        %v1150 = vsel %vm1142, %v1133, %v1149
        %v1151 = vsel %vm1141, %v1148, %v1150
        %v1152 = vsel %vm1140, %v1130, %v1133
        %v1153 = vsel %vm1143, %v1139, 1326507024
        %v1154 = vsel %vm1142, %v1136, %v1153
        %v1155 = vsel %vm1141, %v1152, %v1154
        %v1156 = vshll.u32 %v1116, 8
        %v1157 = vmul.u32.u64.compose %v1156, %v1155
        %v1158 = vextract.low.u32 %v1157
        %v1159 = vextract.high.u32 %v1157
        %v1160 = vmul.u32.u64.compose %v1156, %v1151
        %v1161 = vextract.low.u32 %v1160
        %v1162 = vextract.high.u32 %v1160
        %v1163 = vmul.u32 %v1156, %v1147
        %v1164 = vadd.s32 %v1159, %v1161
        %vm1165 = vc.u32 %v1159, %v1161
        %v1166 = vadd.s32 %v1162, 1
        %v1167 = vsel %vm1165, %v1166, %v1162
        %v1168 = vadd.s32 %v1163, %v1167
        %v1169 = vadd.s32 %v1168, 536870912
        %v1170 = vshrl.u32 %v1169, 30
        %v1171 = vshll.u32 %v1170, 30
        %v1172 = vsub.s32 %v1168, %v1171
        %vm1173 = vcmp.lt.s32.totalorder %v1172, 0
        %v1174 = vsub.s32 0, %v1172
        %v1175 = vsel %vm1173, %v1174, %v1172
        %v1176 = vclz %v1175
        %v1177 = vsub.s32 %v1176, 2
        %vm1178 = vcmp.gt.s32.totalorder 0, %v1177
        %v1179 = vsel %vm1178, 0, %v1177
        %v1180 = vsub.s32 32, %v1179
        %v1181 = vshll.u32 %v1172, %v1179
        %v1182 = vshrl.u32 %v1164, %v1180
        %v1183 = vor.u32 %v1181, %v1182
        %v1184 = vsub.s32 4294967266, %v1179
        %v1185 = vadd.s32 %v1184, 127
        %v1186 = vshll.u32 %v1185, 23
        %v1187 = vor.u32 4788187, %v1186
        %v1188 = vand.u32 2147483647, %v1187
        %v1190 = vcvt.s32.f32 %v1183
        %v1191 = vmul.f32 %v1190, %v1188
        %v1192 = vxor.u32 %v1191, 2147483648
        %v1193 = vsel %vm1110, %v1192, %v1191
        %v1194 = vsub.s32 4, %v1170
        %v1195 = vsel %vm1110, %v1194, %v1170
        %v1196 = vsel %vm1109, %v585, %v1193
        %v1197 = vsel %vm1109, 0, %v1195
        %v1198 = vcosq.f32.pop %v1196
        %v1199 = vsinq.f32.pop %v1196
        %vm1200 = vweird.f32 %v585
        %v1201 = vadd.s32 %v1197, 3
        %v1202 = vand.u32 %v1201, 3
        %vm1203 = vcmp.lt.s32.totalorder %v1202, 2
        %vm1204 = vcmp.eq.s32.totalorder %v1202, 0
        %v1205 = vxor.u32 %v1199, 2147483648
        %v1206 = vsel %vm1204, %v1198, %v1205
        %vm1207 = vcmp.eq.s32.totalorder %v1202, 2
        %v1208 = vxor.u32 %v1198, 2147483648
        %v1209 = vsel %vm1207, %v1208, %v1199
        %v1210 = vsel %vm1203, %v1206, %v1209
        %v1211 = vsel %vm1200, nan, %v1210
        %v1212 = vand.u32 2147483647, %v586
        %vm1213 = vcmp.le.f32.partialorder %v1212, 0.7853982
        %vm1214 = vcmp.lt.s32.totalorder %v586, 0
        %v1215 = vand.u32 %v586, 2139095040
        %v1216 = vshrl.u32 %v1215, 23
        %v1217 = vsub.s32 %v1216, 127
        %v1218 = vand.u32 2147483647, %v586
        %v1219 = vand.u32 %v1218, 8388607
        %v1220 = vor.u32 %v1219, 8388608
        %v1221 = vsub.s32 0, %v1220
        %v1222 = vadd.s32 %v1217, 1
        %vm1223 = vcmp.gt.s32.totalorder %v1222, 0
        %v1224 = vsel %vm1223, %v1222, 0
        %v1225 = vshrl.u32 %v1224, 5
        %v1226 = vand.u32 %v1224, 31
        %v1227 = vsub.s32 32, %v1226
        %v1228 = vshrl.u32 683565275, %v1227
        %v1229 = vshll.u32 683565275, %v1226
        %v1230 = vshrl.u32 2475754826, %v1227
        %v1231 = vor.u32 %v1229, %v1230
        %v1232 = vshll.u32 2475754826, %v1226
        %v1233 = vshrl.u32 2131351028, %v1227
        %v1234 = vor.u32 %v1232, %v1233
        %v1235 = vshll.u32 2131351028, %v1226
        %v1236 = vshrl.u32 2102212464, %v1227
        %v1237 = vor.u32 %v1235, %v1236
        %v1238 = vshll.u32 2102212464, %v1226
        %v1239 = vshrl.u32 920167782, %v1227
        %v1240 = vor.u32 %v1238, %v1239
        %v1241 = vshll.u32 920167782, %v1226
        %v1242 = vshrl.u32 1326507024, %v1227
        %v1243 = vor.u32 %v1241, %v1242
        %vm1244 = vcmp.lt.s32.totalorder %v1225, 1
        %vm1245 = vcmp.lt.s32.totalorder %v1225, 2
        %vm1246 = vcmp.lt.s32.totalorder %v1225, 3
        %vm1247 = vcmp.lt.s32.totalorder %v1225, 4
        %v1248 = vsel %vm1244, %v1228, %v1231
        %v1249 = vsel %vm1247, %v1237, 2102212464
        %v1250 = vsel %vm1246, %v1234, %v1249
        %v1251 = vsel %vm1245, %v1248, %v1250
        %v1252 = vsel %vm1244, %v1231, %v1234
        %v1253 = vsel %vm1247, %v1240, 920167782
        %v1254 = vsel %vm1246, %v1237, %v1253
        %v1255 = vsel %vm1245, %v1252, %v1254
        %v1256 = vsel %vm1244, %v1234, %v1237
        %v1257 = vsel %vm1247, %v1243, 1326507024
        %v1258 = vsel %vm1246, %v1240, %v1257
        %v1259 = vsel %vm1245, %v1256, %v1258
        %v1260 = vshll.u32 %v1220, 8
        %v1261 = vmul.u32.u64.compose %v1260, %v1259
        %v1262 = vextract.low.u32 %v1261
        %v1263 = vextract.high.u32 %v1261
        %v1264 = vmul.u32.u64.compose %v1260, %v1255
        %v1265 = vextract.low.u32 %v1264
        %v1266 = vextract.high.u32 %v1264
        %v1267 = vmul.u32 %v1260, %v1251
        %v1268 = vadd.s32 %v1263, %v1265
        %vm1269 = vc.u32 %v1263, %v1265
        %v1270 = vadd.s32 %v1266, 1
        %v1271 = vsel %vm1269, %v1270, %v1266
        %v1272 = vadd.s32 %v1267, %v1271
        %v1273 = vadd.s32 %v1272, 536870912
        %v1274 = vshrl.u32 %v1273, 30
        %v1275 = vshll.u32 %v1274, 30
        %v1276 = vsub.s32 %v1272, %v1275
        %vm1277 = vcmp.lt.s32.totalorder %v1276, 0
        %v1278 = vsub.s32 0, %v1276
        %v1279 = vsel %vm1277, %v1278, %v1276
        %v1280 = vclz %v1279
        %v1281 = vsub.s32 %v1280, 2
        %vm1282 = vcmp.gt.s32.totalorder 0, %v1281
        %v1283 = vsel %vm1282, 0, %v1281
        %v1284 = vsub.s32 32, %v1283
        %v1285 = vshll.u32 %v1276, %v1283
        %v1286 = vshrl.u32 %v1268, %v1284
        %v1287 = vor.u32 %v1285, %v1286
        %v1288 = vsub.s32 4294967266, %v1283
        %v1289 = vadd.s32 %v1288, 127
        %v1290 = vshll.u32 %v1289, 23
        %v1291 = vor.u32 4788187, %v1290
        %v1292 = vand.u32 2147483647, %v1291
        %v1294 = vcvt.s32.f32 %v1287
        %v1295 = vmul.f32 %v1294, %v1292
        %v1296 = vxor.u32 %v1295, 2147483648
        %v1297 = vsel %vm1214, %v1296, %v1295
        %v1298 = vsub.s32 4, %v1274
        %v1299 = vsel %vm1214, %v1298, %v1274
        %v1300 = vsel %vm1213, %v586, %v1297
        %v1301 = vsel %vm1213, 0, %v1299
        %v1302 = vcosq.f32.pop %v1300
        %v1303 = vsinq.f32.pop %v1300
        %vm1304 = vweird.f32 %v586
        %v1305 = vadd.s32 %v1301, 3
        %v1306 = vand.u32 %v1305, 3
        %vm1307 = vcmp.lt.s32.totalorder %v1306, 2
        %vm1308 = vcmp.eq.s32.totalorder %v1306, 0
        %v1309 = vxor.u32 %v1303, 2147483648
        %v1310 = vsel %vm1308, %v1302, %v1309
        %vm1311 = vcmp.eq.s32.totalorder %v1306, 2
        %v1312 = vxor.u32 %v1302, 2147483648
        %v1313 = vsel %vm1311, %v1312, %v1303
        %v1314 = vsel %vm1307, %v1310, %v1313
        %v1315 = vsel %vm1304, nan, %v1314
        %v1316 = vand.u32 2147483647, %v587
        %vm1317 = vcmp.le.f32.partialorder %v1316, 0.7853982
        %vm1318 = vcmp.lt.s32.totalorder %v587, 0
        %v1319 = vand.u32 %v587, 2139095040
        %v1320 = vshrl.u32 %v1319, 23
        %v1321 = vsub.s32 %v1320, 127
        %v1322 = vand.u32 2147483647, %v587
        %v1323 = vand.u32 %v1322, 8388607
        %v1324 = vor.u32 %v1323, 8388608
        %v1325 = vsub.s32 0, %v1324
        %v1326 = vadd.s32 %v1321, 1
        %vm1327 = vcmp.gt.s32.totalorder %v1326, 0
        %v1328 = vsel %vm1327, %v1326, 0
        %v1329 = vshrl.u32 %v1328, 5
        %v1330 = vand.u32 %v1328, 31
        %v1331 = vsub.s32 32, %v1330
        %v1332 = vshrl.u32 683565275, %v1331
        %v1333 = vshll.u32 683565275, %v1330
        %v1334 = vshrl.u32 2475754826, %v1331
        %v1335 = vor.u32 %v1333, %v1334
        %v1336 = vshll.u32 2475754826, %v1330
        %v1337 = vshrl.u32 2131351028, %v1331
        %v1338 = vor.u32 %v1336, %v1337
        %v1339 = vshll.u32 2131351028, %v1330
        %v1340 = vshrl.u32 2102212464, %v1331
        %v1341 = vor.u32 %v1339, %v1340
        %v1342 = vshll.u32 2102212464, %v1330
        %v1343 = vshrl.u32 920167782, %v1331
        %v1344 = vor.u32 %v1342, %v1343
        %v1345 = vshll.u32 920167782, %v1330
        %v1346 = vshrl.u32 1326507024, %v1331
        %v1347 = vor.u32 %v1345, %v1346
        %vm1348 = vcmp.lt.s32.totalorder %v1329, 1
        %vm1349 = vcmp.lt.s32.totalorder %v1329, 2
        %vm1350 = vcmp.lt.s32.totalorder %v1329, 3
        %vm1351 = vcmp.lt.s32.totalorder %v1329, 4
        %v1352 = vsel %vm1348, %v1332, %v1335
        %v1353 = vsel %vm1351, %v1341, 2102212464
        %v1354 = vsel %vm1350, %v1338, %v1353
        %v1355 = vsel %vm1349, %v1352, %v1354
        %v1356 = vsel %vm1348, %v1335, %v1338
        %v1357 = vsel %vm1351, %v1344, 920167782
        %v1358 = vsel %vm1350, %v1341, %v1357
        %v1359 = vsel %vm1349, %v1356, %v1358
        %v1360 = vsel %vm1348, %v1338, %v1341
        %v1361 = vsel %vm1351, %v1347, 1326507024
        %v1362 = vsel %vm1350, %v1344, %v1361
        %v1363 = vsel %vm1349, %v1360, %v1362
        %v1364 = vshll.u32 %v1324, 8
        %v1365 = vmul.u32.u64.compose %v1364, %v1363
        %v1366 = vextract.low.u32 %v1365
        %v1367 = vextract.high.u32 %v1365
        %v1368 = vmul.u32.u64.compose %v1364, %v1359
        %v1369 = vextract.low.u32 %v1368
        %v1370 = vextract.high.u32 %v1368
        %v1371 = vmul.u32 %v1364, %v1355
        %v1372 = vadd.s32 %v1367, %v1369
        %vm1373 = vc.u32 %v1367, %v1369
        %v1374 = vadd.s32 %v1370, 1
        %v1375 = vsel %vm1373, %v1374, %v1370
        %v1376 = vadd.s32 %v1371, %v1375
        %v1377 = vadd.s32 %v1376, 536870912
        %v1378 = vshrl.u32 %v1377, 30
        %v1379 = vshll.u32 %v1378, 30
        %v1380 = vsub.s32 %v1376, %v1379
        %vm1381 = vcmp.lt.s32.totalorder %v1380, 0
        %v1382 = vsub.s32 0, %v1380
        %v1383 = vsel %vm1381, %v1382, %v1380
        %v1384 = vclz %v1383
        %v1385 = vsub.s32 %v1384, 2
        %vm1386 = vcmp.gt.s32.totalorder 0, %v1385
        %v1387 = vsel %vm1386, 0, %v1385
        %v1388 = vsub.s32 32, %v1387
        %v1389 = vshll.u32 %v1380, %v1387
        %v1390 = vshrl.u32 %v1372, %v1388
        %v1391 = vor.u32 %v1389, %v1390
        %v1392 = vsub.s32 4294967266, %v1387
        %v1393 = vadd.s32 %v1392, 127
        %v1394 = vshll.u32 %v1393, 23
        %v1395 = vor.u32 4788187, %v1394
        %v1396 = vand.u32 2147483647, %v1395
        %v1398 = vcvt.s32.f32 %v1391
        %v1399 = vmul.f32 %v1398, %v1396
        %v1400 = vxor.u32 %v1399, 2147483648
        %v1401 = vsel %vm1318, %v1400, %v1399
        %v1402 = vsub.s32 4, %v1378
        %v1403 = vsel %vm1318, %v1402, %v1378
        %v1404 = vsel %vm1317, %v587, %v1401
        %v1405 = vsel %vm1317, 0, %v1403
        %v1406 = vcosq.f32.pop %v1404
        %v1407 = vsinq.f32.pop %v1404
        %vm1408 = vweird.f32 %v587
        %v1409 = vadd.s32 %v1405, 3
        %v1410 = vand.u32 %v1409, 3
        %vm1411 = vcmp.lt.s32.totalorder %v1410, 2
        %vm1412 = vcmp.eq.s32.totalorder %v1410, 0
        %v1413 = vxor.u32 %v1407, 2147483648
        %v1414 = vsel %vm1412, %v1406, %v1413
        %vm1415 = vcmp.eq.s32.totalorder %v1410, 2
        %v1416 = vxor.u32 %v1406, 2147483648
        %v1417 = vsel %vm1415, %v1416, %v1407
        %v1418 = vsel %vm1411, %v1414, %v1417
        %v1419 = vsel %vm1408, nan, %v1418
        %v1420 = vand.u32 2147483647, %v691
        %v1421 = vand.u32 2147483647, %v795
        %v1422 = vand.u32 2147483647, %v899
        %v1423 = vand.u32 2147483647, %v1003
        %v1424 = vand.u32 2147483647, %v1107
        %v1425 = vand.u32 2147483647, %v1211
        %v1426 = vand.u32 2147483647, %v1315
        %v1427 = vand.u32 2147483647, %v1419
        %1428 = vadd.xlane.f32.xlu0 %v1420
        %v1429 = vpop.xlane.xlu0 %1428
        %1430 = vadd.xlane.f32.xlu0 %v1421
        %v1431 = vpop.xlane.xlu0 %1430
        %1432 = vadd.xlane.f32.xlu0 %v1422
        %v1433 = vpop.xlane.xlu0 %1432
        %1434 = vadd.xlane.f32.xlu0 %v1423
        %v1435 = vpop.xlane.xlu0 %1434
        %1436 = vadd.xlane.f32.xlu0 %v1424
        %v1437 = vpop.xlane.xlu0 %1436
        %1438 = vadd.xlane.f32.xlu0 %v1425
        %v1439 = vpop.xlane.xlu0 %1438
        %1440 = vadd.xlane.f32.xlu0 %v1426
        %v1441 = vpop.xlane.xlu0 %1440
        %1442 = vadd.xlane.f32.xlu0 %v1427
        %v1443 = vpop.xlane.xlu0 %1442
        %v1444 = vmul.f32 %v1429, 0.0546875
        %v1445 = vmul.f32 %v1431, 0.0546875
        %v1446 = vmul.f32 %v1433, 0.0546875
        %v1447 = vmul.f32 %v1435, 0.0546875
        %v1448 = vmul.f32 %v1437, 0.0546875
        %v1449 = vmul.f32 %v1439, 0.0546875
        %v1450 = vmul.f32 %v1441, 0.0546875
        %v1451 = vmul.f32 %v1443, 0.0546875
        %v1453 = vcombine.high %v464, %v464
        %v1455 = vunpack.c.l.s4 1966171168
        %v1456 = vunpack.c.0.s8 %v1455
        %v1457 = vlaneseq
        %v1458 = vshrl.u32 %v1457, 7
        %v1459 = vsub.s32 %v1456, %v1458
        %v1460 = vrot.slane %v464, %v1459
        %v1462 = vunpack.c.l.s4 1966171168
        %v1463 = vunpack.c.0.s8 %v1462
        %v1464 = vlaneseq
        %v1465 = vshrl.u32 %v1464, 7
        %v1466 = vsub.s32 %v1463, %v1465
        %v1467 = vrot.slane %v1453, %v1466
        %v1468 = vcombine.high %v1460, %v1460
        %v1469 = vcombine.high %v1467, %v1467
        %v1471 = vunpack.c.l.s4 1966171168
        %v1472 = vunpack.c.0.s8 %v1471
        %v1473 = vlaneseq
        %v1474 = vshrl.u32 %v1473, 7
        %v1475 = vsub.s32 %v1472, %v1474
        %v1476 = vrot.slane %v1460, %v1475
        %v1478 = vunpack.c.l.s4 1966171168
        %v1479 = vunpack.c.0.s8 %v1478
        %v1480 = vlaneseq
        %v1481 = vshrl.u32 %v1480, 7
        %v1482 = vsub.s32 %v1479, %v1481
        %v1483 = vrot.slane %v1467, %v1482
        %v1485 = vunpack.c.l.s4 1966171168
        %v1486 = vunpack.c.0.s8 %v1485
        %v1487 = vlaneseq
        %v1488 = vshrl.u32 %v1487, 7
        %v1489 = vsub.s32 %v1486, %v1488
        %v1490 = vrot.slane %v1468, %v1489
        %v1492 = vunpack.c.l.s4 1966171168
        %v1493 = vunpack.c.0.s8 %v1492
        %v1494 = vlaneseq
        %v1495 = vshrl.u32 %v1494, 7
        %v1496 = vsub.s32 %v1493, %v1495
        %v1497 = vrot.slane %v1469, %v1496
        %v1498 = vcombine.high %v1476, %v1476
        %v1499 = vcombine.high %v1483, %v1483
        %v1500 = vcombine.high %v1490, %v1490
        %v1501 = vcombine.high %v1497, %v1497
        %v1503 = vcombine.high %v459, %v459
        %v1505 = vunpack.c.l.s4 1966171168
        %v1506 = vunpack.c.0.s8 %v1505
        %v1507 = vlaneseq
        %v1508 = vshrl.u32 %v1507, 7
        %v1509 = vsub.s32 %v1506, %v1508
        %v1510 = vrot.slane %v459, %v1509
        %v1512 = vunpack.c.l.s4 1966171168
        %v1513 = vunpack.c.0.s8 %v1512
        %v1514 = vlaneseq
        %v1515 = vshrl.u32 %v1514, 7
        %v1516 = vsub.s32 %v1513, %v1515
        %v1517 = vrot.slane %v1503, %v1516
        %v1518 = vcombine.high %v1510, %v1510
        %v1519 = vcombine.high %v1517, %v1517
        %v1521 = vunpack.c.l.s4 1966171168
        %v1522 = vunpack.c.0.s8 %v1521
        %v1523 = vlaneseq
        %v1524 = vshrl.u32 %v1523, 7
        %v1525 = vsub.s32 %v1522, %v1524
        %v1526 = vrot.slane %v1510, %v1525
        %v1528 = vunpack.c.l.s4 1966171168
        %v1529 = vunpack.c.0.s8 %v1528
        %v1530 = vlaneseq
        %v1531 = vshrl.u32 %v1530, 7
        %v1532 = vsub.s32 %v1529, %v1531
        %v1533 = vrot.slane %v1517, %v1532
        %v1535 = vunpack.c.l.s4 1966171168
        %v1536 = vunpack.c.0.s8 %v1535
        %v1537 = vlaneseq
        %v1538 = vshrl.u32 %v1537, 7
        %v1539 = vsub.s32 %v1536, %v1538
        %v1540 = vrot.slane %v1518, %v1539
        %v1542 = vunpack.c.l.s4 1966171168
        %v1543 = vunpack.c.0.s8 %v1542
        %v1544 = vlaneseq
        %v1545 = vshrl.u32 %v1544, 7
        %v1546 = vsub.s32 %v1543, %v1545
        %v1547 = vrot.slane %v1519, %v1546
        %v1548 = vcombine.high %v1526, %v1526
        %v1549 = vcombine.high %v1533, %v1533
        %v1550 = vcombine.high %v1540, %v1540
        %v1551 = vcombine.high %v1547, %v1547
        %v1552 = vlaneseq
        %v1553 = vshrl.u32 %v1552, 7
        %v1554 = vsub.s32 0, %v1553
        %v1555 = vrot.slane %v1526, %v1554
        %v1556 = vlaneseq
        %v1557 = vshrl.u32 %v1556, 7
        %v1558 = vsub.s32 0, %v1557
        %v1559 = vrot.slane %v1540, %v1558
        %v1560 = vlaneseq
        %v1561 = vshrl.u32 %v1560, 7
        %v1562 = vsub.s32 0, %v1561
        %v1563 = vrot.slane %v1548, %v1562
        %v1564 = vlaneseq
        %v1565 = vshrl.u32 %v1564, 7
        %v1566 = vsub.s32 0, %v1565
        %v1567 = vrot.slane %v1550, %v1566
        %v1568 = vlaneseq
        %v1569 = vshrl.u32 %v1568, 7
        %v1570 = vsub.s32 0, %v1569
        %v1571 = vrot.slane %v1533, %v1570
        %v1572 = vlaneseq
        %v1573 = vshrl.u32 %v1572, 7
        %v1574 = vsub.s32 0, %v1573
        %v1575 = vrot.slane %v1547, %v1574
        %v1576 = vlaneseq
        %v1577 = vshrl.u32 %v1576, 7
        %v1578 = vsub.s32 0, %v1577
        %v1579 = vrot.slane %v1549, %v1578
        %v1580 = vlaneseq
        %v1581 = vshrl.u32 %v1580, 7
        %v1582 = vsub.s32 0, %v1581
        %v1583 = vrot.slane %v1551, %v1582
        %v1592 = vmul.f32 %v474, %v1555
        %v1593 = vmul.f32 %v475, %v1559
        %v1594 = vmul.f32 %v476, %v1563
        %v1595 = vmul.f32 %v477, %v1567
        %v1596 = vmul.f32 %v478, %v1571
        %v1597 = vmul.f32 %v479, %v1575
        %v1598 = vmul.f32 %v480, %v1579
        %v1599 = vmul.f32 %v481, %v1583
        %v1600 = vlaneseq
        %v1601 = vshrl.u32 %v1600, 7
        %v1602 = vsub.s32 0, %v1601
        %v1603 = vrot.slane %v1476, %v1602
        %v1604 = vlaneseq
        %v1605 = vshrl.u32 %v1604, 7
        %v1606 = vsub.s32 0, %v1605
        %v1607 = vrot.slane %v1490, %v1606
        %v1608 = vlaneseq
        %v1609 = vshrl.u32 %v1608, 7
        %v1610 = vsub.s32 0, %v1609
        %v1611 = vrot.slane %v1498, %v1610
        %v1612 = vlaneseq
        %v1613 = vshrl.u32 %v1612, 7
        %v1614 = vsub.s32 0, %v1613
        %v1615 = vrot.slane %v1500, %v1614
        %v1616 = vlaneseq
        %v1617 = vshrl.u32 %v1616, 7
        %v1618 = vsub.s32 0, %v1617
        %v1619 = vrot.slane %v1483, %v1618
        %v1620 = vlaneseq
        %v1621 = vshrl.u32 %v1620, 7
        %v1622 = vsub.s32 0, %v1621
        %v1623 = vrot.slane %v1497, %v1622
        %v1624 = vlaneseq
        %v1625 = vshrl.u32 %v1624, 7
        %v1626 = vsub.s32 0, %v1625
        %v1627 = vrot.slane %v1499, %v1626
        %v1628 = vlaneseq
        %v1629 = vshrl.u32 %v1628, 7
        %v1630 = vsub.s32 0, %v1629
        %v1631 = vrot.slane %v1501, %v1630
        %v1640 = vsub.f32 %v1603, %v1592
        %v1641 = vsub.f32 %v1607, %v1593
        %v1642 = vsub.f32 %v1611, %v1594
        %v1643 = vsub.f32 %v1615, %v1595
        %v1644 = vsub.f32 %v1619, %v1596
        %v1645 = vsub.f32 %v1623, %v1597
        %v1646 = vsub.f32 %v1627, %v1598
        %v1647 = vsub.f32 %v1631, %v1599
        %v1648 = vmul.f32 %v1640, %v1640
        %v1649 = vmul.f32 %v1641, %v1641
        %v1650 = vmul.f32 %v1642, %v1642
        %v1651 = vmul.f32 %v1643, %v1643
        %v1652 = vmul.f32 %v1644, %v1644
        %v1653 = vmul.f32 %v1645, %v1645
        %v1654 = vmul.f32 %v1646, %v1646
        %v1655 = vmul.f32 %v1647, %v1647
        %1656 = vadd.xlane.f32.xlu0 %v1648
        %v1657 = vpop.xlane.xlu0 %1656
        %1658 = vadd.xlane.f32.xlu0 %v1649
        %v1659 = vpop.xlane.xlu0 %1658
        %1660 = vadd.xlane.f32.xlu0 %v1650
        %v1661 = vpop.xlane.xlu0 %1660
        %1662 = vadd.xlane.f32.xlu0 %v1651
        %v1663 = vpop.xlane.xlu0 %1662
        %1664 = vadd.xlane.f32.xlu0 %v1652
        %v1665 = vpop.xlane.xlu0 %1664
        %1666 = vadd.xlane.f32.xlu0 %v1653
        %v1667 = vpop.xlane.xlu0 %1666
        %1668 = vadd.xlane.f32.xlu0 %v1654
        %v1669 = vpop.xlane.xlu0 %1668
        %1670 = vadd.xlane.f32.xlu0 %v1655
        %v1671 = vpop.xlane.xlu0 %1670
        %v1672 = vrsqrt.pop %v1657
        %v1673 = vmul.f32 %v1657, %v1672
        %vm1674 = vcmp.eq.f32.partialorder %v1657, inf
        %v1675 = vsel %vm1674, %v1657, %v1673
        %vm1676 = vcmp.eq.f32.partialorder %v1657, 0.0
        %v1677 = vand.u32 %v1657, 2147483648
        %v1678 = vsel %vm1676, %v1677, %v1675
        %v1679 = vrsqrt.pop %v1659
        %v1680 = vmul.f32 %v1659, %v1679
        %vm1681 = vcmp.eq.f32.partialorder %v1659, inf
        %v1682 = vsel %vm1681, %v1659, %v1680
        %vm1683 = vcmp.eq.f32.partialorder %v1659, 0.0
        %v1684 = vand.u32 %v1659, 2147483648
        %v1685 = vsel %vm1683, %v1684, %v1682
        %v1686 = vrsqrt.pop %v1661
        %v1687 = vmul.f32 %v1661, %v1686
        %vm1688 = vcmp.eq.f32.partialorder %v1661, inf
        %v1689 = vsel %vm1688, %v1661, %v1687
        %vm1690 = vcmp.eq.f32.partialorder %v1661, 0.0
        %v1691 = vand.u32 %v1661, 2147483648
        %v1692 = vsel %vm1690, %v1691, %v1689
        %v1693 = vrsqrt.pop %v1663
        %v1694 = vmul.f32 %v1663, %v1693
        %vm1695 = vcmp.eq.f32.partialorder %v1663, inf
        %v1696 = vsel %vm1695, %v1663, %v1694
        %vm1697 = vcmp.eq.f32.partialorder %v1663, 0.0
        %v1698 = vand.u32 %v1663, 2147483648
        %v1699 = vsel %vm1697, %v1698, %v1696
        %v1700 = vrsqrt.pop %v1665
        %v1701 = vmul.f32 %v1665, %v1700
        %vm1702 = vcmp.eq.f32.partialorder %v1665, inf
        %v1703 = vsel %vm1702, %v1665, %v1701
        %vm1704 = vcmp.eq.f32.partialorder %v1665, 0.0
        %v1705 = vand.u32 %v1665, 2147483648
        %v1706 = vsel %vm1704, %v1705, %v1703
        %v1707 = vrsqrt.pop %v1667
        %v1708 = vmul.f32 %v1667, %v1707
        %vm1709 = vcmp.eq.f32.partialorder %v1667, inf
        %v1710 = vsel %vm1709, %v1667, %v1708
        %vm1711 = vcmp.eq.f32.partialorder %v1667, 0.0
        %v1712 = vand.u32 %v1667, 2147483648
        %v1713 = vsel %vm1711, %v1712, %v1710
        %v1714 = vrsqrt.pop %v1669
        %v1715 = vmul.f32 %v1669, %v1714
        %vm1716 = vcmp.eq.f32.partialorder %v1669, inf
        %v1717 = vsel %vm1716, %v1669, %v1715
        %vm1718 = vcmp.eq.f32.partialorder %v1669, 0.0
        %v1719 = vand.u32 %v1669, 2147483648
        %v1720 = vsel %vm1718, %v1719, %v1717
        %v1721 = vrsqrt.pop %v1671
        %v1722 = vmul.f32 %v1671, %v1721
        %vm1723 = vcmp.eq.f32.partialorder %v1671, inf
        %v1724 = vsel %vm1723, %v1671, %v1722
        %vm1725 = vcmp.eq.f32.partialorder %v1671, 0.0
        %v1726 = vand.u32 %v1671, 2147483648
        %v1727 = vsel %vm1725, %v1726, %v1724
        %v1728 = vmul.f32 %v1678, 0.5
        %v1729 = vmul.f32 %v1685, 0.5
        %v1730 = vmul.f32 %v1692, 0.5
        %v1731 = vmul.f32 %v1699, 0.5
        %v1732 = vmul.f32 %v1706, 0.5
        %v1733 = vmul.f32 %v1713, 0.5
        %v1734 = vmul.f32 %v1720, 0.5
        %v1735 = vmul.f32 %v1727, 0.5
        %v1736 = vadd.f32 %v1444, %v1728
        %v1737 = vadd.f32 %v1445, %v1729
        %v1738 = vadd.f32 %v1446, %v1730
        %v1739 = vadd.f32 %v1447, %v1731
        %v1740 = vadd.f32 %v1448, %v1732
        %v1741 = vadd.f32 %v1449, %v1733
        %v1742 = vadd.f32 %v1450, %v1734
        %v1743 = vadd.f32 %v1451, %v1735
        %v1744 = vsub.f32 12.0, %v1736
        %v1745 = vsub.f32 12.0, %v1737
        %v1746 = vsub.f32 12.0, %v1738
        %v1747 = vsub.f32 12.0, %v1739
        %v1748 = vsub.f32 12.0, %v1740
        %v1749 = vsub.f32 12.0, %v1741
        %v1750 = vsub.f32 12.0, %v1742
        %v1751 = vsub.f32 12.0, %v1743
        %v1752 = vld [vmem:[#allocation2] sm:$0xff]
        %v1761 = vlaneseq
        %v1762 = vand.u32 %v1761, 127
        %v1763 = vlaneseq
        %v1764 = vshrl.u32 %v1763, 7
        %v1765 = vsub.s32 %v1762, %v1764
        %v1766 = vrot.slane %v1744, %v1765
        %v1767 = vlaneseq
        %v1768 = vshrl.u32 %v1767, 7
        %v1769 = vsub.s32 %v1762, %v1768
        %v1770 = vrot.slane %v1745, %v1769
        %v1771 = vlaneseq
        %v1772 = vshrl.u32 %v1771, 7
        %v1773 = vsub.s32 %v1762, %v1772
        %v1774 = vrot.slane %v1746, %v1773
        %v1775 = vlaneseq
        %v1776 = vshrl.u32 %v1775, 7
        %v1777 = vsub.s32 %v1762, %v1776
        %v1778 = vrot.slane %v1747, %v1777
        %v1779 = vlaneseq
        %v1780 = vshrl.u32 %v1779, 7
        %v1781 = vsub.s32 %v1762, %v1780
        %v1782 = vrot.slane %v1748, %v1781
        %v1783 = vlaneseq
        %v1784 = vshrl.u32 %v1783, 7
        %v1785 = vsub.s32 %v1762, %v1784
        %v1786 = vrot.slane %v1749, %v1785
        %v1787 = vlaneseq
        %v1788 = vshrl.u32 %v1787, 7
        %v1789 = vsub.s32 %v1762, %v1788
        %v1790 = vrot.slane %v1750, %v1789
        %v1791 = vlaneseq
        %v1792 = vshrl.u32 %v1791, 7
        %v1793 = vsub.s32 %v1762, %v1792
        %v1794 = vrot.slane %v1751, %v1793
        %vm1795 = vcmask 1041409
        %v1796 = vsel %vm1795, %v1770, %v1766
        %vm1797 = vcmask 1042434
        %v1798 = vsel %vm1797, %v1774, %v1796
        %vm1799 = vcmask 1043459
        %v1800 = vsel %vm1799, %v1778, %v1798
        %vm1801 = vcmask 1044484
        %v1802 = vsel %vm1801, %v1782, %v1800
        %vm1803 = vcmask 1045509
        %v1804 = vsel %vm1803, %v1786, %v1802
        %vm1805 = vcmask 1046534
        %v1806 = vsel %vm1805, %v1790, %v1804
        %vm1807 = vcmask 1047559
        %v1808 = vsel %vm1807, %v1794, %v1806
        %vm1810 = vcmask 64512
        %v1811 = vsel %vm1810, %v1808, -inf
        %1812 = vmax.xlane.f32.xlu0 %v1811
        %v1813 = vpop.xlane.xlu0 %1812
        %v1814 = vmax.f32 %v1752, %v1813
        %v1815 = vsub.f32 %v1752, %v1814
        %v1816 = vmul.f32 %v1815, 1.442695
        %v1817 = vpow.pop %v1816
        %1819 = vset.pattern.permute.xlu0 0
        %1820 = vperm.xlu0 %1819, %v1814
        %v1821 = vpop.permute.xlu0 %1820
        %v1822 = vlaneseq
        %v1823 = vshrl.u32 %v1822, 7
        %v1824 = vsub.s32 0, %v1823
        %v1825 = vrot.slane %v1821, %v1824
        %v1826 = vlaneseq
        %v1827 = vshrl.u32 %v1826, 7
        %v1828 = vsub.s32 1, %v1827
        %v1829 = vrot.slane %v1821, %v1828
        %v1830 = vlaneseq
        %v1831 = vshrl.u32 %v1830, 7
        %v1832 = vsub.s32 2, %v1831
        %v1833 = vrot.slane %v1821, %v1832
        %v1834 = vlaneseq
        %v1835 = vshrl.u32 %v1834, 7
        %v1836 = vsub.s32 3, %v1835
        %v1837 = vrot.slane %v1821, %v1836
        %v1838 = vlaneseq
        %v1839 = vshrl.u32 %v1838, 7
        %v1840 = vsub.s32 4, %v1839
        %v1841 = vrot.slane %v1821, %v1840
        %v1842 = vlaneseq
        %v1843 = vshrl.u32 %v1842, 7
        %v1844 = vsub.s32 5, %v1843
        %v1845 = vrot.slane %v1821, %v1844
        %v1846 = vlaneseq
        %v1847 = vshrl.u32 %v1846, 7
        %v1848 = vsub.s32 6, %v1847
        %v1849 = vrot.slane %v1821, %v1848
        %v1850 = vlaneseq
        %v1851 = vshrl.u32 %v1850, 7
        %v1852 = vsub.s32 7, %v1851
        %v1853 = vrot.slane %v1821, %v1852
        %v1862 = vsub.f32 %v1744, %v1825
        %v1863 = vsub.f32 %v1745, %v1829
        %v1864 = vsub.f32 %v1746, %v1833
        %v1865 = vsub.f32 %v1747, %v1837
        %v1866 = vsub.f32 %v1748, %v1841
        %v1867 = vsub.f32 %v1749, %v1845
        %v1868 = vsub.f32 %v1750, %v1849
        %v1869 = vsub.f32 %v1751, %v1853
        %v1870 = vmul.f32 %v1862, 1.442695
        %v1871 = vpow.pop %v1870
        %v1872 = vmul.f32 %v1863, 1.442695
        %v1873 = vpow.pop %v1872
        %v1874 = vmul.f32 %v1864, 1.442695
        %v1875 = vpow.pop %v1874
        %v1876 = vmul.f32 %v1865, 1.442695
        %v1877 = vpow.pop %v1876
        %v1878 = vmul.f32 %v1866, 1.442695
        %v1879 = vpow.pop %v1878
        %v1880 = vmul.f32 %v1867, 1.442695
        %v1881 = vpow.pop %v1880
        %v1882 = vmul.f32 %v1868, 1.442695
        %v1883 = vpow.pop %v1882
        %v1884 = vmul.f32 %v1869, 1.442695
        %v1885 = vpow.pop %v1884
        %v1886 = vld [vmem:[#allocation3] sm:$0xff]
        %v1887 = vmul.f32 %v1817, %v1886
        %1896 = vset.pattern.permute.xlu0 0
        %1897 = vperm.xlu0 %1896, %v1871
        %v1898 = vpop.permute.xlu0 %1897
        %1899 = vset.pattern.permute.xlu0 0
        %1900 = vperm.xlu0 %1899, %v1873
        %v1901 = vpop.permute.xlu0 %1900
        %1902 = vset.pattern.permute.xlu0 0
        %1903 = vperm.xlu0 %1902, %v1875
        %v1904 = vpop.permute.xlu0 %1903
        %1905 = vset.pattern.permute.xlu0 0
        %1906 = vperm.xlu0 %1905, %v1877
        %v1907 = vpop.permute.xlu0 %1906
        %1908 = vset.pattern.permute.xlu0 0
        %1909 = vperm.xlu0 %1908, %v1879
        %v1910 = vpop.permute.xlu0 %1909
        %1911 = vset.pattern.permute.xlu0 0
        %1912 = vperm.xlu0 %1911, %v1881
        %v1913 = vpop.permute.xlu0 %1912
        %1914 = vset.pattern.permute.xlu0 0
        %1915 = vperm.xlu0 %1914, %v1883
        %v1916 = vpop.permute.xlu0 %1915
        %1917 = vset.pattern.permute.xlu0 0
        %1918 = vperm.xlu0 %1917, %v1885
        %v1919 = vpop.permute.xlu0 %1918
        %v1920 = vlaneseq
        %v1921 = vshrl.u32 %v1920, 7
        %v1922 = vsub.s32 %v1762, %v1921
        %v1923 = vrot.slane %v1898, %v1922
        %v1924 = vlaneseq
        %v1925 = vshrl.u32 %v1924, 7
        %v1926 = vsub.s32 %v1762, %v1925
        %v1927 = vrot.slane %v1901, %v1926
        %v1928 = vlaneseq
        %v1929 = vshrl.u32 %v1928, 7
        %v1930 = vsub.s32 %v1762, %v1929
        %v1931 = vrot.slane %v1904, %v1930
        %v1932 = vlaneseq
        %v1933 = vshrl.u32 %v1932, 7
        %v1934 = vsub.s32 %v1762, %v1933
        %v1935 = vrot.slane %v1907, %v1934
        %v1936 = vlaneseq
        %v1937 = vshrl.u32 %v1936, 7
        %v1938 = vsub.s32 %v1762, %v1937
        %v1939 = vrot.slane %v1910, %v1938
        %v1940 = vlaneseq
        %v1941 = vshrl.u32 %v1940, 7
        %v1942 = vsub.s32 %v1762, %v1941
        %v1943 = vrot.slane %v1913, %v1942
        %v1944 = vlaneseq
        %v1945 = vshrl.u32 %v1944, 7
        %v1946 = vsub.s32 %v1762, %v1945
        %v1947 = vrot.slane %v1916, %v1946
        %v1948 = vlaneseq
        %v1949 = vshrl.u32 %v1948, 7
        %v1950 = vsub.s32 %v1762, %v1949
        %v1951 = vrot.slane %v1919, %v1950
        %v1952 = vsel %vm1795, %v1927, %v1923
        %v1953 = vsel %vm1797, %v1931, %v1952
        %v1954 = vsel %vm1799, %v1935, %v1953
        %v1955 = vsel %vm1801, %v1939, %v1954
        %v1956 = vsel %vm1803, %v1943, %v1955
        %v1957 = vsel %vm1805, %v1947, %v1956
        %v1958 = vsel %vm1807, %v1951, %v1957
        %v1960 = vsel %vm1810, %v1958, 0.0
        %1961 = vadd.xlane.f32.xlu0 %v1960
        %v1962 = vpop.xlane.xlu0 %1961
        %v1963 = vadd.f32 %v1887, %v1962
        %vm1964 = vcmask 7168
        %1965 = vst.msk [vmem:[#allocation3] sm:$0xff] %vm1964, %v1963
        %v1966 = vld [vmem:[#allocation4] sm:$0xff]
        %v1967 = vmul.f32 %v1817, %v1966
        %v1968 = vsub.f32 0.0, %v1744
        %v1969 = vsub.f32 0.0, %v1745
        %v1970 = vsub.f32 0.0, %v1746
        %v1971 = vsub.f32 0.0, %v1747
        %v1972 = vsub.f32 0.0, %v1748
        %v1973 = vsub.f32 0.0, %v1749
        %v1974 = vsub.f32 0.0, %v1750
        %v1975 = vsub.f32 0.0, %v1751
        %v1976 = vmin.f32 %v1968, 0.0
        %v1977 = vmin.f32 %v1969, 0.0
        %v1978 = vmin.f32 %v1970, 0.0
        %v1979 = vmin.f32 %v1971, 0.0
        %v1980 = vmin.f32 %v1972, 0.0
        %v1981 = vmin.f32 %v1973, 0.0
        %v1982 = vmin.f32 %v1974, 0.0
        %v1983 = vmin.f32 %v1975, 0.0
        %v1984 = vand.u32 2147483647, %v1968
        %v1985 = vand.u32 2147483647, %v1969
        %v1986 = vand.u32 2147483647, %v1970
        %v1987 = vand.u32 2147483647, %v1971
        %v1988 = vand.u32 2147483647, %v1972
        %v1989 = vand.u32 2147483647, %v1973
        %v1990 = vand.u32 2147483647, %v1974
        %v1991 = vand.u32 2147483647, %v1975
        %v1992 = vsub.f32 0.0, %v1984
        %v1993 = vsub.f32 0.0, %v1985
        %v1994 = vsub.f32 0.0, %v1986
        %v1995 = vsub.f32 0.0, %v1987
        %v1996 = vsub.f32 0.0, %v1988
        %v1997 = vsub.f32 0.0, %v1989
        %v1998 = vsub.f32 0.0, %v1990
        %v1999 = vsub.f32 0.0, %v1991
        %v2000 = vmul.f32 %v1992, 1.442695
        %v2001 = vpow.pop %v2000
        %v2002 = vmul.f32 %v1993, 1.442695
        %v2003 = vpow.pop %v2002
        %v2004 = vmul.f32 %v1994, 1.442695
        %v2005 = vpow.pop %v2004
        %v2006 = vmul.f32 %v1995, 1.442695
        %v2007 = vpow.pop %v2006
        %v2008 = vmul.f32 %v1996, 1.442695
        %v2009 = vpow.pop %v2008
        %v2010 = vmul.f32 %v1997, 1.442695
        %v2011 = vpow.pop %v2010
        %v2012 = vmul.f32 %v1998, 1.442695
        %v2013 = vpow.pop %v2012
        %v2014 = vmul.f32 %v1999, 1.442695
        %v2015 = vpow.pop %v2014
        %v2016 = vadd.f32 %v2001, 1.0
        %v2017 = vadd.f32 %v2003, 1.0
        %v2018 = vadd.f32 %v2005, 1.0
        %v2019 = vadd.f32 %v2007, 1.0
        %v2020 = vadd.f32 %v2009, 1.0
        %v2021 = vadd.f32 %v2011, 1.0
        %v2022 = vadd.f32 %v2013, 1.0
        %v2023 = vadd.f32 %v2015, 1.0
        %v2024 = vlog2.pop %v2016
        %v2025 = vmul.f32 %v2024, 0.6931472
        %v2026 = vlog2.pop %v2017
        %v2027 = vmul.f32 %v2026, 0.6931472
        %v2028 = vlog2.pop %v2018
        %v2029 = vmul.f32 %v2028, 0.6931472
        %v2030 = vlog2.pop %v2019
        %v2031 = vmul.f32 %v2030, 0.6931472
        %v2032 = vlog2.pop %v2020
        %v2033 = vmul.f32 %v2032, 0.6931472
        %v2034 = vlog2.pop %v2021
        %v2035 = vmul.f32 %v2034, 0.6931472
        %v2036 = vlog2.pop %v2022
        %v2037 = vmul.f32 %v2036, 0.6931472
        %v2038 = vlog2.pop %v2023
        %v2039 = vmul.f32 %v2038, 0.6931472
        %v2040 = vsub.f32 %v1976, %v2025
        %v2041 = vsub.f32 %v1977, %v2027
        %v2042 = vsub.f32 %v1978, %v2029
        %v2043 = vsub.f32 %v1979, %v2031
        %v2044 = vsub.f32 %v1980, %v2033
        %v2045 = vsub.f32 %v1981, %v2035
        %v2046 = vsub.f32 %v1982, %v2037
        %v2047 = vsub.f32 %v1983, %v2039
        %v2048 = vmul.f32 %v1871, %v2040
        %v2049 = vmul.f32 %v1873, %v2041
        %v2050 = vmul.f32 %v1875, %v2042
        %v2051 = vmul.f32 %v1877, %v2043
        %v2052 = vmul.f32 %v1879, %v2044
        %v2053 = vmul.f32 %v1881, %v2045
        %v2054 = vmul.f32 %v1883, %v2046
        %v2055 = vmul.f32 %v1885, %v2047
        %2064 = vset.pattern.permute.xlu0 0
        %2065 = vperm.xlu0 %2064, %v2048
        %v2066 = vpop.permute.xlu0 %2065
        %2067 = vset.pattern.permute.xlu0 0
        %2068 = vperm.xlu0 %2067, %v2049
        %v2069 = vpop.permute.xlu0 %2068
        %2070 = vset.pattern.permute.xlu0 0
        %2071 = vperm.xlu0 %2070, %v2050
        %v2072 = vpop.permute.xlu0 %2071
        %2073 = vset.pattern.permute.xlu0 0
        %2074 = vperm.xlu0 %2073, %v2051
        %v2075 = vpop.permute.xlu0 %2074
        %2076 = vset.pattern.permute.xlu0 0
        %2077 = vperm.xlu0 %2076, %v2052
        %v2078 = vpop.permute.xlu0 %2077
        %2079 = vset.pattern.permute.xlu0 0
        %2080 = vperm.xlu0 %2079, %v2053
        %v2081 = vpop.permute.xlu0 %2080
        %2082 = vset.pattern.permute.xlu0 0
        %2083 = vperm.xlu0 %2082, %v2054
        %v2084 = vpop.permute.xlu0 %2083
        %2085 = vset.pattern.permute.xlu0 0
        %2086 = vperm.xlu0 %2085, %v2055
        %v2087 = vpop.permute.xlu0 %2086
        %v2088 = vlaneseq
        %v2089 = vshrl.u32 %v2088, 7
        %v2090 = vsub.s32 %v1762, %v2089
        %v2091 = vrot.slane %v2066, %v2090
        %v2092 = vlaneseq
        %v2093 = vshrl.u32 %v2092, 7
        %v2094 = vsub.s32 %v1762, %v2093
        %v2095 = vrot.slane %v2069, %v2094
        %v2096 = vlaneseq
        %v2097 = vshrl.u32 %v2096, 7
        %v2098 = vsub.s32 %v1762, %v2097
        %v2099 = vrot.slane %v2072, %v2098
        %v2100 = vlaneseq
        %v2101 = vshrl.u32 %v2100, 7
        %v2102 = vsub.s32 %v1762, %v2101
        %v2103 = vrot.slane %v2075, %v2102
        %v2104 = vlaneseq
        %v2105 = vshrl.u32 %v2104, 7
        %v2106 = vsub.s32 %v1762, %v2105
        %v2107 = vrot.slane %v2078, %v2106
        %v2108 = vlaneseq
        %v2109 = vshrl.u32 %v2108, 7
        %v2110 = vsub.s32 %v1762, %v2109
        %v2111 = vrot.slane %v2081, %v2110
        %v2112 = vlaneseq
        %v2113 = vshrl.u32 %v2112, 7
        %v2114 = vsub.s32 %v1762, %v2113
        %v2115 = vrot.slane %v2084, %v2114
        %v2116 = vlaneseq
        %v2117 = vshrl.u32 %v2116, 7
        %v2118 = vsub.s32 %v1762, %v2117
        %v2119 = vrot.slane %v2087, %v2118
        %v2120 = vsel %vm1795, %v2095, %v2091
        %v2121 = vsel %vm1797, %v2099, %v2120
        %v2122 = vsel %vm1799, %v2103, %v2121
        %v2123 = vsel %vm1801, %v2107, %v2122
        %v2124 = vsel %vm1803, %v2111, %v2123
        %v2125 = vsel %vm1805, %v2115, %v2124
        %v2126 = vsel %vm1807, %v2119, %v2125
        %v2128 = vsel %vm1810, %v2126, 0.0
        %2129 = vadd.xlane.f32.xlu0 %v2128
        %v2130 = vpop.xlane.xlu0 %2129
        %v2131 = vadd.f32 %v1967, %v2130
        %2132 = vst.msk [vmem:[#allocation4] sm:$0xff] %vm1964, %v2131
        %2133 = vst.msk [vmem:[#allocation2] sm:$0xff] %vm1964, %v1814
        %v2134 = vld [vmem:[%s365] sm:$0xf]
        %v2135 = vld [vmem:[%s365 + $0x4] sm:$0xf]
        %v2136 = vld [vmem:[%s365 + $0x8] sm:$0xf]
        %v2137 = vld [vmem:[%s365 + $0xc] sm:$0xf]
        %v2138 = vld [vmem:[%s365 + $0x10] sm:$0xf]
        %v2139 = vld [vmem:[%s365 + $0x14] sm:$0xf]
        %v2140 = vld [vmem:[%s365 + $0x18] sm:$0xf]
        %v2141 = vld [vmem:[%s365 + $0x1c] sm:$0xf]
        %v2142 = vunpack.c.l.bf16 %v2134
        %v2143 = vunpack.c.l.bf16 %v2135
        %v2144 = vunpack.c.l.bf16 %v2136
        %v2145 = vunpack.c.l.bf16 %v2137
        %v2146 = vunpack.c.l.bf16 %v2138
        %v2147 = vunpack.c.l.bf16 %v2139
        %v2148 = vunpack.c.l.bf16 %v2140
        %v2149 = vunpack.c.l.bf16 %v2141
        %v2150 = vmul.f32 %v2142, 14.361567
        %v2151 = vmul.f32 %v2143, 14.361567
        %v2152 = vmul.f32 %v2144, 14.361567
        %v2153 = vmul.f32 %v2145, 14.361567
        %v2154 = vmul.f32 %v2146, 14.361567
        %v2155 = vmul.f32 %v2147, 14.361567
        %v2156 = vmul.f32 %v2148, 14.361567
        %v2157 = vmul.f32 %v2149, 14.361567
        %v2159 = vcombine.high %v463, %v463
        %v2161 = vunpack.c.l.s4 1966171168
        %v2162 = vunpack.c.0.s8 %v2161
        %v2163 = vlaneseq
        %v2164 = vshrl.u32 %v2163, 7
        %v2165 = vsub.s32 %v2162, %v2164
        %v2166 = vrot.slane %v463, %v2165
        %v2168 = vunpack.c.l.s4 1966171168
        %v2169 = vunpack.c.0.s8 %v2168
        %v2170 = vlaneseq
        %v2171 = vshrl.u32 %v2170, 7
        %v2172 = vsub.s32 %v2169, %v2171
        %v2173 = vrot.slane %v2159, %v2172
        %v2174 = vcombine.high %v2166, %v2166
        %v2175 = vcombine.high %v2173, %v2173
        %v2177 = vunpack.c.l.s4 1966171168
        %v2178 = vunpack.c.0.s8 %v2177
        %v2179 = vlaneseq
        %v2180 = vshrl.u32 %v2179, 7
        %v2181 = vsub.s32 %v2178, %v2180
        %v2182 = vrot.slane %v2166, %v2181
        %v2184 = vunpack.c.l.s4 1966171168
        %v2185 = vunpack.c.0.s8 %v2184
        %v2186 = vlaneseq
        %v2187 = vshrl.u32 %v2186, 7
        %v2188 = vsub.s32 %v2185, %v2187
        %v2189 = vrot.slane %v2173, %v2188
        %v2191 = vunpack.c.l.s4 1966171168
        %v2192 = vunpack.c.0.s8 %v2191
        %v2193 = vlaneseq
        %v2194 = vshrl.u32 %v2193, 7
        %v2195 = vsub.s32 %v2192, %v2194
        %v2196 = vrot.slane %v2174, %v2195
        %v2198 = vunpack.c.l.s4 1966171168
        %v2199 = vunpack.c.0.s8 %v2198
        %v2200 = vlaneseq
        %v2201 = vshrl.u32 %v2200, 7
        %v2202 = vsub.s32 %v2199, %v2201
        %v2203 = vrot.slane %v2175, %v2202
        %v2204 = vcombine.high %v2182, %v2182
        %v2205 = vcombine.high %v2189, %v2189
        %v2206 = vcombine.high %v2196, %v2196
        %v2207 = vcombine.high %v2203, %v2203
        %v2208 = vlaneseq
        %v2209 = vshrl.u32 %v2208, 7
        %v2210 = vsub.s32 0, %v2209
        %v2211 = vrot.slane %v2182, %v2210
        %v2212 = vlaneseq
        %v2213 = vshrl.u32 %v2212, 7
        %v2214 = vsub.s32 0, %v2213
        %v2215 = vrot.slane %v2196, %v2214
        %v2216 = vlaneseq
        %v2217 = vshrl.u32 %v2216, 7
        %v2218 = vsub.s32 0, %v2217
        %v2219 = vrot.slane %v2204, %v2218
        %v2220 = vlaneseq
        %v2221 = vshrl.u32 %v2220, 7
        %v2222 = vsub.s32 0, %v2221
        %v2223 = vrot.slane %v2206, %v2222
        %v2224 = vlaneseq
        %v2225 = vshrl.u32 %v2224, 7
        %v2226 = vsub.s32 0, %v2225
        %v2227 = vrot.slane %v2189, %v2226
        %v2228 = vlaneseq
        %v2229 = vshrl.u32 %v2228, 7
        %v2230 = vsub.s32 0, %v2229
        %v2231 = vrot.slane %v2203, %v2230
        %v2232 = vlaneseq
        %v2233 = vshrl.u32 %v2232, 7
        %v2234 = vsub.s32 0, %v2233
        %v2235 = vrot.slane %v2205, %v2234
        %v2236 = vlaneseq
        %v2237 = vshrl.u32 %v2236, 7
        %v2238 = vsub.s32 0, %v2237
        %v2239 = vrot.slane %v2207, %v2238
        %v2248 = vadd.f32 %v2150, %v2211
        %v2249 = vadd.f32 %v2151, %v2215
        %v2250 = vadd.f32 %v2152, %v2219
        %v2251 = vadd.f32 %v2153, %v2223
        %v2252 = vadd.f32 %v2154, %v2227
        %v2253 = vadd.f32 %v2155, %v2231
        %v2254 = vadd.f32 %v2156, %v2235
        %v2255 = vadd.f32 %v2157, %v2239
        %v2256 = vand.u32 2147483647, %v2248
        %vm2257 = vcmp.le.f32.partialorder %v2256, 0.7853982
        %vm2258 = vcmp.lt.s32.totalorder %v2248, 0
        %v2259 = vand.u32 %v2248, 2139095040
        %v2260 = vshrl.u32 %v2259, 23
        %v2261 = vsub.s32 %v2260, 127
        %v2262 = vand.u32 2147483647, %v2248
        %v2263 = vand.u32 %v2262, 8388607
        %v2264 = vor.u32 %v2263, 8388608
        %v2265 = vsub.s32 0, %v2264
        %v2266 = vadd.s32 %v2261, 1
        %vm2267 = vcmp.gt.s32.totalorder %v2266, 0
        %v2268 = vsel %vm2267, %v2266, 0
        %v2269 = vshrl.u32 %v2268, 5
        %v2270 = vand.u32 %v2268, 31
        %v2271 = vsub.s32 32, %v2270
        %v2272 = vshrl.u32 683565275, %v2271
        %v2273 = vshll.u32 683565275, %v2270
        %v2274 = vshrl.u32 2475754826, %v2271
        %v2275 = vor.u32 %v2273, %v2274
        %v2276 = vshll.u32 2475754826, %v2270
        %v2277 = vshrl.u32 2131351028, %v2271
        %v2278 = vor.u32 %v2276, %v2277
        %v2279 = vshll.u32 2131351028, %v2270
        %v2280 = vshrl.u32 2102212464, %v2271
        %v2281 = vor.u32 %v2279, %v2280
        %v2282 = vshll.u32 2102212464, %v2270
        %v2283 = vshrl.u32 920167782, %v2271
        %v2284 = vor.u32 %v2282, %v2283
        %v2285 = vshll.u32 920167782, %v2270
        %v2286 = vshrl.u32 1326507024, %v2271
        %v2287 = vor.u32 %v2285, %v2286
        %vm2288 = vcmp.lt.s32.totalorder %v2269, 1
        %vm2289 = vcmp.lt.s32.totalorder %v2269, 2
        %vm2290 = vcmp.lt.s32.totalorder %v2269, 3
        %vm2291 = vcmp.lt.s32.totalorder %v2269, 4
        %v2292 = vsel %vm2288, %v2272, %v2275
        %v2293 = vsel %vm2291, %v2281, 2102212464
        %v2294 = vsel %vm2290, %v2278, %v2293
        %v2295 = vsel %vm2289, %v2292, %v2294
        %v2296 = vsel %vm2288, %v2275, %v2278
        %v2297 = vsel %vm2291, %v2284, 920167782
        %v2298 = vsel %vm2290, %v2281, %v2297
        %v2299 = vsel %vm2289, %v2296, %v2298
        %v2300 = vsel %vm2288, %v2278, %v2281
        %v2301 = vsel %vm2291, %v2287, 1326507024
        %v2302 = vsel %vm2290, %v2284, %v2301
        %v2303 = vsel %vm2289, %v2300, %v2302
        %v2304 = vshll.u32 %v2264, 8
        %v2305 = vmul.u32.u64.compose %v2304, %v2303
        %v2306 = vextract.low.u32 %v2305
        %v2307 = vextract.high.u32 %v2305
        %v2308 = vmul.u32.u64.compose %v2304, %v2299
        %v2309 = vextract.low.u32 %v2308
        %v2310 = vextract.high.u32 %v2308
        %v2311 = vmul.u32 %v2304, %v2295
        %v2312 = vadd.s32 %v2307, %v2309
        %vm2313 = vc.u32 %v2307, %v2309
        %v2314 = vadd.s32 %v2310, 1
        %v2315 = vsel %vm2313, %v2314, %v2310
        %v2316 = vadd.s32 %v2311, %v2315
        %v2317 = vadd.s32 %v2316, 536870912
        %v2318 = vshrl.u32 %v2317, 30
        %v2319 = vshll.u32 %v2318, 30
        %v2320 = vsub.s32 %v2316, %v2319
        %vm2321 = vcmp.lt.s32.totalorder %v2320, 0
        %v2322 = vsub.s32 0, %v2320
        %v2323 = vsel %vm2321, %v2322, %v2320
        %v2324 = vclz %v2323
        %v2325 = vsub.s32 %v2324, 2
        %vm2326 = vcmp.gt.s32.totalorder 0, %v2325
        %v2327 = vsel %vm2326, 0, %v2325
        %v2328 = vsub.s32 32, %v2327
        %v2329 = vshll.u32 %v2320, %v2327
        %v2330 = vshrl.u32 %v2312, %v2328
        %v2331 = vor.u32 %v2329, %v2330
        %v2332 = vsub.s32 4294967266, %v2327
        %v2333 = vadd.s32 %v2332, 127
        %v2334 = vshll.u32 %v2333, 23
        %v2335 = vor.u32 4788187, %v2334
        %v2336 = vand.u32 2147483647, %v2335
        %v2338 = vcvt.s32.f32 %v2331
        %v2339 = vmul.f32 %v2338, %v2336
        %v2340 = vxor.u32 %v2339, 2147483648
        %v2341 = vsel %vm2258, %v2340, %v2339
        %v2342 = vsub.s32 4, %v2318
        %v2343 = vsel %vm2258, %v2342, %v2318
        %v2344 = vsel %vm2257, %v2248, %v2341
        %v2345 = vsel %vm2257, 0, %v2343
        %v2346 = vcosq.f32.pop %v2344
        %v2347 = vsinq.f32.pop %v2344
        %vm2348 = vweird.f32 %v2248
        %v2349 = vadd.s32 %v2345, 3
        %v2350 = vand.u32 %v2349, 3
        %vm2351 = vcmp.lt.s32.totalorder %v2350, 2
        %vm2352 = vcmp.eq.s32.totalorder %v2350, 0
        %v2353 = vxor.u32 %v2347, 2147483648
        %v2354 = vsel %vm2352, %v2346, %v2353
        %vm2355 = vcmp.eq.s32.totalorder %v2350, 2
        %v2356 = vxor.u32 %v2346, 2147483648
        %v2357 = vsel %vm2355, %v2356, %v2347
        %v2358 = vsel %vm2351, %v2354, %v2357
        %v2359 = vsel %vm2348, nan, %v2358
        %v2360 = vand.u32 2147483647, %v2249
        %vm2361 = vcmp.le.f32.partialorder %v2360, 0.7853982
        %vm2362 = vcmp.lt.s32.totalorder %v2249, 0
        %v2363 = vand.u32 %v2249, 2139095040
        %v2364 = vshrl.u32 %v2363, 23
        %v2365 = vsub.s32 %v2364, 127
        %v2366 = vand.u32 2147483647, %v2249
        %v2367 = vand.u32 %v2366, 8388607
        %v2368 = vor.u32 %v2367, 8388608
        %v2369 = vsub.s32 0, %v2368
        %v2370 = vadd.s32 %v2365, 1
        %vm2371 = vcmp.gt.s32.totalorder %v2370, 0
        %v2372 = vsel %vm2371, %v2370, 0
        %v2373 = vshrl.u32 %v2372, 5
        %v2374 = vand.u32 %v2372, 31
        %v2375 = vsub.s32 32, %v2374
        %v2376 = vshrl.u32 683565275, %v2375
        %v2377 = vshll.u32 683565275, %v2374
        %v2378 = vshrl.u32 2475754826, %v2375
        %v2379 = vor.u32 %v2377, %v2378
        %v2380 = vshll.u32 2475754826, %v2374
        %v2381 = vshrl.u32 2131351028, %v2375
        %v2382 = vor.u32 %v2380, %v2381
        %v2383 = vshll.u32 2131351028, %v2374
        %v2384 = vshrl.u32 2102212464, %v2375
        %v2385 = vor.u32 %v2383, %v2384
        %v2386 = vshll.u32 2102212464, %v2374
        %v2387 = vshrl.u32 920167782, %v2375
        %v2388 = vor.u32 %v2386, %v2387
        %v2389 = vshll.u32 920167782, %v2374
        %v2390 = vshrl.u32 1326507024, %v2375
        %v2391 = vor.u32 %v2389, %v2390
        %vm2392 = vcmp.lt.s32.totalorder %v2373, 1
        %vm2393 = vcmp.lt.s32.totalorder %v2373, 2
        %vm2394 = vcmp.lt.s32.totalorder %v2373, 3
        %vm2395 = vcmp.lt.s32.totalorder %v2373, 4
        %v2396 = vsel %vm2392, %v2376, %v2379
        %v2397 = vsel %vm2395, %v2385, 2102212464
        %v2398 = vsel %vm2394, %v2382, %v2397
        %v2399 = vsel %vm2393, %v2396, %v2398
        %v2400 = vsel %vm2392, %v2379, %v2382
        %v2401 = vsel %vm2395, %v2388, 920167782
        %v2402 = vsel %vm2394, %v2385, %v2401
        %v2403 = vsel %vm2393, %v2400, %v2402
        %v2404 = vsel %vm2392, %v2382, %v2385
        %v2405 = vsel %vm2395, %v2391, 1326507024
        %v2406 = vsel %vm2394, %v2388, %v2405
        %v2407 = vsel %vm2393, %v2404, %v2406
        %v2408 = vshll.u32 %v2368, 8
        %v2409 = vmul.u32.u64.compose %v2408, %v2407
        %v2410 = vextract.low.u32 %v2409
        %v2411 = vextract.high.u32 %v2409
        %v2412 = vmul.u32.u64.compose %v2408, %v2403
        %v2413 = vextract.low.u32 %v2412
        %v2414 = vextract.high.u32 %v2412
        %v2415 = vmul.u32 %v2408, %v2399
        %v2416 = vadd.s32 %v2411, %v2413
        %vm2417 = vc.u32 %v2411, %v2413
        %v2418 = vadd.s32 %v2414, 1
        %v2419 = vsel %vm2417, %v2418, %v2414
        %v2420 = vadd.s32 %v2415, %v2419
        %v2421 = vadd.s32 %v2420, 536870912
        %v2422 = vshrl.u32 %v2421, 30
        %v2423 = vshll.u32 %v2422, 30
        %v2424 = vsub.s32 %v2420, %v2423
        %vm2425 = vcmp.lt.s32.totalorder %v2424, 0
        %v2426 = vsub.s32 0, %v2424
        %v2427 = vsel %vm2425, %v2426, %v2424
        %v2428 = vclz %v2427
        %v2429 = vsub.s32 %v2428, 2
        %vm2430 = vcmp.gt.s32.totalorder 0, %v2429
        %v2431 = vsel %vm2430, 0, %v2429
        %v2432 = vsub.s32 32, %v2431
        %v2433 = vshll.u32 %v2424, %v2431
        %v2434 = vshrl.u32 %v2416, %v2432
        %v2435 = vor.u32 %v2433, %v2434
        %v2436 = vsub.s32 4294967266, %v2431
        %v2437 = vadd.s32 %v2436, 127
        %v2438 = vshll.u32 %v2437, 23
        %v2439 = vor.u32 4788187, %v2438
        %v2440 = vand.u32 2147483647, %v2439
        %v2442 = vcvt.s32.f32 %v2435
        %v2443 = vmul.f32 %v2442, %v2440
        %v2444 = vxor.u32 %v2443, 2147483648
        %v2445 = vsel %vm2362, %v2444, %v2443
        %v2446 = vsub.s32 4, %v2422
        %v2447 = vsel %vm2362, %v2446, %v2422
        %v2448 = vsel %vm2361, %v2249, %v2445
        %v2449 = vsel %vm2361, 0, %v2447
        %v2450 = vcosq.f32.pop %v2448
        %v2451 = vsinq.f32.pop %v2448
        %vm2452 = vweird.f32 %v2249
        %v2453 = vadd.s32 %v2449, 3
        %v2454 = vand.u32 %v2453, 3
        %vm2455 = vcmp.lt.s32.totalorder %v2454, 2
        %vm2456 = vcmp.eq.s32.totalorder %v2454, 0
        %v2457 = vxor.u32 %v2451, 2147483648
        %v2458 = vsel %vm2456, %v2450, %v2457
        %vm2459 = vcmp.eq.s32.totalorder %v2454, 2
        %v2460 = vxor.u32 %v2450, 2147483648
        %v2461 = vsel %vm2459, %v2460, %v2451
        %v2462 = vsel %vm2455, %v2458, %v2461
        %v2463 = vsel %vm2452, nan, %v2462
        %v2464 = vand.u32 2147483647, %v2250
        %vm2465 = vcmp.le.f32.partialorder %v2464, 0.7853982
        %vm2466 = vcmp.lt.s32.totalorder %v2250, 0
        %v2467 = vand.u32 %v2250, 2139095040
        %v2468 = vshrl.u32 %v2467, 23
        %v2469 = vsub.s32 %v2468, 127
        %v2470 = vand.u32 2147483647, %v2250
        %v2471 = vand.u32 %v2470, 8388607
        %v2472 = vor.u32 %v2471, 8388608
        %v2473 = vsub.s32 0, %v2472
        %v2474 = vadd.s32 %v2469, 1
        %vm2475 = vcmp.gt.s32.totalorder %v2474, 0
        %v2476 = vsel %vm2475, %v2474, 0
        %v2477 = vshrl.u32 %v2476, 5
        %v2478 = vand.u32 %v2476, 31
        %v2479 = vsub.s32 32, %v2478
        %v2480 = vshrl.u32 683565275, %v2479
        %v2481 = vshll.u32 683565275, %v2478
        %v2482 = vshrl.u32 2475754826, %v2479
        %v2483 = vor.u32 %v2481, %v2482
        %v2484 = vshll.u32 2475754826, %v2478
        %v2485 = vshrl.u32 2131351028, %v2479
        %v2486 = vor.u32 %v2484, %v2485
        %v2487 = vshll.u32 2131351028, %v2478
        %v2488 = vshrl.u32 2102212464, %v2479
        %v2489 = vor.u32 %v2487, %v2488
        %v2490 = vshll.u32 2102212464, %v2478
        %v2491 = vshrl.u32 920167782, %v2479
        %v2492 = vor.u32 %v2490, %v2491
        %v2493 = vshll.u32 920167782, %v2478
        %v2494 = vshrl.u32 1326507024, %v2479
        %v2495 = vor.u32 %v2493, %v2494
        %vm2496 = vcmp.lt.s32.totalorder %v2477, 1
        %vm2497 = vcmp.lt.s32.totalorder %v2477, 2
        %vm2498 = vcmp.lt.s32.totalorder %v2477, 3
        %vm2499 = vcmp.lt.s32.totalorder %v2477, 4
        %v2500 = vsel %vm2496, %v2480, %v2483
        %v2501 = vsel %vm2499, %v2489, 2102212464
        %v2502 = vsel %vm2498, %v2486, %v2501
        %v2503 = vsel %vm2497, %v2500, %v2502
        %v2504 = vsel %vm2496, %v2483, %v2486
        %v2505 = vsel %vm2499, %v2492, 920167782
        %v2506 = vsel %vm2498, %v2489, %v2505
        %v2507 = vsel %vm2497, %v2504, %v2506
        %v2508 = vsel %vm2496, %v2486, %v2489
        %v2509 = vsel %vm2499, %v2495, 1326507024
        %v2510 = vsel %vm2498, %v2492, %v2509
        %v2511 = vsel %vm2497, %v2508, %v2510
        %v2512 = vshll.u32 %v2472, 8
        %v2513 = vmul.u32.u64.compose %v2512, %v2511
        %v2514 = vextract.low.u32 %v2513
        %v2515 = vextract.high.u32 %v2513
        %v2516 = vmul.u32.u64.compose %v2512, %v2507
        %v2517 = vextract.low.u32 %v2516
        %v2518 = vextract.high.u32 %v2516
        %v2519 = vmul.u32 %v2512, %v2503
        %v2520 = vadd.s32 %v2515, %v2517
        %vm2521 = vc.u32 %v2515, %v2517
        %v2522 = vadd.s32 %v2518, 1
        %v2523 = vsel %vm2521, %v2522, %v2518
        %v2524 = vadd.s32 %v2519, %v2523
        %v2525 = vadd.s32 %v2524, 536870912
        %v2526 = vshrl.u32 %v2525, 30
        %v2527 = vshll.u32 %v2526, 30
        %v2528 = vsub.s32 %v2524, %v2527
        %vm2529 = vcmp.lt.s32.totalorder %v2528, 0
        %v2530 = vsub.s32 0, %v2528
        %v2531 = vsel %vm2529, %v2530, %v2528
        %v2532 = vclz %v2531
        %v2533 = vsub.s32 %v2532, 2
        %vm2534 = vcmp.gt.s32.totalorder 0, %v2533
        %v2535 = vsel %vm2534, 0, %v2533
        %v2536 = vsub.s32 32, %v2535
        %v2537 = vshll.u32 %v2528, %v2535
        %v2538 = vshrl.u32 %v2520, %v2536
        %v2539 = vor.u32 %v2537, %v2538
        %v2540 = vsub.s32 4294967266, %v2535
        %v2541 = vadd.s32 %v2540, 127
        %v2542 = vshll.u32 %v2541, 23
        %v2543 = vor.u32 4788187, %v2542
        %v2544 = vand.u32 2147483647, %v2543
        %v2546 = vcvt.s32.f32 %v2539
        %v2547 = vmul.f32 %v2546, %v2544
        %v2548 = vxor.u32 %v2547, 2147483648
        %v2549 = vsel %vm2466, %v2548, %v2547
        %v2550 = vsub.s32 4, %v2526
        %v2551 = vsel %vm2466, %v2550, %v2526
        %v2552 = vsel %vm2465, %v2250, %v2549
        %v2553 = vsel %vm2465, 0, %v2551
        %v2554 = vcosq.f32.pop %v2552
        %v2555 = vsinq.f32.pop %v2552
        %vm2556 = vweird.f32 %v2250
        %v2557 = vadd.s32 %v2553, 3
        %v2558 = vand.u32 %v2557, 3
        %vm2559 = vcmp.lt.s32.totalorder %v2558, 2
        %vm2560 = vcmp.eq.s32.totalorder %v2558, 0
        %v2561 = vxor.u32 %v2555, 2147483648
        %v2562 = vsel %vm2560, %v2554, %v2561
        %vm2563 = vcmp.eq.s32.totalorder %v2558, 2
        %v2564 = vxor.u32 %v2554, 2147483648
        %v2565 = vsel %vm2563, %v2564, %v2555
        %v2566 = vsel %vm2559, %v2562, %v2565
        %v2567 = vsel %vm2556, nan, %v2566
        %v2568 = vand.u32 2147483647, %v2251
        %vm2569 = vcmp.le.f32.partialorder %v2568, 0.7853982
        %vm2570 = vcmp.lt.s32.totalorder %v2251, 0
        %v2571 = vand.u32 %v2251, 2139095040
        %v2572 = vshrl.u32 %v2571, 23
        %v2573 = vsub.s32 %v2572, 127
        %v2574 = vand.u32 2147483647, %v2251
        %v2575 = vand.u32 %v2574, 8388607
        %v2576 = vor.u32 %v2575, 8388608
        %v2577 = vsub.s32 0, %v2576
        %v2578 = vadd.s32 %v2573, 1
        %vm2579 = vcmp.gt.s32.totalorder %v2578, 0
        %v2580 = vsel %vm2579, %v2578, 0
        %v2581 = vshrl.u32 %v2580, 5
        %v2582 = vand.u32 %v2580, 31
        %v2583 = vsub.s32 32, %v2582
        %v2584 = vshrl.u32 683565275, %v2583
        %v2585 = vshll.u32 683565275, %v2582
        %v2586 = vshrl.u32 2475754826, %v2583
        %v2587 = vor.u32 %v2585, %v2586
        %v2588 = vshll.u32 2475754826, %v2582
        %v2589 = vshrl.u32 2131351028, %v2583
        %v2590 = vor.u32 %v2588, %v2589
        %v2591 = vshll.u32 2131351028, %v2582
        %v2592 = vshrl.u32 2102212464, %v2583
        %v2593 = vor.u32 %v2591, %v2592
        %v2594 = vshll.u32 2102212464, %v2582
        %v2595 = vshrl.u32 920167782, %v2583
        %v2596 = vor.u32 %v2594, %v2595
        %v2597 = vshll.u32 920167782, %v2582
        %v2598 = vshrl.u32 1326507024, %v2583
        %v2599 = vor.u32 %v2597, %v2598
        %vm2600 = vcmp.lt.s32.totalorder %v2581, 1
        %vm2601 = vcmp.lt.s32.totalorder %v2581, 2
        %vm2602 = vcmp.lt.s32.totalorder %v2581, 3
        %vm2603 = vcmp.lt.s32.totalorder %v2581, 4
        %v2604 = vsel %vm2600, %v2584, %v2587
        %v2605 = vsel %vm2603, %v2593, 2102212464
        %v2606 = vsel %vm2602, %v2590, %v2605
        %v2607 = vsel %vm2601, %v2604, %v2606
        %v2608 = vsel %vm2600, %v2587, %v2590
        %v2609 = vsel %vm2603, %v2596, 920167782
        %v2610 = vsel %vm2602, %v2593, %v2609
        %v2611 = vsel %vm2601, %v2608, %v2610
        %v2612 = vsel %vm2600, %v2590, %v2593
        %v2613 = vsel %vm2603, %v2599, 1326507024
        %v2614 = vsel %vm2602, %v2596, %v2613
        %v2615 = vsel %vm2601, %v2612, %v2614
        %v2616 = vshll.u32 %v2576, 8
        %v2617 = vmul.u32.u64.compose %v2616, %v2615
        %v2618 = vextract.low.u32 %v2617
        %v2619 = vextract.high.u32 %v2617
        %v2620 = vmul.u32.u64.compose %v2616, %v2611
        %v2621 = vextract.low.u32 %v2620
        %v2622 = vextract.high.u32 %v2620
        %v2623 = vmul.u32 %v2616, %v2607
        %v2624 = vadd.s32 %v2619, %v2621
        %vm2625 = vc.u32 %v2619, %v2621
        %v2626 = vadd.s32 %v2622, 1
        %v2627 = vsel %vm2625, %v2626, %v2622
        %v2628 = vadd.s32 %v2623, %v2627
        %v2629 = vadd.s32 %v2628, 536870912
        %v2630 = vshrl.u32 %v2629, 30
        %v2631 = vshll.u32 %v2630, 30
        %v2632 = vsub.s32 %v2628, %v2631
        %vm2633 = vcmp.lt.s32.totalorder %v2632, 0
        %v2634 = vsub.s32 0, %v2632
        %v2635 = vsel %vm2633, %v2634, %v2632
        %v2636 = vclz %v2635
        %v2637 = vsub.s32 %v2636, 2
        %vm2638 = vcmp.gt.s32.totalorder 0, %v2637
        %v2639 = vsel %vm2638, 0, %v2637
        %v2640 = vsub.s32 32, %v2639
        %v2641 = vshll.u32 %v2632, %v2639
        %v2642 = vshrl.u32 %v2624, %v2640
        %v2643 = vor.u32 %v2641, %v2642
        %v2644 = vsub.s32 4294967266, %v2639
        %v2645 = vadd.s32 %v2644, 127
        %v2646 = vshll.u32 %v2645, 23
        %v2647 = vor.u32 4788187, %v2646
        %v2648 = vand.u32 2147483647, %v2647
        %v2650 = vcvt.s32.f32 %v2643
        %v2651 = vmul.f32 %v2650, %v2648
        %v2652 = vxor.u32 %v2651, 2147483648
        %v2653 = vsel %vm2570, %v2652, %v2651
        %v2654 = vsub.s32 4, %v2630
        %v2655 = vsel %vm2570, %v2654, %v2630
        %v2656 = vsel %vm2569, %v2251, %v2653
        %v2657 = vsel %vm2569, 0, %v2655
        %v2658 = vcosq.f32.pop %v2656
        %v2659 = vsinq.f32.pop %v2656
        %vm2660 = vweird.f32 %v2251
        %v2661 = vadd.s32 %v2657, 3
        %v2662 = vand.u32 %v2661, 3
        %vm2663 = vcmp.lt.s32.totalorder %v2662, 2
        %vm2664 = vcmp.eq.s32.totalorder %v2662, 0
        %v2665 = vxor.u32 %v2659, 2147483648
        %v2666 = vsel %vm2664, %v2658, %v2665
        %vm2667 = vcmp.eq.s32.totalorder %v2662, 2
        %v2668 = vxor.u32 %v2658, 2147483648
        %v2669 = vsel %vm2667, %v2668, %v2659
        %v2670 = vsel %vm2663, %v2666, %v2669
        %v2671 = vsel %vm2660, nan, %v2670
        %v2672 = vand.u32 2147483647, %v2252
        %vm2673 = vcmp.le.f32.partialorder %v2672, 0.7853982
        %vm2674 = vcmp.lt.s32.totalorder %v2252, 0
        %v2675 = vand.u32 %v2252, 2139095040
        %v2676 = vshrl.u32 %v2675, 23
        %v2677 = vsub.s32 %v2676, 127
        %v2678 = vand.u32 2147483647, %v2252
        %v2679 = vand.u32 %v2678, 8388607
        %v2680 = vor.u32 %v2679, 8388608
        %v2681 = vsub.s32 0, %v2680
        %v2682 = vadd.s32 %v2677, 1
        %vm2683 = vcmp.gt.s32.totalorder %v2682, 0
        %v2684 = vsel %vm2683, %v2682, 0
        %v2685 = vshrl.u32 %v2684, 5
        %v2686 = vand.u32 %v2684, 31
        %v2687 = vsub.s32 32, %v2686
        %v2688 = vshrl.u32 683565275, %v2687
        %v2689 = vshll.u32 683565275, %v2686
        %v2690 = vshrl.u32 2475754826, %v2687
        %v2691 = vor.u32 %v2689, %v2690
        %v2692 = vshll.u32 2475754826, %v2686
        %v2693 = vshrl.u32 2131351028, %v2687
        %v2694 = vor.u32 %v2692, %v2693
        %v2695 = vshll.u32 2131351028, %v2686
        %v2696 = vshrl.u32 2102212464, %v2687
        %v2697 = vor.u32 %v2695, %v2696
        %v2698 = vshll.u32 2102212464, %v2686
        %v2699 = vshrl.u32 920167782, %v2687
        %v2700 = vor.u32 %v2698, %v2699
        %v2701 = vshll.u32 920167782, %v2686
        %v2702 = vshrl.u32 1326507024, %v2687
        %v2703 = vor.u32 %v2701, %v2702
        %vm2704 = vcmp.lt.s32.totalorder %v2685, 1
        %vm2705 = vcmp.lt.s32.totalorder %v2685, 2
        %vm2706 = vcmp.lt.s32.totalorder %v2685, 3
        %vm2707 = vcmp.lt.s32.totalorder %v2685, 4
        %v2708 = vsel %vm2704, %v2688, %v2691
        %v2709 = vsel %vm2707, %v2697, 2102212464
        %v2710 = vsel %vm2706, %v2694, %v2709
        %v2711 = vsel %vm2705, %v2708, %v2710
        %v2712 = vsel %vm2704, %v2691, %v2694
        %v2713 = vsel %vm2707, %v2700, 920167782
        %v2714 = vsel %vm2706, %v2697, %v2713
        %v2715 = vsel %vm2705, %v2712, %v2714
        %v2716 = vsel %vm2704, %v2694, %v2697
        %v2717 = vsel %vm2707, %v2703, 1326507024
        %v2718 = vsel %vm2706, %v2700, %v2717
        %v2719 = vsel %vm2705, %v2716, %v2718
        %v2720 = vshll.u32 %v2680, 8
        %v2721 = vmul.u32.u64.compose %v2720, %v2719
        %v2722 = vextract.low.u32 %v2721
        %v2723 = vextract.high.u32 %v2721
        %v2724 = vmul.u32.u64.compose %v2720, %v2715
        %v2725 = vextract.low.u32 %v2724
        %v2726 = vextract.high.u32 %v2724
        %v2727 = vmul.u32 %v2720, %v2711
        %v2728 = vadd.s32 %v2723, %v2725
        %vm2729 = vc.u32 %v2723, %v2725
        %v2730 = vadd.s32 %v2726, 1
        %v2731 = vsel %vm2729, %v2730, %v2726
        %v2732 = vadd.s32 %v2727, %v2731
        %v2733 = vadd.s32 %v2732, 536870912
        %v2734 = vshrl.u32 %v2733, 30
        %v2735 = vshll.u32 %v2734, 30
        %v2736 = vsub.s32 %v2732, %v2735
        %vm2737 = vcmp.lt.s32.totalorder %v2736, 0
        %v2738 = vsub.s32 0, %v2736
        %v2739 = vsel %vm2737, %v2738, %v2736
        %v2740 = vclz %v2739
        %v2741 = vsub.s32 %v2740, 2
        %vm2742 = vcmp.gt.s32.totalorder 0, %v2741
        %v2743 = vsel %vm2742, 0, %v2741
        %v2744 = vsub.s32 32, %v2743
        %v2745 = vshll.u32 %v2736, %v2743
        %v2746 = vshrl.u32 %v2728, %v2744
        %v2747 = vor.u32 %v2745, %v2746
        %v2748 = vsub.s32 4294967266, %v2743
        %v2749 = vadd.s32 %v2748, 127
        %v2750 = vshll.u32 %v2749, 23
        %v2751 = vor.u32 4788187, %v2750
        %v2752 = vand.u32 2147483647, %v2751
        %v2754 = vcvt.s32.f32 %v2747
        %v2755 = vmul.f32 %v2754, %v2752
        %v2756 = vxor.u32 %v2755, 2147483648
        %v2757 = vsel %vm2674, %v2756, %v2755
        %v2758 = vsub.s32 4, %v2734
        %v2759 = vsel %vm2674, %v2758, %v2734
        %v2760 = vsel %vm2673, %v2252, %v2757
        %v2761 = vsel %vm2673, 0, %v2759
        %v2762 = vcosq.f32.pop %v2760
        %v2763 = vsinq.f32.pop %v2760
        %vm2764 = vweird.f32 %v2252
        %v2765 = vadd.s32 %v2761, 3
        %v2766 = vand.u32 %v2765, 3
        %vm2767 = vcmp.lt.s32.totalorder %v2766, 2
        %vm2768 = vcmp.eq.s32.totalorder %v2766, 0
        %v2769 = vxor.u32 %v2763, 2147483648
        %v2770 = vsel %vm2768, %v2762, %v2769
        %vm2771 = vcmp.eq.s32.totalorder %v2766, 2
        %v2772 = vxor.u32 %v2762, 2147483648
        %v2773 = vsel %vm2771, %v2772, %v2763
        %v2774 = vsel %vm2767, %v2770, %v2773
        %v2775 = vsel %vm2764, nan, %v2774
        %v2776 = vand.u32 2147483647, %v2253
        %vm2777 = vcmp.le.f32.partialorder %v2776, 0.7853982
        %vm2778 = vcmp.lt.s32.totalorder %v2253, 0
        %v2779 = vand.u32 %v2253, 2139095040
        %v2780 = vshrl.u32 %v2779, 23
        %v2781 = vsub.s32 %v2780, 127
        %v2782 = vand.u32 2147483647, %v2253
        %v2783 = vand.u32 %v2782, 8388607
        %v2784 = vor.u32 %v2783, 8388608
        %v2785 = vsub.s32 0, %v2784
        %v2786 = vadd.s32 %v2781, 1
        %vm2787 = vcmp.gt.s32.totalorder %v2786, 0
        %v2788 = vsel %vm2787, %v2786, 0
        %v2789 = vshrl.u32 %v2788, 5
        %v2790 = vand.u32 %v2788, 31
        %v2791 = vsub.s32 32, %v2790
        %v2792 = vshrl.u32 683565275, %v2791
        %v2793 = vshll.u32 683565275, %v2790
        %v2794 = vshrl.u32 2475754826, %v2791
        %v2795 = vor.u32 %v2793, %v2794
        %v2796 = vshll.u32 2475754826, %v2790
        %v2797 = vshrl.u32 2131351028, %v2791
        %v2798 = vor.u32 %v2796, %v2797
        %v2799 = vshll.u32 2131351028, %v2790
        %v2800 = vshrl.u32 2102212464, %v2791
        %v2801 = vor.u32 %v2799, %v2800
        %v2802 = vshll.u32 2102212464, %v2790
        %v2803 = vshrl.u32 920167782, %v2791
        %v2804 = vor.u32 %v2802, %v2803
        %v2805 = vshll.u32 920167782, %v2790
        %v2806 = vshrl.u32 1326507024, %v2791
        %v2807 = vor.u32 %v2805, %v2806
        %vm2808 = vcmp.lt.s32.totalorder %v2789, 1
        %vm2809 = vcmp.lt.s32.totalorder %v2789, 2
        %vm2810 = vcmp.lt.s32.totalorder %v2789, 3
        %vm2811 = vcmp.lt.s32.totalorder %v2789, 4
        %v2812 = vsel %vm2808, %v2792, %v2795
        %v2813 = vsel %vm2811, %v2801, 2102212464
        %v2814 = vsel %vm2810, %v2798, %v2813
        %v2815 = vsel %vm2809, %v2812, %v2814
        %v2816 = vsel %vm2808, %v2795, %v2798
        %v2817 = vsel %vm2811, %v2804, 920167782
        %v2818 = vsel %vm2810, %v2801, %v2817
        %v2819 = vsel %vm2809, %v2816, %v2818
        %v2820 = vsel %vm2808, %v2798, %v2801
        %v2821 = vsel %vm2811, %v2807, 1326507024
        %v2822 = vsel %vm2810, %v2804, %v2821
        %v2823 = vsel %vm2809, %v2820, %v2822
        %v2824 = vshll.u32 %v2784, 8
        %v2825 = vmul.u32.u64.compose %v2824, %v2823
        %v2826 = vextract.low.u32 %v2825
        %v2827 = vextract.high.u32 %v2825
        %v2828 = vmul.u32.u64.compose %v2824, %v2819
        %v2829 = vextract.low.u32 %v2828
        %v2830 = vextract.high.u32 %v2828
        %v2831 = vmul.u32 %v2824, %v2815
        %v2832 = vadd.s32 %v2827, %v2829
        %vm2833 = vc.u32 %v2827, %v2829
        %v2834 = vadd.s32 %v2830, 1
        %v2835 = vsel %vm2833, %v2834, %v2830
        %v2836 = vadd.s32 %v2831, %v2835
        %v2837 = vadd.s32 %v2836, 536870912
        %v2838 = vshrl.u32 %v2837, 30
        %v2839 = vshll.u32 %v2838, 30
        %v2840 = vsub.s32 %v2836, %v2839
        %vm2841 = vcmp.lt.s32.totalorder %v2840, 0
        %v2842 = vsub.s32 0, %v2840
        %v2843 = vsel %vm2841, %v2842, %v2840
        %v2844 = vclz %v2843
        %v2845 = vsub.s32 %v2844, 2
        %vm2846 = vcmp.gt.s32.totalorder 0, %v2845
        %v2847 = vsel %vm2846, 0, %v2845
        %v2848 = vsub.s32 32, %v2847
        %v2849 = vshll.u32 %v2840, %v2847
        %v2850 = vshrl.u32 %v2832, %v2848
        %v2851 = vor.u32 %v2849, %v2850
        %v2852 = vsub.s32 4294967266, %v2847
        %v2853 = vadd.s32 %v2852, 127
        %v2854 = vshll.u32 %v2853, 23
        %v2855 = vor.u32 4788187, %v2854
        %v2856 = vand.u32 2147483647, %v2855
        %v2858 = vcvt.s32.f32 %v2851
        %v2859 = vmul.f32 %v2858, %v2856
        %v2860 = vxor.u32 %v2859, 2147483648
        %v2861 = vsel %vm2778, %v2860, %v2859
        %v2862 = vsub.s32 4, %v2838
        %v2863 = vsel %vm2778, %v2862, %v2838
        %v2864 = vsel %vm2777, %v2253, %v2861
        %v2865 = vsel %vm2777, 0, %v2863
        %v2866 = vcosq.f32.pop %v2864
        %v2867 = vsinq.f32.pop %v2864
        %vm2868 = vweird.f32 %v2253
        %v2869 = vadd.s32 %v2865, 3
        %v2870 = vand.u32 %v2869, 3
        %vm2871 = vcmp.lt.s32.totalorder %v2870, 2
        %vm2872 = vcmp.eq.s32.totalorder %v2870, 0
        %v2873 = vxor.u32 %v2867, 2147483648
        %v2874 = vsel %vm2872, %v2866, %v2873
        %vm2875 = vcmp.eq.s32.totalorder %v2870, 2
        %v2876 = vxor.u32 %v2866, 2147483648
        %v2877 = vsel %vm2875, %v2876, %v2867
        %v2878 = vsel %vm2871, %v2874, %v2877
        %v2879 = vsel %vm2868, nan, %v2878
        %v2880 = vand.u32 2147483647, %v2254
        %vm2881 = vcmp.le.f32.partialorder %v2880, 0.7853982
        %vm2882 = vcmp.lt.s32.totalorder %v2254, 0
        %v2883 = vand.u32 %v2254, 2139095040
        %v2884 = vshrl.u32 %v2883, 23
        %v2885 = vsub.s32 %v2884, 127
        %v2886 = vand.u32 2147483647, %v2254
        %v2887 = vand.u32 %v2886, 8388607
        %v2888 = vor.u32 %v2887, 8388608
        %v2889 = vsub.s32 0, %v2888
        %v2890 = vadd.s32 %v2885, 1
        %vm2891 = vcmp.gt.s32.totalorder %v2890, 0
        %v2892 = vsel %vm2891, %v2890, 0
        %v2893 = vshrl.u32 %v2892, 5
        %v2894 = vand.u32 %v2892, 31
        %v2895 = vsub.s32 32, %v2894
        %v2896 = vshrl.u32 683565275, %v2895
        %v2897 = vshll.u32 683565275, %v2894
        %v2898 = vshrl.u32 2475754826, %v2895
        %v2899 = vor.u32 %v2897, %v2898
        %v2900 = vshll.u32 2475754826, %v2894
        %v2901 = vshrl.u32 2131351028, %v2895
        %v2902 = vor.u32 %v2900, %v2901
        %v2903 = vshll.u32 2131351028, %v2894
        %v2904 = vshrl.u32 2102212464, %v2895
        %v2905 = vor.u32 %v2903, %v2904
        %v2906 = vshll.u32 2102212464, %v2894
        %v2907 = vshrl.u32 920167782, %v2895
        %v2908 = vor.u32 %v2906, %v2907
        %v2909 = vshll.u32 920167782, %v2894
        %v2910 = vshrl.u32 1326507024, %v2895
        %v2911 = vor.u32 %v2909, %v2910
        %vm2912 = vcmp.lt.s32.totalorder %v2893, 1
        %vm2913 = vcmp.lt.s32.totalorder %v2893, 2
        %vm2914 = vcmp.lt.s32.totalorder %v2893, 3
        %vm2915 = vcmp.lt.s32.totalorder %v2893, 4
        %v2916 = vsel %vm2912, %v2896, %v2899
        %v2917 = vsel %vm2915, %v2905, 2102212464
        %v2918 = vsel %vm2914, %v2902, %v2917
        %v2919 = vsel %vm2913, %v2916, %v2918
        %v2920 = vsel %vm2912, %v2899, %v2902
        %v2921 = vsel %vm2915, %v2908, 920167782
        %v2922 = vsel %vm2914, %v2905, %v2921
        %v2923 = vsel %vm2913, %v2920, %v2922
        %v2924 = vsel %vm2912, %v2902, %v2905
        %v2925 = vsel %vm2915, %v2911, 1326507024
        %v2926 = vsel %vm2914, %v2908, %v2925
        %v2927 = vsel %vm2913, %v2924, %v2926
        %v2928 = vshll.u32 %v2888, 8
        %v2929 = vmul.u32.u64.compose %v2928, %v2927
        %v2930 = vextract.low.u32 %v2929
        %v2931 = vextract.high.u32 %v2929
        %v2932 = vmul.u32.u64.compose %v2928, %v2923
        %v2933 = vextract.low.u32 %v2932
        %v2934 = vextract.high.u32 %v2932
        %v2935 = vmul.u32 %v2928, %v2919
        %v2936 = vadd.s32 %v2931, %v2933
        %vm2937 = vc.u32 %v2931, %v2933
        %v2938 = vadd.s32 %v2934, 1
        %v2939 = vsel %vm2937, %v2938, %v2934
        %v2940 = vadd.s32 %v2935, %v2939
        %v2941 = vadd.s32 %v2940, 536870912
        %v2942 = vshrl.u32 %v2941, 30
        %v2943 = vshll.u32 %v2942, 30
        %v2944 = vsub.s32 %v2940, %v2943
        %vm2945 = vcmp.lt.s32.totalorder %v2944, 0
        %v2946 = vsub.s32 0, %v2944
        %v2947 = vsel %vm2945, %v2946, %v2944
        %v2948 = vclz %v2947
        %v2949 = vsub.s32 %v2948, 2
        %vm2950 = vcmp.gt.s32.totalorder 0, %v2949
        %v2951 = vsel %vm2950, 0, %v2949
        %v2952 = vsub.s32 32, %v2951
        %v2953 = vshll.u32 %v2944, %v2951
        %v2954 = vshrl.u32 %v2936, %v2952
        %v2955 = vor.u32 %v2953, %v2954
        %v2956 = vsub.s32 4294967266, %v2951
        %v2957 = vadd.s32 %v2956, 127
        %v2958 = vshll.u32 %v2957, 23
        %v2959 = vor.u32 4788187, %v2958
        %v2960 = vand.u32 2147483647, %v2959
        %v2962 = vcvt.s32.f32 %v2955
        %v2963 = vmul.f32 %v2962, %v2960
        %v2964 = vxor.u32 %v2963, 2147483648
        %v2965 = vsel %vm2882, %v2964, %v2963
        %v2966 = vsub.s32 4, %v2942
        %v2967 = vsel %vm2882, %v2966, %v2942
        %v2968 = vsel %vm2881, %v2254, %v2965
        %v2969 = vsel %vm2881, 0, %v2967
        %v2970 = vcosq.f32.pop %v2968
        %v2971 = vsinq.f32.pop %v2968
        %vm2972 = vweird.f32 %v2254
        %v2973 = vadd.s32 %v2969, 3
        %v2974 = vand.u32 %v2973, 3
        %vm2975 = vcmp.lt.s32.totalorder %v2974, 2
        %vm2976 = vcmp.eq.s32.totalorder %v2974, 0
        %v2977 = vxor.u32 %v2971, 2147483648
        %v2978 = vsel %vm2976, %v2970, %v2977
        %vm2979 = vcmp.eq.s32.totalorder %v2974, 2
        %v2980 = vxor.u32 %v2970, 2147483648
        %v2981 = vsel %vm2979, %v2980, %v2971
        %v2982 = vsel %vm2975, %v2978, %v2981
        %v2983 = vsel %vm2972, nan, %v2982
        %v2984 = vand.u32 2147483647, %v2255
        %vm2985 = vcmp.le.f32.partialorder %v2984, 0.7853982
        %vm2986 = vcmp.lt.s32.totalorder %v2255, 0
        %v2987 = vand.u32 %v2255, 2139095040
        %v2988 = vshrl.u32 %v2987, 23
        %v2989 = vsub.s32 %v2988, 127
        %v2990 = vand.u32 2147483647, %v2255
        %v2991 = vand.u32 %v2990, 8388607
        %v2992 = vor.u32 %v2991, 8388608
        %v2993 = vsub.s32 0, %v2992
        %v2994 = vadd.s32 %v2989, 1
        %vm2995 = vcmp.gt.s32.totalorder %v2994, 0
        %v2996 = vsel %vm2995, %v2994, 0
        %v2997 = vshrl.u32 %v2996, 5
        %v2998 = vand.u32 %v2996, 31
        %v2999 = vsub.s32 32, %v2998
        %v3000 = vshrl.u32 683565275, %v2999
        %v3001 = vshll.u32 683565275, %v2998
        %v3002 = vshrl.u32 2475754826, %v2999
        %v3003 = vor.u32 %v3001, %v3002
        %v3004 = vshll.u32 2475754826, %v2998
        %v3005 = vshrl.u32 2131351028, %v2999
        %v3006 = vor.u32 %v3004, %v3005
        %v3007 = vshll.u32 2131351028, %v2998
        %v3008 = vshrl.u32 2102212464, %v2999
        %v3009 = vor.u32 %v3007, %v3008
        %v3010 = vshll.u32 2102212464, %v2998
        %v3011 = vshrl.u32 920167782, %v2999
        %v3012 = vor.u32 %v3010, %v3011
        %v3013 = vshll.u32 920167782, %v2998
        %v3014 = vshrl.u32 1326507024, %v2999
        %v3015 = vor.u32 %v3013, %v3014
        %vm3016 = vcmp.lt.s32.totalorder %v2997, 1
        %vm3017 = vcmp.lt.s32.totalorder %v2997, 2
        %vm3018 = vcmp.lt.s32.totalorder %v2997, 3
        %vm3019 = vcmp.lt.s32.totalorder %v2997, 4
        %v3020 = vsel %vm3016, %v3000, %v3003
        %v3021 = vsel %vm3019, %v3009, 2102212464
        %v3022 = vsel %vm3018, %v3006, %v3021
        %v3023 = vsel %vm3017, %v3020, %v3022
        %v3024 = vsel %vm3016, %v3003, %v3006
        %v3025 = vsel %vm3019, %v3012, 920167782
        %v3026 = vsel %vm3018, %v3009, %v3025
        %v3027 = vsel %vm3017, %v3024, %v3026
        %v3028 = vsel %vm3016, %v3006, %v3009
        %v3029 = vsel %vm3019, %v3015, 1326507024
        %v3030 = vsel %vm3018, %v3012, %v3029
        %v3031 = vsel %vm3017, %v3028, %v3030
        %v3032 = vshll.u32 %v2992, 8
        %v3033 = vmul.u32.u64.compose %v3032, %v3031
        %v3034 = vextract.low.u32 %v3033
        %v3035 = vextract.high.u32 %v3033
        %v3036 = vmul.u32.u64.compose %v3032, %v3027
        %v3037 = vextract.low.u32 %v3036
        %v3038 = vextract.high.u32 %v3036
        %v3039 = vmul.u32 %v3032, %v3023
        %v3040 = vadd.s32 %v3035, %v3037
        %vm3041 = vc.u32 %v3035, %v3037
        %v3042 = vadd.s32 %v3038, 1
        %v3043 = vsel %vm3041, %v3042, %v3038
        %v3044 = vadd.s32 %v3039, %v3043
        %v3045 = vadd.s32 %v3044, 536870912
        %v3046 = vshrl.u32 %v3045, 30
        %v3047 = vshll.u32 %v3046, 30
        %v3048 = vsub.s32 %v3044, %v3047
        %vm3049 = vcmp.lt.s32.totalorder %v3048, 0
        %v3050 = vsub.s32 0, %v3048
        %v3051 = vsel %vm3049, %v3050, %v3048
        %v3052 = vclz %v3051
        %v3053 = vsub.s32 %v3052, 2
        %vm3054 = vcmp.gt.s32.totalorder 0, %v3053
        %v3055 = vsel %vm3054, 0, %v3053
        %v3056 = vsub.s32 32, %v3055
        %v3057 = vshll.u32 %v3048, %v3055
        %v3058 = vshrl.u32 %v3040, %v3056
        %v3059 = vor.u32 %v3057, %v3058
        %v3060 = vsub.s32 4294967266, %v3055
        %v3061 = vadd.s32 %v3060, 127
        %v3062 = vshll.u32 %v3061, 23
        %v3063 = vor.u32 4788187, %v3062
        %v3064 = vand.u32 2147483647, %v3063
        %v3066 = vcvt.s32.f32 %v3059
        %v3067 = vmul.f32 %v3066, %v3064
        %v3068 = vxor.u32 %v3067, 2147483648
        %v3069 = vsel %vm2986, %v3068, %v3067
        %v3070 = vsub.s32 4, %v3046
        %v3071 = vsel %vm2986, %v3070, %v3046
        %v3072 = vsel %vm2985, %v2255, %v3069
        %v3073 = vsel %vm2985, 0, %v3071
        %v3074 = vcosq.f32.pop %v3072
        %v3075 = vsinq.f32.pop %v3072
        %vm3076 = vweird.f32 %v2255
        %v3077 = vadd.s32 %v3073, 3
        %v3078 = vand.u32 %v3077, 3
        %vm3079 = vcmp.lt.s32.totalorder %v3078, 2
        %vm3080 = vcmp.eq.s32.totalorder %v3078, 0
        %v3081 = vxor.u32 %v3075, 2147483648
        %v3082 = vsel %vm3080, %v3074, %v3081
        %vm3083 = vcmp.eq.s32.totalorder %v3078, 2
        %v3084 = vxor.u32 %v3074, 2147483648
        %v3085 = vsel %vm3083, %v3084, %v3075
        %v3086 = vsel %vm3079, %v3082, %v3085
        %v3087 = vsel %vm3076, nan, %v3086
        %v3088 = vand.u32 2147483647, %v2359
        %v3089 = vand.u32 2147483647, %v2463
        %v3090 = vand.u32 2147483647, %v2567
        %v3091 = vand.u32 2147483647, %v2671
        %v3092 = vand.u32 2147483647, %v2775
        %v3093 = vand.u32 2147483647, %v2879
        %v3094 = vand.u32 2147483647, %v2983
        %v3095 = vand.u32 2147483647, %v3087
        %3096 = vadd.xlane.f32.xlu0 %v3088
        %v3097 = vpop.xlane.xlu0 %3096
        %3098 = vadd.xlane.f32.xlu0 %v3089
        %v3099 = vpop.xlane.xlu0 %3098
        %3100 = vadd.xlane.f32.xlu0 %v3090
        %v3101 = vpop.xlane.xlu0 %3100
        %3102 = vadd.xlane.f32.xlu0 %v3091
        %v3103 = vpop.xlane.xlu0 %3102
        %3104 = vadd.xlane.f32.xlu0 %v3092
        %v3105 = vpop.xlane.xlu0 %3104
        %3106 = vadd.xlane.f32.xlu0 %v3093
        %v3107 = vpop.xlane.xlu0 %3106
        %3108 = vadd.xlane.f32.xlu0 %v3094
        %v3109 = vpop.xlane.xlu0 %3108
        %3110 = vadd.xlane.f32.xlu0 %v3095
        %v3111 = vpop.xlane.xlu0 %3110
        %v3112 = vmul.f32 %v3097, 0.0546875
        %v3113 = vmul.f32 %v3099, 0.0546875
        %v3114 = vmul.f32 %v3101, 0.0546875
        %v3115 = vmul.f32 %v3103, 0.0546875
        %v3116 = vmul.f32 %v3105, 0.0546875
        %v3117 = vmul.f32 %v3107, 0.0546875
        %v3118 = vmul.f32 %v3109, 0.0546875
        %v3119 = vmul.f32 %v3111, 0.0546875
        %v3121 = vcombine.high %v458, %v458
        %v3123 = vunpack.c.l.s4 1966171168
        %v3124 = vunpack.c.0.s8 %v3123
        %v3125 = vlaneseq
        %v3126 = vshrl.u32 %v3125, 7
        %v3127 = vsub.s32 %v3124, %v3126
        %v3128 = vrot.slane %v458, %v3127
        %v3130 = vunpack.c.l.s4 1966171168
        %v3131 = vunpack.c.0.s8 %v3130
        %v3132 = vlaneseq
        %v3133 = vshrl.u32 %v3132, 7
        %v3134 = vsub.s32 %v3131, %v3133
        %v3135 = vrot.slane %v3121, %v3134
        %v3136 = vcombine.high %v3128, %v3128
        %v3137 = vcombine.high %v3135, %v3135
        %v3139 = vunpack.c.l.s4 1966171168
        %v3140 = vunpack.c.0.s8 %v3139
        %v3141 = vlaneseq
        %v3142 = vshrl.u32 %v3141, 7
        %v3143 = vsub.s32 %v3140, %v3142
        %v3144 = vrot.slane %v3128, %v3143
        %v3146 = vunpack.c.l.s4 1966171168
        %v3147 = vunpack.c.0.s8 %v3146
        %v3148 = vlaneseq
        %v3149 = vshrl.u32 %v3148, 7
        %v3150 = vsub.s32 %v3147, %v3149
        %v3151 = vrot.slane %v3135, %v3150
        %v3153 = vunpack.c.l.s4 1966171168
        %v3154 = vunpack.c.0.s8 %v3153
        %v3155 = vlaneseq
        %v3156 = vshrl.u32 %v3155, 7
        %v3157 = vsub.s32 %v3154, %v3156
        %v3158 = vrot.slane %v3136, %v3157
        %v3160 = vunpack.c.l.s4 1966171168
        %v3161 = vunpack.c.0.s8 %v3160
        %v3162 = vlaneseq
        %v3163 = vshrl.u32 %v3162, 7
        %v3164 = vsub.s32 %v3161, %v3163
        %v3165 = vrot.slane %v3137, %v3164
        %v3166 = vcombine.high %v3144, %v3144
        %v3167 = vcombine.high %v3151, %v3151
        %v3168 = vcombine.high %v3158, %v3158
        %v3169 = vcombine.high %v3165, %v3165
        %v3170 = vlaneseq
        %v3171 = vshrl.u32 %v3170, 7
        %v3172 = vsub.s32 0, %v3171
        %v3173 = vrot.slane %v3144, %v3172
        %v3174 = vlaneseq
        %v3175 = vshrl.u32 %v3174, 7
        %v3176 = vsub.s32 0, %v3175
        %v3177 = vrot.slane %v3158, %v3176
        %v3178 = vlaneseq
        %v3179 = vshrl.u32 %v3178, 7
        %v3180 = vsub.s32 0, %v3179
        %v3181 = vrot.slane %v3166, %v3180
        %v3182 = vlaneseq
        %v3183 = vshrl.u32 %v3182, 7
        %v3184 = vsub.s32 0, %v3183
        %v3185 = vrot.slane %v3168, %v3184
        %v3186 = vlaneseq
        %v3187 = vshrl.u32 %v3186, 7
        %v3188 = vsub.s32 0, %v3187
        %v3189 = vrot.slane %v3151, %v3188
        %v3190 = vlaneseq
        %v3191 = vshrl.u32 %v3190, 7
        %v3192 = vsub.s32 0, %v3191
        %v3193 = vrot.slane %v3165, %v3192
        %v3194 = vlaneseq
        %v3195 = vshrl.u32 %v3194, 7
        %v3196 = vsub.s32 0, %v3195
        %v3197 = vrot.slane %v3167, %v3196
        %v3198 = vlaneseq
        %v3199 = vshrl.u32 %v3198, 7
        %v3200 = vsub.s32 0, %v3199
        %v3201 = vrot.slane %v3169, %v3200
        %v3210 = vmul.f32 %v2142, %v3173
        %v3211 = vmul.f32 %v2143, %v3177
        %v3212 = vmul.f32 %v2144, %v3181
        %v3213 = vmul.f32 %v2145, %v3185
        %v3214 = vmul.f32 %v2146, %v3189
        %v3215 = vmul.f32 %v2147, %v3193
        %v3216 = vmul.f32 %v2148, %v3197
        %v3217 = vmul.f32 %v2149, %v3201
        %v3219 = vcombine.high %v465, %v465
        %v3221 = vunpack.c.l.s4 1966171168
        %v3222 = vunpack.c.0.s8 %v3221
        %v3223 = vlaneseq
        %v3224 = vshrl.u32 %v3223, 7
        %v3225 = vsub.s32 %v3222, %v3224
        %v3226 = vrot.slane %v465, %v3225
        %v3228 = vunpack.c.l.s4 1966171168
        %v3229 = vunpack.c.0.s8 %v3228
        %v3230 = vlaneseq
        %v3231 = vshrl.u32 %v3230, 7
        %v3232 = vsub.s32 %v3229, %v3231
        %v3233 = vrot.slane %v3219, %v3232
        %v3234 = vcombine.high %v3226, %v3226
        %v3235 = vcombine.high %v3233, %v3233
        %v3237 = vunpack.c.l.s4 1966171168
        %v3238 = vunpack.c.0.s8 %v3237
        %v3239 = vlaneseq
        %v3240 = vshrl.u32 %v3239, 7
        %v3241 = vsub.s32 %v3238, %v3240
        %v3242 = vrot.slane %v3226, %v3241
        %v3244 = vunpack.c.l.s4 1966171168
        %v3245 = vunpack.c.0.s8 %v3244
        %v3246 = vlaneseq
        %v3247 = vshrl.u32 %v3246, 7
        %v3248 = vsub.s32 %v3245, %v3247
        %v3249 = vrot.slane %v3233, %v3248
        %v3251 = vunpack.c.l.s4 1966171168
        %v3252 = vunpack.c.0.s8 %v3251
        %v3253 = vlaneseq
        %v3254 = vshrl.u32 %v3253, 7
        %v3255 = vsub.s32 %v3252, %v3254
        %v3256 = vrot.slane %v3234, %v3255
        %v3258 = vunpack.c.l.s4 1966171168
        %v3259 = vunpack.c.0.s8 %v3258
        %v3260 = vlaneseq
        %v3261 = vshrl.u32 %v3260, 7
        %v3262 = vsub.s32 %v3259, %v3261
        %v3263 = vrot.slane %v3235, %v3262
        %v3264 = vcombine.high %v3242, %v3242
        %v3265 = vcombine.high %v3249, %v3249
        %v3266 = vcombine.high %v3256, %v3256
        %v3267 = vcombine.high %v3263, %v3263
        %v3268 = vlaneseq
        %v3269 = vshrl.u32 %v3268, 7
        %v3270 = vsub.s32 0, %v3269
        %v3271 = vrot.slane %v3242, %v3270
        %v3272 = vlaneseq
        %v3273 = vshrl.u32 %v3272, 7
        %v3274 = vsub.s32 0, %v3273
        %v3275 = vrot.slane %v3256, %v3274
        %v3276 = vlaneseq
        %v3277 = vshrl.u32 %v3276, 7
        %v3278 = vsub.s32 0, %v3277
        %v3279 = vrot.slane %v3264, %v3278
        %v3280 = vlaneseq
        %v3281 = vshrl.u32 %v3280, 7
        %v3282 = vsub.s32 0, %v3281
        %v3283 = vrot.slane %v3266, %v3282
        %v3284 = vlaneseq
        %v3285 = vshrl.u32 %v3284, 7
        %v3286 = vsub.s32 0, %v3285
        %v3287 = vrot.slane %v3249, %v3286
        %v3288 = vlaneseq
        %v3289 = vshrl.u32 %v3288, 7
        %v3290 = vsub.s32 0, %v3289
        %v3291 = vrot.slane %v3263, %v3290
        %v3292 = vlaneseq
        %v3293 = vshrl.u32 %v3292, 7
        %v3294 = vsub.s32 0, %v3293
        %v3295 = vrot.slane %v3265, %v3294
        %v3296 = vlaneseq
        %v3297 = vshrl.u32 %v3296, 7
        %v3298 = vsub.s32 0, %v3297
        %v3299 = vrot.slane %v3267, %v3298
        %v3308 = vsub.f32 %v3210, %v3271
        %v3309 = vsub.f32 %v3211, %v3275
        %v3310 = vsub.f32 %v3212, %v3279
        %v3311 = vsub.f32 %v3213, %v3283
        %v3312 = vsub.f32 %v3214, %v3287
        %v3313 = vsub.f32 %v3215, %v3291
        %v3314 = vsub.f32 %v3216, %v3295
        %v3315 = vsub.f32 %v3217, %v3299
        %v3316 = vmul.f32 %v3308, %v3308
        %v3317 = vmul.f32 %v3309, %v3309
        %v3318 = vmul.f32 %v3310, %v3310
        %v3319 = vmul.f32 %v3311, %v3311
        %v3320 = vmul.f32 %v3312, %v3312
        %v3321 = vmul.f32 %v3313, %v3313
        %v3322 = vmul.f32 %v3314, %v3314
        %v3323 = vmul.f32 %v3315, %v3315
        %3324 = vadd.xlane.f32.xlu0 %v3316
        %v3325 = vpop.xlane.xlu0 %3324
        %3326 = vadd.xlane.f32.xlu0 %v3317
        %v3327 = vpop.xlane.xlu0 %3326
        %3328 = vadd.xlane.f32.xlu0 %v3318
        %v3329 = vpop.xlane.xlu0 %3328
        %3330 = vadd.xlane.f32.xlu0 %v3319
        %v3331 = vpop.xlane.xlu0 %3330
        %3332 = vadd.xlane.f32.xlu0 %v3320
        %v3333 = vpop.xlane.xlu0 %3332
        %3334 = vadd.xlane.f32.xlu0 %v3321
        %v3335 = vpop.xlane.xlu0 %3334
        %3336 = vadd.xlane.f32.xlu0 %v3322
        %v3337 = vpop.xlane.xlu0 %3336
        %3338 = vadd.xlane.f32.xlu0 %v3323
        %v3339 = vpop.xlane.xlu0 %3338
        %v3340 = vrsqrt.pop %v3325
        %v3341 = vmul.f32 %v3325, %v3340
        %vm3342 = vcmp.eq.f32.partialorder %v3325, inf
        %v3343 = vsel %vm3342, %v3325, %v3341
        %vm3344 = vcmp.eq.f32.partialorder %v3325, 0.0
        %v3345 = vand.u32 %v3325, 2147483648
        %v3346 = vsel %vm3344, %v3345, %v3343
        %v3347 = vrsqrt.pop %v3327
        %v3348 = vmul.f32 %v3327, %v3347
        %vm3349 = vcmp.eq.f32.partialorder %v3327, inf
        %v3350 = vsel %vm3349, %v3327, %v3348
        %vm3351 = vcmp.eq.f32.partialorder %v3327, 0.0
        %v3352 = vand.u32 %v3327, 2147483648
        %v3353 = vsel %vm3351, %v3352, %v3350
        %v3354 = vrsqrt.pop %v3329
        %v3355 = vmul.f32 %v3329, %v3354
        %vm3356 = vcmp.eq.f32.partialorder %v3329, inf
        %v3357 = vsel %vm3356, %v3329, %v3355
        %vm3358 = vcmp.eq.f32.partialorder %v3329, 0.0
        %v3359 = vand.u32 %v3329, 2147483648
        %v3360 = vsel %vm3358, %v3359, %v3357
        %v3361 = vrsqrt.pop %v3331
        %v3362 = vmul.f32 %v3331, %v3361
        %vm3363 = vcmp.eq.f32.partialorder %v3331, inf
        %v3364 = vsel %vm3363, %v3331, %v3362
        %vm3365 = vcmp.eq.f32.partialorder %v3331, 0.0
        %v3366 = vand.u32 %v3331, 2147483648
        %v3367 = vsel %vm3365, %v3366, %v3364
        %v3368 = vrsqrt.pop %v3333
        %v3369 = vmul.f32 %v3333, %v3368
        %vm3370 = vcmp.eq.f32.partialorder %v3333, inf
        %v3371 = vsel %vm3370, %v3333, %v3369
        %vm3372 = vcmp.eq.f32.partialorder %v3333, 0.0
        %v3373 = vand.u32 %v3333, 2147483648
        %v3374 = vsel %vm3372, %v3373, %v3371
        %v3375 = vrsqrt.pop %v3335
        %v3376 = vmul.f32 %v3335, %v3375
        %vm3377 = vcmp.eq.f32.partialorder %v3335, inf
        %v3378 = vsel %vm3377, %v3335, %v3376
        %vm3379 = vcmp.eq.f32.partialorder %v3335, 0.0
        %v3380 = vand.u32 %v3335, 2147483648
        %v3381 = vsel %vm3379, %v3380, %v3378
        %v3382 = vrsqrt.pop %v3337
        %v3383 = vmul.f32 %v3337, %v3382
        %vm3384 = vcmp.eq.f32.partialorder %v3337, inf
        %v3385 = vsel %vm3384, %v3337, %v3383
        %vm3386 = vcmp.eq.f32.partialorder %v3337, 0.0
        %v3387 = vand.u32 %v3337, 2147483648
        %v3388 = vsel %vm3386, %v3387, %v3385
        %v3389 = vrsqrt.pop %v3339
        %v3390 = vmul.f32 %v3339, %v3389
        %vm3391 = vcmp.eq.f32.partialorder %v3339, inf
        %v3392 = vsel %vm3391, %v3339, %v3390
        %vm3393 = vcmp.eq.f32.partialorder %v3339, 0.0
        %v3394 = vand.u32 %v3339, 2147483648
        %v3395 = vsel %vm3393, %v3394, %v3392
        %v3396 = vmul.f32 %v3346, 0.5
        %v3397 = vmul.f32 %v3353, 0.5
        %v3398 = vmul.f32 %v3360, 0.5
        %v3399 = vmul.f32 %v3367, 0.5
        %v3400 = vmul.f32 %v3374, 0.5
        %v3401 = vmul.f32 %v3381, 0.5
        %v3402 = vmul.f32 %v3388, 0.5
        %v3403 = vmul.f32 %v3395, 0.5
        %v3404 = vadd.f32 %v3112, %v3396
        %v3405 = vadd.f32 %v3113, %v3397
        %v3406 = vadd.f32 %v3114, %v3398
        %v3407 = vadd.f32 %v3115, %v3399
        %v3408 = vadd.f32 %v3116, %v3400
        %v3409 = vadd.f32 %v3117, %v3401
        %v3410 = vadd.f32 %v3118, %v3402
        %v3411 = vadd.f32 %v3119, %v3403
        %v3412 = vsub.f32 12.0, %v3404
        %v3413 = vsub.f32 12.0, %v3405
        %v3414 = vsub.f32 12.0, %v3406
        %v3415 = vsub.f32 12.0, %v3407
        %v3416 = vsub.f32 12.0, %v3408
        %v3417 = vsub.f32 12.0, %v3409
        %v3418 = vsub.f32 12.0, %v3410
        %v3419 = vsub.f32 12.0, %v3411
        %v3420 = vld [vmem:[#allocation5] sm:$0xff]
        %v3429 = vlaneseq
        %v3430 = vshrl.u32 %v3429, 7
        %v3431 = vsub.s32 %v1762, %v3430
        %v3432 = vrot.slane %v3412, %v3431
        %v3433 = vlaneseq
        %v3434 = vshrl.u32 %v3433, 7
        %v3435 = vsub.s32 %v1762, %v3434
        %v3436 = vrot.slane %v3413, %v3435
        %v3437 = vlaneseq
        %v3438 = vshrl.u32 %v3437, 7
        %v3439 = vsub.s32 %v1762, %v3438
        %v3440 = vrot.slane %v3414, %v3439
        %v3441 = vlaneseq
        %v3442 = vshrl.u32 %v3441, 7
        %v3443 = vsub.s32 %v1762, %v3442
        %v3444 = vrot.slane %v3415, %v3443
        %v3445 = vlaneseq
        %v3446 = vshrl.u32 %v3445, 7
        %v3447 = vsub.s32 %v1762, %v3446
        %v3448 = vrot.slane %v3416, %v3447
        %v3449 = vlaneseq
        %v3450 = vshrl.u32 %v3449, 7
        %v3451 = vsub.s32 %v1762, %v3450
        %v3452 = vrot.slane %v3417, %v3451
        %v3453 = vlaneseq
        %v3454 = vshrl.u32 %v3453, 7
        %v3455 = vsub.s32 %v1762, %v3454
        %v3456 = vrot.slane %v3418, %v3455
        %v3457 = vlaneseq
        %v3458 = vshrl.u32 %v3457, 7
        %v3459 = vsub.s32 %v1762, %v3458
        %v3460 = vrot.slane %v3419, %v3459
        %v3461 = vsel %vm1795, %v3436, %v3432
        %v3462 = vsel %vm1797, %v3440, %v3461
        %v3463 = vsel %vm1799, %v3444, %v3462
        %v3464 = vsel %vm1801, %v3448, %v3463
        %v3465 = vsel %vm1803, %v3452, %v3464
        %v3466 = vsel %vm1805, %v3456, %v3465
        %v3467 = vsel %vm1807, %v3460, %v3466
        %v3469 = vsel %vm1810, %v3467, -inf
        %3470 = vmax.xlane.f32.xlu0 %v3469
        %v3471 = vpop.xlane.xlu0 %3470
        %v3472 = vmax.f32 %v3420, %v3471
        %v3473 = vsub.f32 %v3420, %v3472
        %v3474 = vmul.f32 %v3473, 1.442695
        %v3475 = vpow.pop %v3474
        %3477 = vset.pattern.permute.xlu0 0
        %3478 = vperm.xlu0 %3477, %v3472
        %v3479 = vpop.permute.xlu0 %3478
        %v3480 = vlaneseq
        %v3481 = vshrl.u32 %v3480, 7
        %v3482 = vsub.s32 0, %v3481
        %v3483 = vrot.slane %v3479, %v3482
        %v3484 = vlaneseq
        %v3485 = vshrl.u32 %v3484, 7
        %v3486 = vsub.s32 1, %v3485
        %v3487 = vrot.slane %v3479, %v3486
        %v3488 = vlaneseq
        %v3489 = vshrl.u32 %v3488, 7
        %v3490 = vsub.s32 2, %v3489
        %v3491 = vrot.slane %v3479, %v3490
        %v3492 = vlaneseq
        %v3493 = vshrl.u32 %v3492, 7
        %v3494 = vsub.s32 3, %v3493
        %v3495 = vrot.slane %v3479, %v3494
        %v3496 = vlaneseq
        %v3497 = vshrl.u32 %v3496, 7
        %v3498 = vsub.s32 4, %v3497
        %v3499 = vrot.slane %v3479, %v3498
        %v3500 = vlaneseq
        %v3501 = vshrl.u32 %v3500, 7
        %v3502 = vsub.s32 5, %v3501
        %v3503 = vrot.slane %v3479, %v3502
        %v3504 = vlaneseq
        %v3505 = vshrl.u32 %v3504, 7
        %v3506 = vsub.s32 6, %v3505
        %v3507 = vrot.slane %v3479, %v3506
        %v3508 = vlaneseq
        %v3509 = vshrl.u32 %v3508, 7
        %v3510 = vsub.s32 7, %v3509
        %v3511 = vrot.slane %v3479, %v3510
        %v3520 = vsub.f32 %v3412, %v3483
        %v3521 = vsub.f32 %v3413, %v3487
        %v3522 = vsub.f32 %v3414, %v3491
        %v3523 = vsub.f32 %v3415, %v3495
        %v3524 = vsub.f32 %v3416, %v3499
        %v3525 = vsub.f32 %v3417, %v3503
        %v3526 = vsub.f32 %v3418, %v3507
        %v3527 = vsub.f32 %v3419, %v3511
        %v3528 = vmul.f32 %v3520, 1.442695
        %v3529 = vpow.pop %v3528
        %v3530 = vmul.f32 %v3521, 1.442695
        %v3531 = vpow.pop %v3530
        %v3532 = vmul.f32 %v3522, 1.442695
        %v3533 = vpow.pop %v3532
        %v3534 = vmul.f32 %v3523, 1.442695
        %v3535 = vpow.pop %v3534
        %v3536 = vmul.f32 %v3524, 1.442695
        %v3537 = vpow.pop %v3536
        %v3538 = vmul.f32 %v3525, 1.442695
        %v3539 = vpow.pop %v3538
        %v3540 = vmul.f32 %v3526, 1.442695
        %v3541 = vpow.pop %v3540
        %v3542 = vmul.f32 %v3527, 1.442695
        %v3543 = vpow.pop %v3542
        %v3544 = vld [vmem:[#allocation6] sm:$0xff]
        %v3545 = vmul.f32 %v3475, %v3544
        %3554 = vset.pattern.permute.xlu0 0
        %3555 = vperm.xlu0 %3554, %v3529
        %v3556 = vpop.permute.xlu0 %3555
        %3557 = vset.pattern.permute.xlu0 0
        %3558 = vperm.xlu0 %3557, %v3531
        %v3559 = vpop.permute.xlu0 %3558
        %3560 = vset.pattern.permute.xlu0 0
        %3561 = vperm.xlu0 %3560, %v3533
        %v3562 = vpop.permute.xlu0 %3561
        %3563 = vset.pattern.permute.xlu0 0
        %3564 = vperm.xlu0 %3563, %v3535
        %v3565 = vpop.permute.xlu0 %3564
        %3566 = vset.pattern.permute.xlu0 0
        %3567 = vperm.xlu0 %3566, %v3537
        %v3568 = vpop.permute.xlu0 %3567
        %3569 = vset.pattern.permute.xlu0 0
        %3570 = vperm.xlu0 %3569, %v3539
        %v3571 = vpop.permute.xlu0 %3570
        %3572 = vset.pattern.permute.xlu0 0
        %3573 = vperm.xlu0 %3572, %v3541
        %v3574 = vpop.permute.xlu0 %3573
        %3575 = vset.pattern.permute.xlu0 0
        %3576 = vperm.xlu0 %3575, %v3543
        %v3577 = vpop.permute.xlu0 %3576
        %v3578 = vlaneseq
        %v3579 = vshrl.u32 %v3578, 7
        %v3580 = vsub.s32 %v1762, %v3579
        %v3581 = vrot.slane %v3556, %v3580
        %v3582 = vlaneseq
        %v3583 = vshrl.u32 %v3582, 7
        %v3584 = vsub.s32 %v1762, %v3583
        %v3585 = vrot.slane %v3559, %v3584
        %v3586 = vlaneseq
        %v3587 = vshrl.u32 %v3586, 7
        %v3588 = vsub.s32 %v1762, %v3587
        %v3589 = vrot.slane %v3562, %v3588
        %v3590 = vlaneseq
        %v3591 = vshrl.u32 %v3590, 7
        %v3592 = vsub.s32 %v1762, %v3591
        %v3593 = vrot.slane %v3565, %v3592
        %v3594 = vlaneseq
        %v3595 = vshrl.u32 %v3594, 7
        %v3596 = vsub.s32 %v1762, %v3595
        %v3597 = vrot.slane %v3568, %v3596
        %v3598 = vlaneseq
        %v3599 = vshrl.u32 %v3598, 7
        %v3600 = vsub.s32 %v1762, %v3599
        %v3601 = vrot.slane %v3571, %v3600
        %v3602 = vlaneseq
        %v3603 = vshrl.u32 %v3602, 7
        %v3604 = vsub.s32 %v1762, %v3603
        %v3605 = vrot.slane %v3574, %v3604
        %v3606 = vlaneseq
        %v3607 = vshrl.u32 %v3606, 7
        %v3608 = vsub.s32 %v1762, %v3607
        %v3609 = vrot.slane %v3577, %v3608
        %v3610 = vsel %vm1795, %v3585, %v3581
        %v3611 = vsel %vm1797, %v3589, %v3610
        %v3612 = vsel %vm1799, %v3593, %v3611
        %v3613 = vsel %vm1801, %v3597, %v3612
        %v3614 = vsel %vm1803, %v3601, %v3613
        %v3615 = vsel %vm1805, %v3605, %v3614
        %v3616 = vsel %vm1807, %v3609, %v3615
        %v3618 = vsel %vm1810, %v3616, 0.0
        %3619 = vadd.xlane.f32.xlu0 %v3618
        %v3620 = vpop.xlane.xlu0 %3619
        %v3621 = vadd.f32 %v3545, %v3620
        %3622 = vst.msk [vmem:[#allocation6] sm:$0xff] %vm1964, %v3621
        %v3623 = vld [vmem:[#allocation7] sm:$0xff]
        %v3624 = vmul.f32 %v3475, %v3623
        %v3625 = vsub.f32 0.0, %v3412
        %v3626 = vsub.f32 0.0, %v3413
        %v3627 = vsub.f32 0.0, %v3414
        %v3628 = vsub.f32 0.0, %v3415
        %v3629 = vsub.f32 0.0, %v3416
        %v3630 = vsub.f32 0.0, %v3417
        %v3631 = vsub.f32 0.0, %v3418
        %v3632 = vsub.f32 0.0, %v3419
        %v3633 = vmin.f32 %v3625, 0.0
        %v3634 = vmin.f32 %v3626, 0.0
        %v3635 = vmin.f32 %v3627, 0.0
        %v3636 = vmin.f32 %v3628, 0.0
        %v3637 = vmin.f32 %v3629, 0.0
        %v3638 = vmin.f32 %v3630, 0.0
        %v3639 = vmin.f32 %v3631, 0.0
        %v3640 = vmin.f32 %v3632, 0.0
        %v3641 = vand.u32 2147483647, %v3625
        %v3642 = vand.u32 2147483647, %v3626
        %v3643 = vand.u32 2147483647, %v3627
        %v3644 = vand.u32 2147483647, %v3628
        %v3645 = vand.u32 2147483647, %v3629
        %v3646 = vand.u32 2147483647, %v3630
        %v3647 = vand.u32 2147483647, %v3631
        %v3648 = vand.u32 2147483647, %v3632
        %v3649 = vsub.f32 0.0, %v3641
        %v3650 = vsub.f32 0.0, %v3642
        %v3651 = vsub.f32 0.0, %v3643
        %v3652 = vsub.f32 0.0, %v3644
        %v3653 = vsub.f32 0.0, %v3645
        %v3654 = vsub.f32 0.0, %v3646
        %v3655 = vsub.f32 0.0, %v3647
        %v3656 = vsub.f32 0.0, %v3648
        %v3657 = vmul.f32 %v3649, 1.442695
        %v3658 = vpow.pop %v3657
        %v3659 = vmul.f32 %v3650, 1.442695
        %v3660 = vpow.pop %v3659
        %v3661 = vmul.f32 %v3651, 1.442695
        %v3662 = vpow.pop %v3661
        %v3663 = vmul.f32 %v3652, 1.442695
        %v3664 = vpow.pop %v3663
        %v3665 = vmul.f32 %v3653, 1.442695
        %v3666 = vpow.pop %v3665
        %v3667 = vmul.f32 %v3654, 1.442695
        %v3668 = vpow.pop %v3667
        %v3669 = vmul.f32 %v3655, 1.442695
        %v3670 = vpow.pop %v3669
        %v3671 = vmul.f32 %v3656, 1.442695
        %v3672 = vpow.pop %v3671
        %v3673 = vadd.f32 %v3658, 1.0
        %v3674 = vadd.f32 %v3660, 1.0
        %v3675 = vadd.f32 %v3662, 1.0
        %v3676 = vadd.f32 %v3664, 1.0
        %v3677 = vadd.f32 %v3666, 1.0
        %v3678 = vadd.f32 %v3668, 1.0
        %v3679 = vadd.f32 %v3670, 1.0
        %v3680 = vadd.f32 %v3672, 1.0
        %v3681 = vlog2.pop %v3673
        %v3682 = vmul.f32 %v3681, 0.6931472
        %v3683 = vlog2.pop %v3674
        %v3684 = vmul.f32 %v3683, 0.6931472
        %v3685 = vlog2.pop %v3675
        %v3686 = vmul.f32 %v3685, 0.6931472
        %v3687 = vlog2.pop %v3676
        %v3688 = vmul.f32 %v3687, 0.6931472
        %v3689 = vlog2.pop %v3677
        %v3690 = vmul.f32 %v3689, 0.6931472
        %v3691 = vlog2.pop %v3678
        %v3692 = vmul.f32 %v3691, 0.6931472
        %v3693 = vlog2.pop %v3679
        %v3694 = vmul.f32 %v3693, 0.6931472
        %v3695 = vlog2.pop %v3680
        %v3696 = vmul.f32 %v3695, 0.6931472
        %v3697 = vsub.f32 %v3633, %v3682
        %v3698 = vsub.f32 %v3634, %v3684
        %v3699 = vsub.f32 %v3635, %v3686
        %v3700 = vsub.f32 %v3636, %v3688
        %v3701 = vsub.f32 %v3637, %v3690
        %v3702 = vsub.f32 %v3638, %v3692
        %v3703 = vsub.f32 %v3639, %v3694
        %v3704 = vsub.f32 %v3640, %v3696
        %v3705 = vmul.f32 %v3529, %v3697
        %v3706 = vmul.f32 %v3531, %v3698
        %v3707 = vmul.f32 %v3533, %v3699
        %v3708 = vmul.f32 %v3535, %v3700
        %v3709 = vmul.f32 %v3537, %v3701
        %v3710 = vmul.f32 %v3539, %v3702
        %v3711 = vmul.f32 %v3541, %v3703
        %v3712 = vmul.f32 %v3543, %v3704
        %3721 = vset.pattern.permute.xlu0 0
        %3722 = vperm.xlu0 %3721, %v3705
        %v3723 = vpop.permute.xlu0 %3722
        %3724 = vset.pattern.permute.xlu0 0
        %3725 = vperm.xlu0 %3724, %v3706
        %v3726 = vpop.permute.xlu0 %3725
        %3727 = vset.pattern.permute.xlu0 0
        %3728 = vperm.xlu0 %3727, %v3707
        %v3729 = vpop.permute.xlu0 %3728
        %3730 = vset.pattern.permute.xlu0 0
        %3731 = vperm.xlu0 %3730, %v3708
        %v3732 = vpop.permute.xlu0 %3731
        %3733 = vset.pattern.permute.xlu0 0
        %3734 = vperm.xlu0 %3733, %v3709
        %v3735 = vpop.permute.xlu0 %3734
        %3736 = vset.pattern.permute.xlu0 0
        %3737 = vperm.xlu0 %3736, %v3710
        %v3738 = vpop.permute.xlu0 %3737
        %3739 = vset.pattern.permute.xlu0 0
        %3740 = vperm.xlu0 %3739, %v3711
        %v3741 = vpop.permute.xlu0 %3740
        %3742 = vset.pattern.permute.xlu0 0
        %3743 = vperm.xlu0 %3742, %v3712
        %v3744 = vpop.permute.xlu0 %3743
        %v3745 = vlaneseq
        %v3746 = vshrl.u32 %v3745, 7
        %v3747 = vsub.s32 %v1762, %v3746
        %v3748 = vrot.slane %v3723, %v3747
        %v3749 = vlaneseq
        %v3750 = vshrl.u32 %v3749, 7
        %v3751 = vsub.s32 %v1762, %v3750
        %v3752 = vrot.slane %v3726, %v3751
        %v3753 = vlaneseq
        %v3754 = vshrl.u32 %v3753, 7
        %v3755 = vsub.s32 %v1762, %v3754
        %v3756 = vrot.slane %v3729, %v3755
        %v3757 = vlaneseq
        %v3758 = vshrl.u32 %v3757, 7
        %v3759 = vsub.s32 %v1762, %v3758
        %v3760 = vrot.slane %v3732, %v3759
        %v3761 = vlaneseq
        %v3762 = vshrl.u32 %v3761, 7
        %v3763 = vsub.s32 %v1762, %v3762
        %v3764 = vrot.slane %v3735, %v3763
        %v3765 = vlaneseq
        %v3766 = vshrl.u32 %v3765, 7
        %v3767 = vsub.s32 %v1762, %v3766
        %v3768 = vrot.slane %v3738, %v3767
        %v3769 = vlaneseq
        %v3770 = vshrl.u32 %v3769, 7
        %v3771 = vsub.s32 %v1762, %v3770
        %v3772 = vrot.slane %v3741, %v3771
        %v3773 = vlaneseq
        %v3774 = vshrl.u32 %v3773, 7
        %v3775 = vsub.s32 %v1762, %v3774
        %v3776 = vrot.slane %v3744, %v3775
        %v3777 = vsel %vm1795, %v3752, %v3748
        %v3778 = vsel %vm1797, %v3756, %v3777
        %v3779 = vsel %vm1799, %v3760, %v3778
        %v3780 = vsel %vm1801, %v3764, %v3779
        %v3781 = vsel %vm1803, %v3768, %v3780
        %v3782 = vsel %vm1805, %v3772, %v3781
        %v3783 = vsel %vm1807, %v3776, %v3782
        %v3785 = vsel %vm1810, %v3783, 0.0
        %3786 = vadd.xlane.f32.xlu0 %v3785
        %v3787 = vpop.xlane.xlu0 %3786
        %v3788 = vadd.f32 %v3624, %v3787
        %3789 = vst.msk [vmem:[#allocation7] sm:$0xff] %vm1964, %v3788
        %3790 = vst.msk [vmem:[#allocation5] sm:$0xff] %vm1964, %v3472
        // Predicated region
        $region65: #{tpu_custom_call.1} parent=43 // pred_check
          %p3791 = pneg %p436
        $region66: #{tpu_custom_call.1} parent=43 // pred_check_branch
          %3793 = sbr.rel (%p3791) target = $region68
        $region67: #{tpu_custom_call.1} parent=43 // pred_region
          %v3794 = vld [vmem:[%s433] sm:$0xff]
          %v3795 = vsub.f32 %v462, %v461
          %v3796 = vand.u32 2147483647, %v3795
          %vm3797 = vcmp.le.f32.partialorder %v3796, 0.7853982
          %vm3798 = vcmp.lt.s32.totalorder %v3795, 0
          %v3799 = vand.u32 %v3795, 2139095040
          %v3800 = vshrl.u32 %v3799, 23
          %v3801 = vsub.s32 %v3800, 127
          %v3802 = vand.u32 2147483647, %v3795
          %v3803 = vand.u32 %v3802, 8388607
          %v3804 = vor.u32 %v3803, 8388608
          %v3805 = vsub.s32 0, %v3804
          %v3806 = vadd.s32 %v3801, 1
          %vm3807 = vcmp.gt.s32.totalorder %v3806, 0
          %v3808 = vsel %vm3807, %v3806, 0
          %v3809 = vshrl.u32 %v3808, 5
          %v3810 = vand.u32 %v3808, 31
          %v3811 = vsub.s32 32, %v3810
          %v3812 = vshrl.u32 683565275, %v3811
          %v3813 = vshll.u32 683565275, %v3810
          %v3814 = vshrl.u32 2475754826, %v3811
          %v3815 = vor.u32 %v3813, %v3814
          %v3816 = vshll.u32 2475754826, %v3810
          %v3817 = vshrl.u32 2131351028, %v3811
          %v3818 = vor.u32 %v3816, %v3817
          %v3819 = vshll.u32 2131351028, %v3810
          %v3820 = vshrl.u32 2102212464, %v3811
          %v3821 = vor.u32 %v3819, %v3820
          %v3822 = vshll.u32 2102212464, %v3810
          %v3823 = vshrl.u32 920167782, %v3811
          %v3824 = vor.u32 %v3822, %v3823
          %v3825 = vshll.u32 920167782, %v3810
          %v3826 = vshrl.u32 1326507024, %v3811
          %v3827 = vor.u32 %v3825, %v3826
          %vm3828 = vcmp.lt.s32.totalorder %v3809, 1
          %vm3829 = vcmp.lt.s32.totalorder %v3809, 2
          %vm3830 = vcmp.lt.s32.totalorder %v3809, 3
          %vm3831 = vcmp.lt.s32.totalorder %v3809, 4
          %v3832 = vsel %vm3828, %v3812, %v3815
          %v3833 = vsel %vm3831, %v3821, 2102212464
          %v3834 = vsel %vm3830, %v3818, %v3833
          %v3835 = vsel %vm3829, %v3832, %v3834
          %v3836 = vsel %vm3828, %v3815, %v3818
          %v3837 = vsel %vm3831, %v3824, 920167782
          %v3838 = vsel %vm3830, %v3821, %v3837
          %v3839 = vsel %vm3829, %v3836, %v3838
          %v3840 = vsel %vm3828, %v3818, %v3821
          %v3841 = vsel %vm3831, %v3827, 1326507024
          %v3842 = vsel %vm3830, %v3824, %v3841
          %v3843 = vsel %vm3829, %v3840, %v3842
          %v3844 = vshll.u32 %v3804, 8
          %v3845 = vmul.u32.u64.compose %v3844, %v3843
          %v3846 = vextract.low.u32 %v3845
          %v3847 = vextract.high.u32 %v3845
          %v3848 = vmul.u32.u64.compose %v3844, %v3839
          %v3849 = vextract.low.u32 %v3848
          %v3850 = vextract.high.u32 %v3848
          %v3851 = vmul.u32 %v3844, %v3835
          %v3852 = vadd.s32 %v3847, %v3849
          %vm3853 = vc.u32 %v3847, %v3849
          %v3854 = vadd.s32 %v3850, 1
          %v3855 = vsel %vm3853, %v3854, %v3850
          %v3856 = vadd.s32 %v3851, %v3855
          %v3857 = vadd.s32 %v3856, 536870912
          %v3858 = vshrl.u32 %v3857, 30
          %v3859 = vshll.u32 %v3858, 30
          %v3860 = vsub.s32 %v3856, %v3859
          %vm3861 = vcmp.lt.s32.totalorder %v3860, 0
          %v3862 = vsub.s32 0, %v3860
          %v3863 = vsel %vm3861, %v3862, %v3860
          %v3864 = vclz %v3863
          %v3865 = vsub.s32 %v3864, 2
          %vm3866 = vcmp.gt.s32.totalorder 0, %v3865
          %v3867 = vsel %vm3866, 0, %v3865
          %v3868 = vsub.s32 32, %v3867
          %v3869 = vshll.u32 %v3860, %v3867
          %v3870 = vshrl.u32 %v3852, %v3868
          %v3871 = vor.u32 %v3869, %v3870
          %v3872 = vsub.s32 4294967266, %v3867
          %v3873 = vadd.s32 %v3872, 127
          %v3874 = vshll.u32 %v3873, 23
          %v3875 = vor.u32 4788187, %v3874
          %v3876 = vand.u32 2147483647, %v3875
          %v3878 = vcvt.s32.f32 %v3871
          %v3879 = vmul.f32 %v3878, %v3876
          %v3880 = vxor.u32 %v3879, 2147483648
          %v3881 = vsel %vm3798, %v3880, %v3879
          %v3882 = vsub.s32 4, %v3858
          %v3883 = vsel %vm3798, %v3882, %v3858
          %v3884 = vsel %vm3797, %v3795, %v3881
          %v3885 = vsel %vm3797, 0, %v3883
          %v3886 = vcosq.f32.pop %v3884
          %v3887 = vsinq.f32.pop %v3884
          %vm3888 = vweird.f32 %v3795
          %v3889 = vadd.s32 %v3885, 3
          %v3890 = vand.u32 %v3889, 3
          %vm3891 = vcmp.lt.s32.totalorder %v3890, 2
          %vm3892 = vcmp.eq.s32.totalorder %v3890, 0
          %v3893 = vxor.u32 %v3887, 2147483648
          %v3894 = vsel %vm3892, %v3886, %v3893
          %vm3895 = vcmp.eq.s32.totalorder %v3890, 2
          %v3896 = vxor.u32 %v3886, 2147483648
          %v3897 = vsel %vm3895, %v3896, %v3887
          %v3898 = vsel %vm3891, %v3894, %v3897
          %v3899 = vsel %vm3888, nan, %v3898
          %v3900 = vand.u32 2147483647, %v3899
          %3901 = vadd.xlane.f32.xlu0 %v3900
          %v3902 = vpop.xlane.xlu0 %3901
          %v3903 = vmul.f32 %v3902, 0.0546875
          %v3904 = vsub.f32 %v464, %v465
          %v3905 = vmul.f32 %v3904, %v3904
          %3906 = vadd.xlane.f32.xlu0 %v3905
          %v3907 = vpop.xlane.xlu0 %3906
          %v3908 = vrsqrt.pop %v3907
          %v3909 = vmul.f32 %v3907, %v3908
          %vm3910 = vcmp.eq.f32.partialorder %v3907, inf
          %v3911 = vsel %vm3910, %v3907, %v3909
          %vm3912 = vcmp.eq.f32.partialorder %v3907, 0.0
          %v3913 = vand.u32 %v3907, 2147483648
          %v3914 = vsel %vm3912, %v3913, %v3911
          %v3915 = vmul.f32 %v3914, 0.5
          %v3916 = vadd.f32 %v3903, %v3915
          %v3917 = vsub.f32 12.0, %v3916
          %v3918 = vmin.f32 %v3917, 0.0
          %v3919 = vand.u32 2147483647, %v3917
          %v3920 = vsub.f32 0.0, %v3919
          %v3921 = vmul.f32 %v3920, 1.442695
          %v3922 = vpow.pop %v3921
          %v3923 = vadd.f32 %v3922, 1.0
          %v3924 = vlog2.pop %v3923
          %v3925 = vmul.f32 %v3924, 0.6931472
          %v3926 = vsub.f32 %v3918, %v3925
          %v3927 = vld [vmem:[#allocation4] sm:$0xff]
          %v3928 = vld [vmem:[#allocation3] sm:$0xff]
          %v3929 = vrcp.pop %v3928
          %v3930 = vmul.f32 %v3927, %v3929
          %v3931 = vld [vmem:[#allocation7] sm:$0xff]
          %v3932 = vld [vmem:[#allocation6] sm:$0xff]
          %v3933 = vrcp.pop %v3932
          %v3934 = vmul.f32 %v3931, %v3933
          %v3935 = vmul.f32 %v3794, %v3926
          %v3936 = vsel %vm1964, %v3935, 0.0
          %3937 = vadd.xlane.f32.xlu0 %v3936
          %v3938 = vpop.xlane.xlu0 %3937
          %v3939 = vrot.slane %v3938, 4
          %v3940 = vadd.f32 %v3938, %v3939
          %v3941 = vrot.slane %v3940, 2
          %v3942 = vadd.f32 %v3940, %v3941
          %v3943 = vrot.slane %v3942, 1
          %v3944 = vadd.f32 %v3942, %v3943
          %s3945 = vtos %v3944
          %v3946 = vadd.f32 %v3930, %v3934
          %v3947 = vmul.f32 %v3794, %v3946
          %v3948 = vsel %vm1964, %v3947, 0.0
          %3949 = vadd.xlane.f32.xlu0 %v3948
          %v3950 = vpop.xlane.xlu0 %3949
          %v3951 = vrot.slane %v3950, 4
          %v3952 = vadd.f32 %v3950, %v3951
          %v3953 = vrot.slane %v3952, 2
          %v3954 = vadd.f32 %v3952, %v3953
          %v3955 = vrot.slane %v3954, 1
          %v3956 = vadd.f32 %v3954, %v3955
          %s3957 = vtos %v3956
          %s3958 = smul.f32 %s3957, 0.5
          %v3959 = vsel %vm1964, %v3794, 0.0
          %3960 = vadd.xlane.f32.xlu0 %v3959
          %v3961 = vpop.xlane.xlu0 %3960
          %v3962 = vrot.slane %v3961, 4
          %v3963 = vadd.f32 %v3961, %v3962
          %v3964 = vrot.slane %v3963, 2
          %v3965 = vadd.f32 %v3963, %v3964
          %v3966 = vrot.slane %v3965, 1
          %v3967 = vadd.f32 %v3965, %v3966
          %s3968 = vtos %v3967
          %vm3969 = vcmp.eq.s32.totalorder %v1762, 0
          %v3970 = vstv %s3945
          %v3971 = vsel %vm3969, %v3970, 0.0
          %vm3972 = vcmp.eq.s32.totalorder %v1762, 1
          %v3973 = vstv %s3958
          %v3974 = vsel %vm3972, %v3973, 0.0
          %v3975 = vadd.f32 %v3971, %v3974
          %vm3976 = vcmp.eq.s32.totalorder %v1762, 2
          %v3977 = vstv %s3968
          %v3978 = vsel %vm3976, %v3977, 0.0
          %v3979 = vadd.f32 %v3975, %v3978
          %3980 = vst [vmem:[%s425] sm:$0xff] %v3979
        $region68: #{tpu_custom_call.1} parent=43 // pred_fallthru
          _
        %s3981 = sand.u32 %s209, 1
        %s3982 = scalar_lea.sflag [#allocation10], %s3981
        %s3983 = sand.u32 %s209, 1
        %s3984 = smul.addr %s3983, 8
        %s3985 = scalar_lea.vmem [#allocation16], %s3984
        // Predicated region
        $region69: #{tpu_custom_call.1} parent=43 // pred_check
          %p3986 = pneg %p219
        $region70: #{tpu_custom_call.1} parent=43 // pred_check_branch
          %3988 = sbr.rel (%p3986) target = $region72
        $region71: #{tpu_custom_call.1} parent=43 // pred_region
          %s3990 = ssub.s32 128, 128
          %3991 = vsyncadd %s3982, %s3990
          %s3992 = smul.addr %s33, 128
          %s3993 = scalar_lea.hbm %s6, %s3992
          %s3995 = sshll.u32 %s3985, 4
          %s3996 = int_to_ptr.vmem [resolvable:$true] %s3995
          %3998 = dma.vmem_to_hbm [thread:$0]  %s3996, 128, %s3993, %s3982
        $region72: #{tpu_custom_call.1} parent=43 // pred_fallthru
          _
      $region44: #{tpu_custom_call.1} parent=5 // pred_fallthru
        _
      %p3999 = scmp.le.s32.totalorder 2, %s24
      // Predicated region
      $region73: #{tpu_custom_call.1} parent=5 // pred_check
        %p4000 = pneg %p3999
      $region74: #{tpu_custom_call.1} parent=5 // pred_check_branch
        %4002 = sbr.rel (%p4000) target = $region76
      $region75: #{tpu_custom_call.1} parent=5 // pred_region
        %s4003 = ssub.s32 %s24, 2
        // Predicated region
        $region77: #{tpu_custom_call.1} parent=75 // pred_check
          %p4004 = pneg %p225
        $region78: #{tpu_custom_call.1} parent=75 // pred_check_branch
          %4006 = sbr.rel (%p4004) target = $region80
        $region79: #{tpu_custom_call.1} parent=75 // pred_region
          %s4007 = sand.u32 %s210, 1
          %s4008 = scalar_lea.sflag [#allocation10], %s4007
          %s4009 = sand.u32 %s210, 1
          %s4010 = smul.addr %s4009, 8
          %s4011 = scalar_lea.vmem [#allocation16], %s4010
          %4012 = dma.done %s4008, 128
        $region80: #{tpu_custom_call.1} parent=75 // pred_fallthru
          _
      $region76: #{tpu_custom_call.1} parent=5 // pred_fallthru
        _
    $region6: #{tpu_custom_call.1} parent=1 // loop_footer
      %s28 = sadd.s32 1, %s24
    $region7: #{tpu_custom_call.1} parent=1 // loop_footer_branch
      %23 = sbr.rel target = $region3
    $region8: #{tpu_custom_call.1} parent=1 // loop_exit
      _
    %4013 = vsyncpa [#allocation9], 1
    %s4014 = scalar_lea.sflag [#allocation9], 1
    %4015 = vsyncpa %s4014, 1
    %4016 = vsyncpa [#allocation12], 1
    %s4017 = scalar_lea.sflag [#allocation12], 1
    %4018 = vsyncpa %s4017, 1
    %4019 = vsyncpa [#allocation15], 1
    %s4020 = scalar_lea.sflag [#allocation15], 1
    %4021 = vsyncpa %s4020, 1
    %4022 = vsyncpa [#allocation10], 1
    %s4023 = scalar_lea.sflag [#allocation10], 1
    %4024 = vsyncpa %s4023, 1

</llo_original>
